<compile_context>
chip_gen: v5e
topology: v5e:2x2
jax: 0.10.0
libtpu: 0.0.40
codegen_flags: <defaults>
</compile_context>

<pallas_src>
import numpy as np
import jax
import jax.numpy as jnp
from jax import lax
from jax.experimental import pallas as pl
from jax.experimental.pallas import tpu as pltpu

# Module hyper-parameters (chosen so the flattened feature size is 48 = 3*4*4,
# matching the hard-coded nn.Linear(48, 128) in the PyTorch module).
NUM_RGB = 3
NUM_FILTER = 3
KERNEL_SIZE = 3
STRIDE = 1
PADDING = 1
IMG = 16      # 16 -> conv(p=1) 16 -> pool 8 -> conv(p=1) 8 -> pool 4 => 3*4*4 = 48

GP = IMG + 2 * PADDING        # 18 : padded grid side
BLK = GP * GP                 # 324: lanes per image in the flattened layout
OFF0 = 40                     # leading zero lanes (>= largest conv tap shift, 2*GP+2)
SHIFT2 = 2 * GP + 2           # 38 : stage-2 lane t  <->  global lane t + SHIFT2
P1 = IMG // 2                 # 8  : pooled-1 grid side
P2 = P1 // 2                  # 4  : pooled-2 grid side
SPAT2 = P2 * P2               # 16 : pooled-2 pixels per channel


def _round_up(v, m):
    return (v + m - 1) // m * m


def _lane_plan(N):
    """Static lane-length bookkeeping (all Python ints) for batch size N."""
    g_vm2 = OFF0 + (N - 1) * BLK + 4 * GP * (P2 - 1) + 4 * (P2 - 1)  # last pooled-2 lane
    g_hm2 = g_vm2 + 2 * GP
    g_act2 = g_hm2 + 2
    g_msk = g_act2 + SHIFT2
    g_hmx = g_msk + GP
    g_act1 = g_hmx + 1
    g_x = g_act1 + SHIFT2
    return dict(
        L_ACT1=g_act1 + 1, L_HMX=g_hmx + 1, L_VMX=g_msk + 1,
        L_ACT2=g_act2 - SHIFT2 + 1, L_HM2=g_hm2 - SHIFT2 + 1,
        L_VM2=g_vm2 - SHIFT2 + 1, T=_round_up(g_x + 1, 128),
    )


# ----------------------------- Pallas kernel -------------------------------

def _make_kernel(N, plan):
    L_ACT1, L_HMX, L_VMX = plan["L_ACT1"], plan["L_HMX"], plan["L_VMX"]
    L_ACT2, L_HM2, L_VM2 = plan["L_ACT2"], plan["L_HM2"], plan["L_VM2"]
    K = KERNEL_SIZE

    def kernel(x_ref, w1_ref, b1_ref, w2_ref, b2_ref, mask_ref, g_ref,
               w1t_ref, b1fc_ref, w2t_ref, b2fc_ref, o_ref):
        x = x_ref[...]                               # (3, T)   flattened padded input
        w1 = w1_ref[...]                             # (3, 27)  tap p = ci*9 + kh*3 + kw
        w2 = w2_ref[...]                             # (3, 27)

        # ---------- conv1 + bias + ReLU : 27 VPU broadcast-MACs ----------
        acc = None
        for ci in range(NUM_RGB):
            xrow = x[ci:ci + 1, :]                   # (1, T)
            for kh in range(K):
                for kw in range(K):
                    p = ci * K * K + kh * K + kw
                    off = kh * GP + kw
                    term = w1[:, p:p + 1] * xrow[:, off:off + L_ACT1]
                    acc = term if acc is None else acc + term
        act1 = jnp.maximum(acc + b1_ref[...], 0.0)   # (3, L_ACT1)

        # ---------- 2x2 / stride-2 max-pool in flattened lane coordinates ----------
        hmx = jnp.maximum(act1[:, :L_HMX], act1[:, 1:1 + L_HMX])
        vmx = jnp.maximum(hmx[:, :L_VMX], hmx[:, GP:GP + L_VMX])
        pooled1 = vmx * mask_ref[:, :L_VMX]          # zero all lanes but valid 8x8 sites

        # ---------- conv2 + bias + ReLU (lane t == global lane t + SHIFT2) ----------
        acc = None
        for ci in range(NUM_FILTER):
            prow = pooled1[ci:ci + 1, :]             # (1, L_VMX)
            for kh in range(K):
                for kw in range(K):
                    p = ci * K * K + kh * K + kw
                    off = 2 * GP * kh + 2 * kw       # = SHIFT2 + 2*GP*(kh-1) + 2*(kw-1)
                    term = w2[:, p:p + 1] * prow[:, off:off + L_ACT2]
                    acc = term if acc is None else acc + term
        act2 = jnp.maximum(acc + b2_ref[...], 0.0)   # (3, L_ACT2)

        hm2 = jnp.maximum(act2[:, :L_HM2], act2[:, 2:2 + L_HM2])
        vm2 = jnp.maximum(hm2[:, :L_VM2], hm2[:, 2 * GP:2 * GP + L_VM2])  # (3, L_VM2)

        # ---------- gather the N*4*4 pooled-2 pixels into contiguous lanes ----------
        # Single MXU matmul against a compile-time 0/1 gather matrix (exact with
        # HIGHEST precision: 1.0 is exactly representable in every MXU pass).
        z = jnp.dot(vm2, g_ref[...],
                    preferred_element_type=jnp.float32,
                    precision=lax.Precision.HIGHEST)         # (3, 16*N): z[c, n*16 + s]

        # ---------- fc1 -> relu (per sample, channel-split) ----------
        w1t = w1t_ref[...]                            # (48, 128) = fc1_w.T
        rows = []
        for n in range(N):
            h = b1fc_ref[...]                         # (1, 128)
            for c in range(NUM_FILTER):
                seg = z[c:c + 1, SPAT2 * n:SPAT2 * (n + 1)]        # (1, 16)
                h = h + jnp.dot(seg, w1t[SPAT2 * c:SPAT2 * (c + 1), :],
                                preferred_element_type=jnp.float32)
            rows.append(jnp.maximum(h, 0.0))
        H = rows[0] if N == 1 else jnp.concatenate(rows, axis=0)   # (N, 128)

        # ---------- fc2 -> relu -> sigmoid, batched, single lane-dense store ----------
        y = jnp.dot(H, w2t_ref[...], preferred_element_type=jnp.float32) + b2fc_ref[...]
        y = jnp.maximum(y, 0.0)
        o_ref[...] = (1.0 / (1.0 + jnp.exp(-y))).astype(o_ref.dtype)

    return kernel


# ----------------------------- wrapper --------------------------------------

@jax.jit
def cnn_forward(x_nchw, params):
    N = x_nchw.shape[0]
    plan = _lane_plan(N)
    T = plan["T"]
    L_VM2 = plan["L_VM2"]

    # -- host-side glue: flatten the zero-padded input onto the lane axis (tiny) --
    xp = jnp.pad(x_nchw, ((0, 0), (0, 0), (PADDING, PADDING), (PADDING, PADDING)))
    xf = jnp.transpose(xp, (1, 0, 2, 3)).reshape(NUM_RGB, N * BLK)
    xf = jnp.pad(xf, ((0, 0), (OFF0, T - OFF0 - N * BLK)))           # (3, T)

    # -- compile-time constants: valid pooled-1 lane mask, pooled-2 gather matrix --
    mask = np.zeros((1, T), np.float32)
    gmat = np.zeros((L_VM2, SPAT2 * N), np.float32)
    for n in range(N):
        for a in range(P1):
            for b in range(P1):
                mask[0, OFF0 + n * BLK + 2 * GP * a + 2 * b] = 1.0
        for ph in range(P2):
            for pw in range(P2):
                t = OFF0 + n * BLK + 4 * GP * ph + 4 * pw - SHIFT2
                gmat[t, n * SPAT2 + ph * P2 + pw] = 1.0

    w1m = params["w1"].reshape(NUM_FILTER, -1)        # (3, 27)  col = ci*9 + kh*3 + kw
    w2m = params["w2"].reshape(NUM_FILTER, -1)        # (3, 27)
    b1c = params["b1"].reshape(-1, 1)                 # (3, 1)
    b2c = params["b2"].reshape(-1, 1)                 # (3, 1)
    w1t = params["fc1_w"].T                           # (48, 128)
    b1r = params["fc1_b"].reshape(1, -1)              # (1, 128)
    w2t = params["fc2_w"].T                           # (128, 1)
    b2r = params["fc2_b"].reshape(1, 1)               # (1, 1)

    vmem = pl.BlockSpec(memory_space=pltpu.MemorySpace.VMEM)
    return pl.pallas_call(
        _make_kernel(N, plan),
        out_shape=jax.ShapeDtypeStruct((N, 1), jnp.float32),
        in_specs=[vmem] * 11,
        out_specs=vmem,
    )(xf, w1m, b1c, w2m, b2c, jnp.asarray(mask), jnp.asarray(gmat),
      w1t, b1r, w2t, b2r)


# ----------------------------- pure-JAX reference ---------------------------

def reference_forward(x, params):
    dn = ("NCHW", "OIHW", "NCHW")

    def conv(x, w, b):
        y = lax.conv_general_dilated(
            x, w, (STRIDE, STRIDE), ((PADDING, PADDING), (PADDING, PADDING)),
            dimension_numbers=dn)
        return y + b.reshape(1, -1, 1, 1)

    def pool(x):
        return lax.reduce_window(x, -jnp.inf, lax.max,
                                 (1, 1, 2, 2), (1, 1, 2, 2), "VALID")

    x = pool(jax.nn.relu(conv(x, params["w1"], params["b1"])))
    x = pool(jax.nn.relu(conv(x, params["w2"], params["b2"])))
    x = x.reshape(-1, 48)
    x = jax.nn.relu(x @ params["fc1_w"].T + params["fc1_b"])
    x = jax.nn.relu(x @ params["fc2_w"].T + params["fc2_b"])
    return jax.nn.sigmoid(x)


# ----------------------------- main ------------------------------------------

if __name__ == "__main__":
    key = jax.random.PRNGKey(0)
    keys = jax.random.split(key, 9)

    params = {
        "w1": 0.1 * jax.random.normal(keys[1], (NUM_FILTER, NUM_RGB, KERNEL_SIZE, KERNEL_SIZE), jnp.float32),
        "b1": 0.1 * jax.random.normal(keys[2], (NUM_FILTER,), jnp.float32),
        "w2": 0.1 * jax.random.normal(keys[3], (NUM_FILTER, NUM_FILTER, KERNEL_SIZE, KERNEL_SIZE), jnp.float32),
        "b2": 0.1 * jax.random.normal(keys[4], (NUM_FILTER,), jnp.float32),
        "fc1_w": 0.1 * jax.random.normal(keys[5], (128, 48), jnp.float32),
        "fc1_b": 0.1 * jax.random.normal(keys[6], (128,), jnp.float32),
        "fc2_w": 0.1 * jax.random.normal(keys[7], (1, 128), jnp.float32),
        "fc2_b": 0.1 * jax.random.normal(keys[8], (1,), jnp.float32),
    }

    x = jax.random.normal(keys[0], (2, NUM_RGB, IMG, IMG), jnp.float32)

    out = jax.block_until_ready(cnn_forward(x, params))
    ref = reference_forward(x, params)

    assert out.shape == (2, 1), out.shape
    assert jnp.allclose(out, ref, rtol=1e-4, atol=1e-5), (out, ref)
    print("KERNEL_OK")
</pallas_src>

<mosaic_0001>
module attributes {stable_mosaic.version = 11 : i64} {
  func.func @kernel(%arg0: memref<3x768xf32, #tpu.memory_space<vmem>>, %arg1: memref<3x27xf32, #tpu.memory_space<vmem>>, %arg2: memref<3x1xf32, #tpu.memory_space<vmem>>, %arg3: memref<3x27xf32, #tpu.memory_space<vmem>>, %arg4: memref<3x1xf32, #tpu.memory_space<vmem>>, %arg5: memref<1x768xf32, #tpu.memory_space<vmem>>, %arg6: memref<555x32xf32, #tpu.memory_space<vmem>>, %arg7: memref<48x128xf32, #tpu.memory_space<vmem>>, %arg8: memref<1x128xf32, #tpu.memory_space<vmem>>, %arg9: memref<128x1xf32, #tpu.memory_space<vmem>>, %arg10: memref<1x1xf32, #tpu.memory_space<vmem>>, %arg11: memref<2x1xf32, #tpu.memory_space<vmem>>) attributes {dimension_semantics = [], scalar_prefetch = 0 : i64, scratch_operands = 0 : i64, tpu.core_type = #tpu.core_type<tc>} {
    %c0 = arith.constant 0 : index
    %c0_0 = arith.constant 0 : index
    %0 = vector.load %arg0[%c0, %c0_0] : memref<3x768xf32, #tpu.memory_space<vmem>>, vector<3x768xf32>
    %c0_1 = arith.constant 0 : index
    %c0_2 = arith.constant 0 : index
    %1 = vector.load %arg1[%c0_1, %c0_2] : memref<3x27xf32, #tpu.memory_space<vmem>>, vector<3x27xf32>
    %c0_3 = arith.constant 0 : index
    %c0_4 = arith.constant 0 : index
    %2 = vector.load %arg3[%c0_3, %c0_4] : memref<3x27xf32, #tpu.memory_space<vmem>>, vector<3x27xf32>
    %3 = vector.extract_strided_slice %0 {offsets = [0, 0], sizes = [1, 768], strides = [1, 1]} : vector<3x768xf32> to vector<1x768xf32>
    %4 = vector.extract_strided_slice %1 {offsets = [0, 0], sizes = [3, 1], strides = [1, 1]} : vector<3x27xf32> to vector<3x1xf32>
    %5 = vector.extract_strided_slice %3 {offsets = [0, 0], sizes = [1, 688], strides = [1, 1]} : vector<1x768xf32> to vector<1x688xf32>
    %6 = vector.broadcast %4 : vector<3x1xf32> to vector<3x688xf32>
    %7 = vector.broadcast %5 : vector<1x688xf32> to vector<3x688xf32>
    %8 = arith.mulf %6, %7 : vector<3x688xf32>
    %9 = vector.extract_strided_slice %1 {offsets = [0, 1], sizes = [3, 1], strides = [1, 1]} : vector<3x27xf32> to vector<3x1xf32>
    %10 = vector.extract_strided_slice %3 {offsets = [0, 1], sizes = [1, 688], strides = [1, 1]} : vector<1x768xf32> to vector<1x688xf32>
    %11 = vector.broadcast %9 : vector<3x1xf32> to vector<3x688xf32>
    %12 = vector.broadcast %10 : vector<1x688xf32> to vector<3x688xf32>
    %13 = arith.mulf %11, %12 : vector<3x688xf32>
    %14 = arith.addf %8, %13 : vector<3x688xf32>
    %15 = vector.extract_strided_slice %1 {offsets = [0, 2], sizes = [3, 1], strides = [1, 1]} : vector<3x27xf32> to vector<3x1xf32>
    %16 = vector.extract_strided_slice %3 {offsets = [0, 2], sizes = [1, 688], strides = [1, 1]} : vector<1x768xf32> to vector<1x688xf32>
    %17 = vector.broadcast %15 : vector<3x1xf32> to vector<3x688xf32>
    %18 = vector.broadcast %16 : vector<1x688xf32> to vector<3x688xf32>
    %19 = arith.mulf %17, %18 : vector<3x688xf32>
    %20 = arith.addf %14, %19 : vector<3x688xf32>
    %21 = vector.extract_strided_slice %1 {offsets = [0, 3], sizes = [3, 1], strides = [1, 1]} : vector<3x27xf32> to vector<3x1xf32>
    %22 = vector.extract_strided_slice %3 {offsets = [0, 18], sizes = [1, 688], strides = [1, 1]} : vector<1x768xf32> to vector<1x688xf32>
    %23 = vector.broadcast %21 : vector<3x1xf32> to vector<3x688xf32>
    %24 = vector.broadcast %22 : vector<1x688xf32> to vector<3x688xf32>
    %25 = arith.mulf %23, %24 : vector<3x688xf32>
    %26 = arith.addf %20, %25 : vector<3x688xf32>
    %27 = vector.extract_strided_slice %1 {offsets = [0, 4], sizes = [3, 1], strides = [1, 1]} : vector<3x27xf32> to vector<3x1xf32>
    %28 = vector.extract_strided_slice %3 {offsets = [0, 19], sizes = [1, 688], strides = [1, 1]} : vector<1x768xf32> to vector<1x688xf32>
    %29 = vector.broadcast %27 : vector<3x1xf32> to vector<3x688xf32>
    %30 = vector.broadcast %28 : vector<1x688xf32> to vector<3x688xf32>
    %31 = arith.mulf %29, %30 : vector<3x688xf32>
    %32 = arith.addf %26, %31 : vector<3x688xf32>
    %33 = vector.extract_strided_slice %1 {offsets = [0, 5], sizes = [3, 1], strides = [1, 1]} : vector<3x27xf32> to vector<3x1xf32>
    %34 = vector.extract_strided_slice %3 {offsets = [0, 20], sizes = [1, 688], strides = [1, 1]} : vector<1x768xf32> to vector<1x688xf32>
    %35 = vector.broadcast %33 : vector<3x1xf32> to vector<3x688xf32>
    %36 = vector.broadcast %34 : vector<1x688xf32> to vector<3x688xf32>
    %37 = arith.mulf %35, %36 : vector<3x688xf32>
    %38 = arith.addf %32, %37 : vector<3x688xf32>
    %39 = vector.extract_strided_slice %1 {offsets = [0, 6], sizes = [3, 1], strides = [1, 1]} : vector<3x27xf32> to vector<3x1xf32>
    %40 = vector.extract_strided_slice %3 {offsets = [0, 36], sizes = [1, 688], strides = [1, 1]} : vector<1x768xf32> to vector<1x688xf32>
    %41 = vector.broadcast %39 : vector<3x1xf32> to vector<3x688xf32>
    %42 = vector.broadcast %40 : vector<1x688xf32> to vector<3x688xf32>
    %43 = arith.mulf %41, %42 : vector<3x688xf32>
    %44 = arith.addf %38, %43 : vector<3x688xf32>
    %45 = vector.extract_strided_slice %1 {offsets = [0, 7], sizes = [3, 1], strides = [1, 1]} : vector<3x27xf32> to vector<3x1xf32>
    %46 = vector.extract_strided_slice %3 {offsets = [0, 37], sizes = [1, 688], strides = [1, 1]} : vector<1x768xf32> to vector<1x688xf32>
    %47 = vector.broadcast %45 : vector<3x1xf32> to vector<3x688xf32>
    %48 = vector.broadcast %46 : vector<1x688xf32> to vector<3x688xf32>
    %49 = arith.mulf %47, %48 : vector<3x688xf32>
    %50 = arith.addf %44, %49 : vector<3x688xf32>
    %51 = vector.extract_strided_slice %1 {offsets = [0, 8], sizes = [3, 1], strides = [1, 1]} : vector<3x27xf32> to vector<3x1xf32>
    %52 = vector.extract_strided_slice %3 {offsets = [0, 38], sizes = [1, 688], strides = [1, 1]} : vector<1x768xf32> to vector<1x688xf32>
    %53 = vector.broadcast %51 : vector<3x1xf32> to vector<3x688xf32>
    %54 = vector.broadcast %52 : vector<1x688xf32> to vector<3x688xf32>
    %55 = arith.mulf %53, %54 : vector<3x688xf32>
    %56 = arith.addf %50, %55 : vector<3x688xf32>
    %57 = vector.extract_strided_slice %0 {offsets = [1, 0], sizes = [1, 768], strides = [1, 1]} : vector<3x768xf32> to vector<1x768xf32>
    %58 = vector.extract_strided_slice %1 {offsets = [0, 9], sizes = [3, 1], strides = [1, 1]} : vector<3x27xf32> to vector<3x1xf32>
    %59 = vector.extract_strided_slice %57 {offsets = [0, 0], sizes = [1, 688], strides = [1, 1]} : vector<1x768xf32> to vector<1x688xf32>
    %60 = vector.broadcast %58 : vector<3x1xf32> to vector<3x688xf32>
    %61 = vector.broadcast %59 : vector<1x688xf32> to vector<3x688xf32>
    %62 = arith.mulf %60, %61 : vector<3x688xf32>
    %63 = arith.addf %56, %62 : vector<3x688xf32>
    %64 = vector.extract_strided_slice %1 {offsets = [0, 10], sizes = [3, 1], strides = [1, 1]} : vector<3x27xf32> to vector<3x1xf32>
    %65 = vector.extract_strided_slice %57 {offsets = [0, 1], sizes = [1, 688], strides = [1, 1]} : vector<1x768xf32> to vector<1x688xf32>
    %66 = vector.broadcast %64 : vector<3x1xf32> to vector<3x688xf32>
    %67 = vector.broadcast %65 : vector<1x688xf32> to vector<3x688xf32>
    %68 = arith.mulf %66, %67 : vector<3x688xf32>
    %69 = arith.addf %63, %68 : vector<3x688xf32>
    %70 = vector.extract_strided_slice %1 {offsets = [0, 11], sizes = [3, 1], strides = [1, 1]} : vector<3x27xf32> to vector<3x1xf32>
    %71 = vector.extract_strided_slice %57 {offsets = [0, 2], sizes = [1, 688], strides = [1, 1]} : vector<1x768xf32> to vector<1x688xf32>
    %72 = vector.broadcast %70 : vector<3x1xf32> to vector<3x688xf32>
    %73 = vector.broadcast %71 : vector<1x688xf32> to vector<3x688xf32>
    %74 = arith.mulf %72, %73 : vector<3x688xf32>
    %75 = arith.addf %69, %74 : vector<3x688xf32>
    %76 = vector.extract_strided_slice %1 {offsets = [0, 12], sizes = [3, 1], strides = [1, 1]} : vector<3x27xf32> to vector<3x1xf32>
    %77 = vector.extract_strided_slice %57 {offsets = [0, 18], sizes = [1, 688], strides = [1, 1]} : vector<1x768xf32> to vector<1x688xf32>
    %78 = vector.broadcast %76 : vector<3x1xf32> to vector<3x688xf32>
    %79 = vector.broadcast %77 : vector<1x688xf32> to vector<3x688xf32>
    %80 = arith.mulf %78, %79 : vector<3x688xf32>
    %81 = arith.addf %75, %80 : vector<3x688xf32>
    %82 = vector.extract_strided_slice %1 {offsets = [0, 13], sizes = [3, 1], strides = [1, 1]} : vector<3x27xf32> to vector<3x1xf32>
    %83 = vector.extract_strided_slice %57 {offsets = [0, 19], sizes = [1, 688], strides = [1, 1]} : vector<1x768xf32> to vector<1x688xf32>
    %84 = vector.broadcast %82 : vector<3x1xf32> to vector<3x688xf32>
    %85 = vector.broadcast %83 : vector<1x688xf32> to vector<3x688xf32>
    %86 = arith.mulf %84, %85 : vector<3x688xf32>
    %87 = arith.addf %81, %86 : vector<3x688xf32>
    %88 = vector.extract_strided_slice %1 {offsets = [0, 14], sizes = [3, 1], strides = [1, 1]} : vector<3x27xf32> to vector<3x1xf32>
    %89 = vector.extract_strided_slice %57 {offsets = [0, 20], sizes = [1, 688], strides = [1, 1]} : vector<1x768xf32> to vector<1x688xf32>
    %90 = vector.broadcast %88 : vector<3x1xf32> to vector<3x688xf32>
    %91 = vector.broadcast %89 : vector<1x688xf32> to vector<3x688xf32>
    %92 = arith.mulf %90, %91 : vector<3x688xf32>
    %93 = arith.addf %87, %92 : vector<3x688xf32>
    %94 = vector.extract_strided_slice %1 {offsets = [0, 15], sizes = [3, 1], strides = [1, 1]} : vector<3x27xf32> to vector<3x1xf32>
    %95 = vector.extract_strided_slice %57 {offsets = [0, 36], sizes = [1, 688], strides = [1, 1]} : vector<1x768xf32> to vector<1x688xf32>
    %96 = vector.broadcast %94 : vector<3x1xf32> to vector<3x688xf32>
    %97 = vector.broadcast %95 : vector<1x688xf32> to vector<3x688xf32>
    %98 = arith.mulf %96, %97 : vector<3x688xf32>
    %99 = arith.addf %93, %98 : vector<3x688xf32>
    %100 = vector.extract_strided_slice %1 {offsets = [0, 16], sizes = [3, 1], strides = [1, 1]} : vector<3x27xf32> to vector<3x1xf32>
    %101 = vector.extract_strided_slice %57 {offsets = [0, 37], sizes = [1, 688], strides = [1, 1]} : vector<1x768xf32> to vector<1x688xf32>
    %102 = vector.broadcast %100 : vector<3x1xf32> to vector<3x688xf32>
    %103 = vector.broadcast %101 : vector<1x688xf32> to vector<3x688xf32>
    %104 = arith.mulf %102, %103 : vector<3x688xf32>
    %105 = arith.addf %99, %104 : vector<3x688xf32>
    %106 = vector.extract_strided_slice %1 {offsets = [0, 17], sizes = [3, 1], strides = [1, 1]} : vector<3x27xf32> to vector<3x1xf32>
    %107 = vector.extract_strided_slice %57 {offsets = [0, 38], sizes = [1, 688], strides = [1, 1]} : vector<1x768xf32> to vector<1x688xf32>
    %108 = vector.broadcast %106 : vector<3x1xf32> to vector<3x688xf32>
    %109 = vector.broadcast %107 : vector<1x688xf32> to vector<3x688xf32>
    %110 = arith.mulf %108, %109 : vector<3x688xf32>
    %111 = arith.addf %105, %110 : vector<3x688xf32>
    %112 = vector.extract_strided_slice %0 {offsets = [2, 0], sizes = [1, 768], strides = [1, 1]} : vector<3x768xf32> to vector<1x768xf32>
    %113 = vector.extract_strided_slice %1 {offsets = [0, 18], sizes = [3, 1], strides = [1, 1]} : vector<3x27xf32> to vector<3x1xf32>
    %114 = vector.extract_strided_slice %112 {offsets = [0, 0], sizes = [1, 688], strides = [1, 1]} : vector<1x768xf32> to vector<1x688xf32>
    %115 = vector.broadcast %113 : vector<3x1xf32> to vector<3x688xf32>
    %116 = vector.broadcast %114 : vector<1x688xf32> to vector<3x688xf32>
    %117 = arith.mulf %115, %116 : vector<3x688xf32>
    %118 = arith.addf %111, %117 : vector<3x688xf32>
    %119 = vector.extract_strided_slice %1 {offsets = [0, 19], sizes = [3, 1], strides = [1, 1]} : vector<3x27xf32> to vector<3x1xf32>
    %120 = vector.extract_strided_slice %112 {offsets = [0, 1], sizes = [1, 688], strides = [1, 1]} : vector<1x768xf32> to vector<1x688xf32>
    %121 = vector.broadcast %119 : vector<3x1xf32> to vector<3x688xf32>
    %122 = vector.broadcast %120 : vector<1x688xf32> to vector<3x688xf32>
    %123 = arith.mulf %121, %122 : vector<3x688xf32>
    %124 = arith.addf %118, %123 : vector<3x688xf32>
    %125 = vector.extract_strided_slice %1 {offsets = [0, 20], sizes = [3, 1], strides = [1, 1]} : vector<3x27xf32> to vector<3x1xf32>
    %126 = vector.extract_strided_slice %112 {offsets = [0, 2], sizes = [1, 688], strides = [1, 1]} : vector<1x768xf32> to vector<1x688xf32>
    %127 = vector.broadcast %125 : vector<3x1xf32> to vector<3x688xf32>
    %128 = vector.broadcast %126 : vector<1x688xf32> to vector<3x688xf32>
    %129 = arith.mulf %127, %128 : vector<3x688xf32>
    %130 = arith.addf %124, %129 : vector<3x688xf32>
    %131 = vector.extract_strided_slice %1 {offsets = [0, 21], sizes = [3, 1], strides = [1, 1]} : vector<3x27xf32> to vector<3x1xf32>
    %132 = vector.extract_strided_slice %112 {offsets = [0, 18], sizes = [1, 688], strides = [1, 1]} : vector<1x768xf32> to vector<1x688xf32>
    %133 = vector.broadcast %131 : vector<3x1xf32> to vector<3x688xf32>
    %134 = vector.broadcast %132 : vector<1x688xf32> to vector<3x688xf32>
    %135 = arith.mulf %133, %134 : vector<3x688xf32>
    %136 = arith.addf %130, %135 : vector<3x688xf32>
    %137 = vector.extract_strided_slice %1 {offsets = [0, 22], sizes = [3, 1], strides = [1, 1]} : vector<3x27xf32> to vector<3x1xf32>
    %138 = vector.extract_strided_slice %112 {offsets = [0, 19], sizes = [1, 688], strides = [1, 1]} : vector<1x768xf32> to vector<1x688xf32>
    %139 = vector.broadcast %137 : vector<3x1xf32> to vector<3x688xf32>
    %140 = vector.broadcast %138 : vector<1x688xf32> to vector<3x688xf32>
    %141 = arith.mulf %139, %140 : vector<3x688xf32>
    %142 = arith.addf %136, %141 : vector<3x688xf32>
    %143 = vector.extract_strided_slice %1 {offsets = [0, 23], sizes = [3, 1], strides = [1, 1]} : vector<3x27xf32> to vector<3x1xf32>
    %144 = vector.extract_strided_slice %112 {offsets = [0, 20], sizes = [1, 688], strides = [1, 1]} : vector<1x768xf32> to vector<1x688xf32>
    %145 = vector.broadcast %143 : vector<3x1xf32> to vector<3x688xf32>
    %146 = vector.broadcast %144 : vector<1x688xf32> to vector<3x688xf32>
    %147 = arith.mulf %145, %146 : vector<3x688xf32>
    %148 = arith.addf %142, %147 : vector<3x688xf32>
    %149 = vector.extract_strided_slice %1 {offsets = [0, 24], sizes = [3, 1], strides = [1, 1]} : vector<3x27xf32> to vector<3x1xf32>
    %150 = vector.extract_strided_slice %112 {offsets = [0, 36], sizes = [1, 688], strides = [1, 1]} : vector<1x768xf32> to vector<1x688xf32>
    %151 = vector.broadcast %149 : vector<3x1xf32> to vector<3x688xf32>
    %152 = vector.broadcast %150 : vector<1x688xf32> to vector<3x688xf32>
    %153 = arith.mulf %151, %152 : vector<3x688xf32>
    %154 = arith.addf %148, %153 : vector<3x688xf32>
    %155 = vector.extract_strided_slice %1 {offsets = [0, 25], sizes = [3, 1], strides = [1, 1]} : vector<3x27xf32> to vector<3x1xf32>
    %156 = vector.extract_strided_slice %112 {offsets = [0, 37], sizes = [1, 688], strides = [1, 1]} : vector<1x768xf32> to vector<1x688xf32>
    %157 = vector.broadcast %155 : vector<3x1xf32> to vector<3x688xf32>
    %158 = vector.broadcast %156 : vector<1x688xf32> to vector<3x688xf32>
    %159 = arith.mulf %157, %158 : vector<3x688xf32>
    %160 = arith.addf %154, %159 : vector<3x688xf32>
    %161 = vector.extract_strided_slice %1 {offsets = [0, 26], sizes = [3, 1], strides = [1, 1]} : vector<3x27xf32> to vector<3x1xf32>
    %162 = vector.extract_strided_slice %112 {offsets = [0, 38], sizes = [1, 688], strides = [1, 1]} : vector<1x768xf32> to vector<1x688xf32>
    %163 = vector.broadcast %161 : vector<3x1xf32> to vector<3x688xf32>
    %164 = vector.broadcast %162 : vector<1x688xf32> to vector<3x688xf32>
    %165 = arith.mulf %163, %164 : vector<3x688xf32>
    %166 = arith.addf %160, %165 : vector<3x688xf32>
    %c0_5 = arith.constant 0 : index
    %c0_6 = arith.constant 0 : index
    %167 = vector.load %arg2[%c0_5, %c0_6] : memref<3x1xf32, #tpu.memory_space<vmem>>, vector<3x1xf32>
    %168 = vector.broadcast %167 : vector<3x1xf32> to vector<3x688xf32>
    %169 = arith.addf %166, %168 : vector<3x688xf32>
    %cst = arith.constant 0.000000e+00 : f32
    %170 = vector.broadcast %cst : f32 to vector<3x688xf32>
    %171 = arith.maximumf %169, %170 : vector<3x688xf32>
    %172 = vector.extract_strided_slice %171 {offsets = [0, 0], sizes = [3, 687], strides = [1, 1]} : vector<3x688xf32> to vector<3x687xf32>
    %173 = vector.extract_strided_slice %171 {offsets = [0, 1], sizes = [3, 687], strides = [1, 1]} : vector<3x688xf32> to vector<3x687xf32>
    %174 = arith.maximumf %172, %173 : vector<3x687xf32>
    %175 = vector.extract_strided_slice %174 {offsets = [0, 0], sizes = [3, 669], strides = [1, 1]} : vector<3x687xf32> to vector<3x669xf32>
    %176 = vector.extract_strided_slice %174 {offsets = [0, 18], sizes = [3, 669], strides = [1, 1]} : vector<3x687xf32> to vector<3x669xf32>
    %177 = arith.maximumf %175, %176 : vector<3x669xf32>
    %c0_7 = arith.constant 0 : index
    %c0_8 = arith.constant 0 : index
    %178 = vector.load %arg5[%c0_7, %c0_8] : memref<1x768xf32, #tpu.memory_space<vmem>>, vector<1x669xf32>
    %179 = vector.broadcast %178 : vector<1x669xf32> to vector<3x669xf32>
    %180 = arith.mulf %177, %179 : vector<3x669xf32>
    %181 = vector.extract_strided_slice %180 {offsets = [0, 0], sizes = [1, 669], strides = [1, 1]} : vector<3x669xf32> to vector<1x669xf32>
    %182 = vector.extract_strided_slice %2 {offsets = [0, 0], sizes = [3, 1], strides = [1, 1]} : vector<3x27xf32> to vector<3x1xf32>
    %183 = vector.extract_strided_slice %181 {offsets = [0, 0], sizes = [1, 593], strides = [1, 1]} : vector<1x669xf32> to vector<1x593xf32>
    %184 = vector.broadcast %182 : vector<3x1xf32> to vector<3x593xf32>
    %185 = vector.broadcast %183 : vector<1x593xf32> to vector<3x593xf32>
    %186 = arith.mulf %184, %185 : vector<3x593xf32>
    %187 = vector.extract_strided_slice %2 {offsets = [0, 1], sizes = [3, 1], strides = [1, 1]} : vector<3x27xf32> to vector<3x1xf32>
    %188 = vector.extract_strided_slice %181 {offsets = [0, 2], sizes = [1, 593], strides = [1, 1]} : vector<1x669xf32> to vector<1x593xf32>
    %189 = vector.broadcast %187 : vector<3x1xf32> to vector<3x593xf32>
    %190 = vector.broadcast %188 : vector<1x593xf32> to vector<3x593xf32>
    %191 = arith.mulf %189, %190 : vector<3x593xf32>
    %192 = arith.addf %186, %191 : vector<3x593xf32>
    %193 = vector.extract_strided_slice %2 {offsets = [0, 2], sizes = [3, 1], strides = [1, 1]} : vector<3x27xf32> to vector<3x1xf32>
    %194 = vector.extract_strided_slice %181 {offsets = [0, 4], sizes = [1, 593], strides = [1, 1]} : vector<1x669xf32> to vector<1x593xf32>
    %195 = vector.broadcast %193 : vector<3x1xf32> to vector<3x593xf32>
    %196 = vector.broadcast %194 : vector<1x593xf32> to vector<3x593xf32>
    %197 = arith.mulf %195, %196 : vector<3x593xf32>
    %198 = arith.addf %192, %197 : vector<3x593xf32>
    %199 = vector.extract_strided_slice %2 {offsets = [0, 3], sizes = [3, 1], strides = [1, 1]} : vector<3x27xf32> to vector<3x1xf32>
    %200 = vector.extract_strided_slice %181 {offsets = [0, 36], sizes = [1, 593], strides = [1, 1]} : vector<1x669xf32> to vector<1x593xf32>
    %201 = vector.broadcast %199 : vector<3x1xf32> to vector<3x593xf32>
    %202 = vector.broadcast %200 : vector<1x593xf32> to vector<3x593xf32>
    %203 = arith.mulf %201, %202 : vector<3x593xf32>
    %204 = arith.addf %198, %203 : vector<3x593xf32>
    %205 = vector.extract_strided_slice %2 {offsets = [0, 4], sizes = [3, 1], strides = [1, 1]} : vector<3x27xf32> to vector<3x1xf32>
    %206 = vector.extract_strided_slice %181 {offsets = [0, 38], sizes = [1, 593], strides = [1, 1]} : vector<1x669xf32> to vector<1x593xf32>
    %207 = vector.broadcast %205 : vector<3x1xf32> to vector<3x593xf32>
    %208 = vector.broadcast %206 : vector<1x593xf32> to vector<3x593xf32>
    %209 = arith.mulf %207, %208 : vector<3x593xf32>
    %210 = arith.addf %204, %209 : vector<3x593xf32>
    %211 = vector.extract_strided_slice %2 {offsets = [0, 5], sizes = [3, 1], strides = [1, 1]} : vector<3x27xf32> to vector<3x1xf32>
    %212 = vector.extract_strided_slice %181 {offsets = [0, 40], sizes = [1, 593], strides = [1, 1]} : vector<1x669xf32> to vector<1x593xf32>
    %213 = vector.broadcast %211 : vector<3x1xf32> to vector<3x593xf32>
    %214 = vector.broadcast %212 : vector<1x593xf32> to vector<3x593xf32>
    %215 = arith.mulf %213, %214 : vector<3x593xf32>
    %216 = arith.addf %210, %215 : vector<3x593xf32>
    %217 = vector.extract_strided_slice %2 {offsets = [0, 6], sizes = [3, 1], strides = [1, 1]} : vector<3x27xf32> to vector<3x1xf32>
    %218 = vector.extract_strided_slice %181 {offsets = [0, 72], sizes = [1, 593], strides = [1, 1]} : vector<1x669xf32> to vector<1x593xf32>
    %219 = vector.broadcast %217 : vector<3x1xf32> to vector<3x593xf32>
    %220 = vector.broadcast %218 : vector<1x593xf32> to vector<3x593xf32>
    %221 = arith.mulf %219, %220 : vector<3x593xf32>
    %222 = arith.addf %216, %221 : vector<3x593xf32>
    %223 = vector.extract_strided_slice %2 {offsets = [0, 7], sizes = [3, 1], strides = [1, 1]} : vector<3x27xf32> to vector<3x1xf32>
    %224 = vector.extract_strided_slice %181 {offsets = [0, 74], sizes = [1, 593], strides = [1, 1]} : vector<1x669xf32> to vector<1x593xf32>
    %225 = vector.broadcast %223 : vector<3x1xf32> to vector<3x593xf32>
    %226 = vector.broadcast %224 : vector<1x593xf32> to vector<3x593xf32>
    %227 = arith.mulf %225, %226 : vector<3x593xf32>
    %228 = arith.addf %222, %227 : vector<3x593xf32>
    %229 = vector.extract_strided_slice %2 {offsets = [0, 8], sizes = [3, 1], strides = [1, 1]} : vector<3x27xf32> to vector<3x1xf32>
    %230 = vector.extract_strided_slice %181 {offsets = [0, 76], sizes = [1, 593], strides = [1, 1]} : vector<1x669xf32> to vector<1x593xf32>
    %231 = vector.broadcast %229 : vector<3x1xf32> to vector<3x593xf32>
    %232 = vector.broadcast %230 : vector<1x593xf32> to vector<3x593xf32>
    %233 = arith.mulf %231, %232 : vector<3x593xf32>
    %234 = arith.addf %228, %233 : vector<3x593xf32>
    %235 = vector.extract_strided_slice %180 {offsets = [1, 0], sizes = [1, 669], strides = [1, 1]} : vector<3x669xf32> to vector<1x669xf32>
    %236 = vector.extract_strided_slice %2 {offsets = [0, 9], sizes = [3, 1], strides = [1, 1]} : vector<3x27xf32> to vector<3x1xf32>
    %237 = vector.extract_strided_slice %235 {offsets = [0, 0], sizes = [1, 593], strides = [1, 1]} : vector<1x669xf32> to vector<1x593xf32>
    %238 = vector.broadcast %236 : vector<3x1xf32> to vector<3x593xf32>
    %239 = vector.broadcast %237 : vector<1x593xf32> to vector<3x593xf32>
    %240 = arith.mulf %238, %239 : vector<3x593xf32>
    %241 = arith.addf %234, %240 : vector<3x593xf32>
    %242 = vector.extract_strided_slice %2 {offsets = [0, 10], sizes = [3, 1], strides = [1, 1]} : vector<3x27xf32> to vector<3x1xf32>
    %243 = vector.extract_strided_slice %235 {offsets = [0, 2], sizes = [1, 593], strides = [1, 1]} : vector<1x669xf32> to vector<1x593xf32>
    %244 = vector.broadcast %242 : vector<3x1xf32> to vector<3x593xf32>
    %245 = vector.broadcast %243 : vector<1x593xf32> to vector<3x593xf32>
    %246 = arith.mulf %244, %245 : vector<3x593xf32>
    %247 = arith.addf %241, %246 : vector<3x593xf32>
    %248 = vector.extract_strided_slice %2 {offsets = [0, 11], sizes = [3, 1], strides = [1, 1]} : vector<3x27xf32> to vector<3x1xf32>
    %249 = vector.extract_strided_slice %235 {offsets = [0, 4], sizes = [1, 593], strides = [1, 1]} : vector<1x669xf32> to vector<1x593xf32>
    %250 = vector.broadcast %248 : vector<3x1xf32> to vector<3x593xf32>
    %251 = vector.broadcast %249 : vector<1x593xf32> to vector<3x593xf32>
    %252 = arith.mulf %250, %251 : vector<3x593xf32>
    %253 = arith.addf %247, %252 : vector<3x593xf32>
    %254 = vector.extract_strided_slice %2 {offsets = [0, 12], sizes = [3, 1], strides = [1, 1]} : vector<3x27xf32> to vector<3x1xf32>
    %255 = vector.extract_strided_slice %235 {offsets = [0, 36], sizes = [1, 593], strides = [1, 1]} : vector<1x669xf32> to vector<1x593xf32>
    %256 = vector.broadcast %254 : vector<3x1xf32> to vector<3x593xf32>
    %257 = vector.broadcast %255 : vector<1x593xf32> to vector<3x593xf32>
    %258 = arith.mulf %256, %257 : vector<3x593xf32>
    %259 = arith.addf %253, %258 : vector<3x593xf32>
    %260 = vector.extract_strided_slice %2 {offsets = [0, 13], sizes = [3, 1], strides = [1, 1]} : vector<3x27xf32> to vector<3x1xf32>
    %261 = vector.extract_strided_slice %235 {offsets = [0, 38], sizes = [1, 593], strides = [1, 1]} : vector<1x669xf32> to vector<1x593xf32>
    %262 = vector.broadcast %260 : vector<3x1xf32> to vector<3x593xf32>
    %263 = vector.broadcast %261 : vector<1x593xf32> to vector<3x593xf32>
    %264 = arith.mulf %262, %263 : vector<3x593xf32>
    %265 = arith.addf %259, %264 : vector<3x593xf32>
    %266 = vector.extract_strided_slice %2 {offsets = [0, 14], sizes = [3, 1], strides = [1, 1]} : vector<3x27xf32> to vector<3x1xf32>
    %267 = vector.extract_strided_slice %235 {offsets = [0, 40], sizes = [1, 593], strides = [1, 1]} : vector<1x669xf32> to vector<1x593xf32>
    %268 = vector.broadcast %266 : vector<3x1xf32> to vector<3x593xf32>
    %269 = vector.broadcast %267 : vector<1x593xf32> to vector<3x593xf32>
    %270 = arith.mulf %268, %269 : vector<3x593xf32>
    %271 = arith.addf %265, %270 : vector<3x593xf32>
    %272 = vector.extract_strided_slice %2 {offsets = [0, 15], sizes = [3, 1], strides = [1, 1]} : vector<3x27xf32> to vector<3x1xf32>
    %273 = vector.extract_strided_slice %235 {offsets = [0, 72], sizes = [1, 593], strides = [1, 1]} : vector<1x669xf32> to vector<1x593xf32>
    %274 = vector.broadcast %272 : vector<3x1xf32> to vector<3x593xf32>
    %275 = vector.broadcast %273 : vector<1x593xf32> to vector<3x593xf32>
    %276 = arith.mulf %274, %275 : vector<3x593xf32>
    %277 = arith.addf %271, %276 : vector<3x593xf32>
    %278 = vector.extract_strided_slice %2 {offsets = [0, 16], sizes = [3, 1], strides = [1, 1]} : vector<3x27xf32> to vector<3x1xf32>
    %279 = vector.extract_strided_slice %235 {offsets = [0, 74], sizes = [1, 593], strides = [1, 1]} : vector<1x669xf32> to vector<1x593xf32>
    %280 = vector.broadcast %278 : vector<3x1xf32> to vector<3x593xf32>
    %281 = vector.broadcast %279 : vector<1x593xf32> to vector<3x593xf32>
    %282 = arith.mulf %280, %281 : vector<3x593xf32>
    %283 = arith.addf %277, %282 : vector<3x593xf32>
    %284 = vector.extract_strided_slice %2 {offsets = [0, 17], sizes = [3, 1], strides = [1, 1]} : vector<3x27xf32> to vector<3x1xf32>
    %285 = vector.extract_strided_slice %235 {offsets = [0, 76], sizes = [1, 593], strides = [1, 1]} : vector<1x669xf32> to vector<1x593xf32>
    %286 = vector.broadcast %284 : vector<3x1xf32> to vector<3x593xf32>
    %287 = vector.broadcast %285 : vector<1x593xf32> to vector<3x593xf32>
    %288 = arith.mulf %286, %287 : vector<3x593xf32>
    %289 = arith.addf %283, %288 : vector<3x593xf32>
    %290 = vector.extract_strided_slice %180 {offsets = [2, 0], sizes = [1, 669], strides = [1, 1]} : vector<3x669xf32> to vector<1x669xf32>
    %291 = vector.extract_strided_slice %2 {offsets = [0, 18], sizes = [3, 1], strides = [1, 1]} : vector<3x27xf32> to vector<3x1xf32>
    %292 = vector.extract_strided_slice %290 {offsets = [0, 0], sizes = [1, 593], strides = [1, 1]} : vector<1x669xf32> to vector<1x593xf32>
    %293 = vector.broadcast %291 : vector<3x1xf32> to vector<3x593xf32>
    %294 = vector.broadcast %292 : vector<1x593xf32> to vector<3x593xf32>
    %295 = arith.mulf %293, %294 : vector<3x593xf32>
    %296 = arith.addf %289, %295 : vector<3x593xf32>
    %297 = vector.extract_strided_slice %2 {offsets = [0, 19], sizes = [3, 1], strides = [1, 1]} : vector<3x27xf32> to vector<3x1xf32>
    %298 = vector.extract_strided_slice %290 {offsets = [0, 2], sizes = [1, 593], strides = [1, 1]} : vector<1x669xf32> to vector<1x593xf32>
    %299 = vector.broadcast %297 : vector<3x1xf32> to vector<3x593xf32>
    %300 = vector.broadcast %298 : vector<1x593xf32> to vector<3x593xf32>
    %301 = arith.mulf %299, %300 : vector<3x593xf32>
    %302 = arith.addf %296, %301 : vector<3x593xf32>
    %303 = vector.extract_strided_slice %2 {offsets = [0, 20], sizes = [3, 1], strides = [1, 1]} : vector<3x27xf32> to vector<3x1xf32>
    %304 = vector.extract_strided_slice %290 {offsets = [0, 4], sizes = [1, 593], strides = [1, 1]} : vector<1x669xf32> to vector<1x593xf32>
    %305 = vector.broadcast %303 : vector<3x1xf32> to vector<3x593xf32>
    %306 = vector.broadcast %304 : vector<1x593xf32> to vector<3x593xf32>
    %307 = arith.mulf %305, %306 : vector<3x593xf32>
    %308 = arith.addf %302, %307 : vector<3x593xf32>
    %309 = vector.extract_strided_slice %2 {offsets = [0, 21], sizes = [3, 1], strides = [1, 1]} : vector<3x27xf32> to vector<3x1xf32>
    %310 = vector.extract_strided_slice %290 {offsets = [0, 36], sizes = [1, 593], strides = [1, 1]} : vector<1x669xf32> to vector<1x593xf32>
    %311 = vector.broadcast %309 : vector<3x1xf32> to vector<3x593xf32>
    %312 = vector.broadcast %310 : vector<1x593xf32> to vector<3x593xf32>
    %313 = arith.mulf %311, %312 : vector<3x593xf32>
    %314 = arith.addf %308, %313 : vector<3x593xf32>
    %315 = vector.extract_strided_slice %2 {offsets = [0, 22], sizes = [3, 1], strides = [1, 1]} : vector<3x27xf32> to vector<3x1xf32>
    %316 = vector.extract_strided_slice %290 {offsets = [0, 38], sizes = [1, 593], strides = [1, 1]} : vector<1x669xf32> to vector<1x593xf32>
    %317 = vector.broadcast %315 : vector<3x1xf32> to vector<3x593xf32>
    %318 = vector.broadcast %316 : vector<1x593xf32> to vector<3x593xf32>
    %319 = arith.mulf %317, %318 : vector<3x593xf32>
    %320 = arith.addf %314, %319 : vector<3x593xf32>
    %321 = vector.extract_strided_slice %2 {offsets = [0, 23], sizes = [3, 1], strides = [1, 1]} : vector<3x27xf32> to vector<3x1xf32>
    %322 = vector.extract_strided_slice %290 {offsets = [0, 40], sizes = [1, 593], strides = [1, 1]} : vector<1x669xf32> to vector<1x593xf32>
    %323 = vector.broadcast %321 : vector<3x1xf32> to vector<3x593xf32>
    %324 = vector.broadcast %322 : vector<1x593xf32> to vector<3x593xf32>
    %325 = arith.mulf %323, %324 : vector<3x593xf32>
    %326 = arith.addf %320, %325 : vector<3x593xf32>
    %327 = vector.extract_strided_slice %2 {offsets = [0, 24], sizes = [3, 1], strides = [1, 1]} : vector<3x27xf32> to vector<3x1xf32>
    %328 = vector.extract_strided_slice %290 {offsets = [0, 72], sizes = [1, 593], strides = [1, 1]} : vector<1x669xf32> to vector<1x593xf32>
    %329 = vector.broadcast %327 : vector<3x1xf32> to vector<3x593xf32>
    %330 = vector.broadcast %328 : vector<1x593xf32> to vector<3x593xf32>
    %331 = arith.mulf %329, %330 : vector<3x593xf32>
    %332 = arith.addf %326, %331 : vector<3x593xf32>
    %333 = vector.extract_strided_slice %2 {offsets = [0, 25], sizes = [3, 1], strides = [1, 1]} : vector<3x27xf32> to vector<3x1xf32>
    %334 = vector.extract_strided_slice %290 {offsets = [0, 74], sizes = [1, 593], strides = [1, 1]} : vector<1x669xf32> to vector<1x593xf32>
    %335 = vector.broadcast %333 : vector<3x1xf32> to vector<3x593xf32>
    %336 = vector.broadcast %334 : vector<1x593xf32> to vector<3x593xf32>
    %337 = arith.mulf %335, %336 : vector<3x593xf32>
    %338 = arith.addf %332, %337 : vector<3x593xf32>
    %339 = vector.extract_strided_slice %2 {offsets = [0, 26], sizes = [3, 1], strides = [1, 1]} : vector<3x27xf32> to vector<3x1xf32>
    %340 = vector.extract_strided_slice %290 {offsets = [0, 76], sizes = [1, 593], strides = [1, 1]} : vector<1x669xf32> to vector<1x593xf32>
    %341 = vector.broadcast %339 : vector<3x1xf32> to vector<3x593xf32>
    %342 = vector.broadcast %340 : vector<1x593xf32> to vector<3x593xf32>
    %343 = arith.mulf %341, %342 : vector<3x593xf32>
    %344 = arith.addf %338, %343 : vector<3x593xf32>
    %c0_9 = arith.constant 0 : index
    %c0_10 = arith.constant 0 : index
    %345 = vector.load %arg4[%c0_9, %c0_10] : memref<3x1xf32, #tpu.memory_space<vmem>>, vector<3x1xf32>
    %346 = vector.broadcast %345 : vector<3x1xf32> to vector<3x593xf32>
    %347 = arith.addf %344, %346 : vector<3x593xf32>
    %cst_11 = arith.constant 0.000000e+00 : f32
    %348 = vector.broadcast %cst_11 : f32 to vector<3x593xf32>
    %349 = arith.maximumf %347, %348 : vector<3x593xf32>
    %350 = vector.extract_strided_slice %349 {offsets = [0, 0], sizes = [3, 591], strides = [1, 1]} : vector<3x593xf32> to vector<3x591xf32>
    %351 = vector.extract_strided_slice %349 {offsets = [0, 2], sizes = [3, 591], strides = [1, 1]} : vector<3x593xf32> to vector<3x591xf32>
    %352 = arith.maximumf %350, %351 : vector<3x591xf32>
    %353 = vector.extract_strided_slice %352 {offsets = [0, 0], sizes = [3, 555], strides = [1, 1]} : vector<3x591xf32> to vector<3x555xf32>
    %354 = vector.extract_strided_slice %352 {offsets = [0, 36], sizes = [3, 555], strides = [1, 1]} : vector<3x591xf32> to vector<3x555xf32>
    %355 = arith.maximumf %353, %354 : vector<3x555xf32>
    %c0_12 = arith.constant 0 : index
    %c0_13 = arith.constant 0 : index
    %356 = vector.load %arg6[%c0_12, %c0_13] : memref<555x32xf32, #tpu.memory_space<vmem>>, vector<555x32xf32>
    %cst_14 = arith.constant dense<0.000000e+00> : vector<3x32xf32>
    %357 = tpu.matmul %355, %356, %cst_14 {dimension_numbers = #tpu.dot_dimension_numbers<[1], [0], [0], [1], [0, 0, 1, 1], [], []>, precision = #tpu.contract_precision<fp32>} : vector<3x555xf32>, vector<555x32xf32>, vector<3x32xf32> -> vector<3x32xf32>
    %c0_15 = arith.constant 0 : index
    %c0_16 = arith.constant 0 : index
    %358 = vector.load %arg7[%c0_15, %c0_16] : memref<48x128xf32, #tpu.memory_space<vmem>>, vector<48x128xf32>
    %c0_17 = arith.constant 0 : index
    %c0_18 = arith.constant 0 : index
    %359 = vector.load %arg8[%c0_17, %c0_18] : memref<1x128xf32, #tpu.memory_space<vmem>>, vector<1x128xf32>
    %360 = vector.extract_strided_slice %357 {offsets = [0, 0], sizes = [1, 16], strides = [1, 1]} : vector<3x32xf32> to vector<1x16xf32>
    %361 = vector.extract_strided_slice %358 {offsets = [0, 0], sizes = [16, 128], strides = [1, 1]} : vector<48x128xf32> to vector<16x128xf32>
    %cst_19 = arith.constant dense<0.000000e+00> : vector<1x128xf32>
    %362 = tpu.matmul %360, %361, %cst_19 {dimension_numbers = #tpu.dot_dimension_numbers<[1], [0], [0], [1], [0, 0, 1, 1], [], []>} : vector<1x16xf32>, vector<16x128xf32>, vector<1x128xf32> -> vector<1x128xf32>
    %363 = arith.addf %359, %362 : vector<1x128xf32>
    %364 = vector.extract_strided_slice %357 {offsets = [1, 0], sizes = [1, 16], strides = [1, 1]} : vector<3x32xf32> to vector<1x16xf32>
    %365 = vector.extract_strided_slice %358 {offsets = [16, 0], sizes = [16, 128], strides = [1, 1]} : vector<48x128xf32> to vector<16x128xf32>
    %cst_20 = arith.constant dense<0.000000e+00> : vector<1x128xf32>
    %366 = tpu.matmul %364, %365, %cst_20 {dimension_numbers = #tpu.dot_dimension_numbers<[1], [0], [0], [1], [0, 0, 1, 1], [], []>} : vector<1x16xf32>, vector<16x128xf32>, vector<1x128xf32> -> vector<1x128xf32>
    %367 = arith.addf %363, %366 : vector<1x128xf32>
    %368 = vector.extract_strided_slice %357 {offsets = [2, 0], sizes = [1, 16], strides = [1, 1]} : vector<3x32xf32> to vector<1x16xf32>
    %369 = vector.extract_strided_slice %358 {offsets = [32, 0], sizes = [16, 128], strides = [1, 1]} : vector<48x128xf32> to vector<16x128xf32>
    %cst_21 = arith.constant dense<0.000000e+00> : vector<1x128xf32>
    %370 = tpu.matmul %368, %369, %cst_21 {dimension_numbers = #tpu.dot_dimension_numbers<[1], [0], [0], [1], [0, 0, 1, 1], [], []>} : vector<1x16xf32>, vector<16x128xf32>, vector<1x128xf32> -> vector<1x128xf32>
    %371 = arith.addf %367, %370 : vector<1x128xf32>
    %cst_22 = arith.constant 0.000000e+00 : f32
    %372 = vector.broadcast %cst_22 : f32 to vector<1x128xf32>
    %373 = arith.maximumf %371, %372 : vector<1x128xf32>
    %c0_23 = arith.constant 0 : index
    %c0_24 = arith.constant 0 : index
    %374 = vector.load %arg8[%c0_23, %c0_24] : memref<1x128xf32, #tpu.memory_space<vmem>>, vector<1x128xf32>
    %375 = vector.extract_strided_slice %357 {offsets = [0, 16], sizes = [1, 16], strides = [1, 1]} : vector<3x32xf32> to vector<1x16xf32>
    %376 = vector.extract_strided_slice %358 {offsets = [0, 0], sizes = [16, 128], strides = [1, 1]} : vector<48x128xf32> to vector<16x128xf32>
    %cst_25 = arith.constant dense<0.000000e+00> : vector<1x128xf32>
    %377 = tpu.matmul %375, %376, %cst_25 {dimension_numbers = #tpu.dot_dimension_numbers<[1], [0], [0], [1], [0, 0, 1, 1], [], []>} : vector<1x16xf32>, vector<16x128xf32>, vector<1x128xf32> -> vector<1x128xf32>
    %378 = arith.addf %374, %377 : vector<1x128xf32>
    %379 = vector.extract_strided_slice %357 {offsets = [1, 16], sizes = [1, 16], strides = [1, 1]} : vector<3x32xf32> to vector<1x16xf32>
    %380 = vector.extract_strided_slice %358 {offsets = [16, 0], sizes = [16, 128], strides = [1, 1]} : vector<48x128xf32> to vector<16x128xf32>
    %cst_26 = arith.constant dense<0.000000e+00> : vector<1x128xf32>
    %381 = tpu.matmul %379, %380, %cst_26 {dimension_numbers = #tpu.dot_dimension_numbers<[1], [0], [0], [1], [0, 0, 1, 1], [], []>} : vector<1x16xf32>, vector<16x128xf32>, vector<1x128xf32> -> vector<1x128xf32>
    %382 = arith.addf %378, %381 : vector<1x128xf32>
    %383 = vector.extract_strided_slice %357 {offsets = [2, 16], sizes = [1, 16], strides = [1, 1]} : vector<3x32xf32> to vector<1x16xf32>
    %384 = vector.extract_strided_slice %358 {offsets = [32, 0], sizes = [16, 128], strides = [1, 1]} : vector<48x128xf32> to vector<16x128xf32>
    %cst_27 = arith.constant dense<0.000000e+00> : vector<1x128xf32>
    %385 = tpu.matmul %383, %384, %cst_27 {dimension_numbers = #tpu.dot_dimension_numbers<[1], [0], [0], [1], [0, 0, 1, 1], [], []>} : vector<1x16xf32>, vector<16x128xf32>, vector<1x128xf32> -> vector<1x128xf32>
    %386 = arith.addf %382, %385 : vector<1x128xf32>
    %cst_28 = arith.constant 0.000000e+00 : f32
    %387 = vector.broadcast %cst_28 : f32 to vector<1x128xf32>
    %388 = arith.maximumf %386, %387 : vector<1x128xf32>
    %389 = tpu.concatenate %373, %388 in 0 : vector<1x128xf32>, vector<1x128xf32> -> vector<2x128xf32>
    %c0_29 = arith.constant 0 : index
    %c0_30 = arith.constant 0 : index
    %390 = vector.load %arg9[%c0_29, %c0_30] : memref<128x1xf32, #tpu.memory_space<vmem>>, vector<128x1xf32>
    %cst_31 = arith.constant dense<0.000000e+00> : vector<2x1xf32>
    %391 = tpu.matmul %389, %390, %cst_31 {dimension_numbers = #tpu.dot_dimension_numbers<[1], [0], [0], [1], [0, 0, 1, 1], [], []>} : vector<2x128xf32>, vector<128x1xf32>, vector<2x1xf32> -> vector<2x1xf32>
    %c0_32 = arith.constant 0 : index
    %c0_33 = arith.constant 0 : index
    %392 = vector.load %arg10[%c0_32, %c0_33] : memref<1x1xf32, #tpu.memory_space<vmem>>, vector<1x1xf32>
    %393 = vector.broadcast %392 : vector<1x1xf32> to vector<2x1xf32>
    %394 = arith.addf %391, %393 : vector<2x1xf32>
    %cst_34 = arith.constant 0.000000e+00 : f32
    %395 = vector.broadcast %cst_34 : f32 to vector<2x1xf32>
    %396 = arith.maximumf %394, %395 : vector<2x1xf32>
    %cst_35 = arith.constant 0.000000e+00 : f32
    %397 = vector.broadcast %cst_35 : f32 to vector<2x1xf32>
    %398 = arith.subf %397, %396 : vector<2x1xf32>
    %399 = math.exp %398 : vector<2x1xf32>
    %cst_36 = arith.constant 1.000000e+00 : f32
    %400 = vector.broadcast %cst_36 : f32 to vector<2x1xf32>
    %401 = arith.addf %400, %399 : vector<2x1xf32>
    %cst_37 = arith.constant 1.000000e+00 : f32
    %402 = vector.broadcast %cst_37 : f32 to vector<2x1xf32>
    %403 = arith.divf %402, %401 : vector<2x1xf32>
    %c0_38 = arith.constant 0 : index
    %c0_39 = arith.constant 0 : index
    %404 = vector.load %arg11[%c0_38, %c0_39] : memref<2x1xf32, #tpu.memory_space<vmem>>, vector<2x1xf32>
    tpu.vector_store %arg11[%c0_38, %c0_39], %403 {strides = array<i32>} : memref<2x1xf32, #tpu.memory_space<vmem>>, vector<2x1xf32>,
    return
  }
}

</mosaic_0001>

<llo_original>
// kernel: cnn_forward.1
$region0: #{cnn_forward.1}
  #allocation0 [shape = 'u32[]', space=smem, size = 0x4, offset = 0x4, fixed_abs, tag = 'smem constant byte address 0x4 - core index']
  #allocation1 [shape = 'u32[72,128]{1,0:T(1,128)}', space=vmem, size = 0x9000, scoped, tag = 'internal scratch']
  #allocation2 [shape = 'f32[1,1]{1,0:T(1,128)S(1)}', space=vmem, size = 0x200, scoped, tag = 'scoped memory for cnn_forward.1']
  %s0 = inlined_call_operand.vmem [shape: f32[3,768], index: 0, kind: input, shape index: {}]
  %s1 = inlined_call_operand.vmem [shape: f32[3,27], index: 1, kind: input, shape index: {}]
  %s2 = inlined_call_operand.vmem [shape: f32[3,1], index: 2, kind: input, shape index: {}]
  %s3 = inlined_call_operand.vmem [shape: f32[3,27], index: 3, kind: input, shape index: {}]
  %s4 = inlined_call_operand.vmem [shape: f32[3,1], index: 4, kind: input, shape index: {}]
  %s5 = inlined_call_operand.vmem [shape: f32[1,768], index: 5, kind: input, shape index: {}]
  %s6 = inlined_call_operand.vmem [shape: f32[555,32], index: 6, kind: input, shape index: {}]
  %s7 = inlined_call_operand.vmem [shape: f32[48,128], index: 7, kind: input, shape index: {}]
  %s8 = inlined_call_operand.vmem [shape: f32[1,128], index: 8, kind: input, shape index: {}]
  %s9 = inlined_call_operand.vmem [shape: f32[128,1], index: 9, kind: input, shape index: {}]
  %s10 = inlined_call_operand.<no memory space> [shape: f32[1,1], index: 10, kind: input, shape index: {}]
  %s11 = inlined_call_operand.vmem [shape: f32[2,1], index: 11, kind: output, shape index: {}]
  %s12 = sld [smem:[#allocation0]]
  $region54: #{cnn_forward.1} parent=0
    _
  %s14 = ssub.s32 1, %s12
  %s15 = scalar_select 0, %s14, %s12
  %v16 = vstv %s10
  %17 = vst [vmem:[#allocation2] sm:$0x1] %v16
  // Predicated region
  $region2: #{cnn_forward.1} parent=0 // pred_check
    _
  $region3: #{cnn_forward.1} parent=0 // pred_check_branch
    %19 = sbr.rel (0) target = $region5
  $region4: #{cnn_forward.1} parent=0 // pred_region
    _
  $region5: #{cnn_forward.1} parent=0 // pred_fallthru
    _
  // Predicated region
  $region6: #{cnn_forward.1} parent=0 // pred_check
    _
  $region7: #{cnn_forward.1} parent=0 // pred_check_branch
    %21 = sbr.rel (0) target = $region9
  $region8: #{cnn_forward.1} parent=0 // pred_region
    _
  $region9: #{cnn_forward.1} parent=0 // pred_fallthru
    _
  // Predicated region
  $region10: #{cnn_forward.1} parent=0 // pred_check
    _
  $region11: #{cnn_forward.1} parent=0 // pred_check_branch
    %23 = sbr.rel (0) target = $region13
  $region12: #{cnn_forward.1} parent=0 // pred_region
    _
  $region13: #{cnn_forward.1} parent=0 // pred_fallthru
    _
  // Predicated region
  $region14: #{cnn_forward.1} parent=0 // pred_check
    _
  $region15: #{cnn_forward.1} parent=0 // pred_check_branch
    %25 = sbr.rel (0) target = $region17
  $region16: #{cnn_forward.1} parent=0 // pred_region
    _
  $region17: #{cnn_forward.1} parent=0 // pred_fallthru
    _
  // Predicated region
  $region18: #{cnn_forward.1} parent=0 // pred_check
    _
  $region19: #{cnn_forward.1} parent=0 // pred_check_branch
    %27 = sbr.rel (0) target = $region21
  $region20: #{cnn_forward.1} parent=0 // pred_region
    _
  $region21: #{cnn_forward.1} parent=0 // pred_fallthru
    _
  // Predicated region
  $region22: #{cnn_forward.1} parent=0 // pred_check
    _
  $region23: #{cnn_forward.1} parent=0 // pred_check_branch
    %29 = sbr.rel (0) target = $region25
  $region24: #{cnn_forward.1} parent=0 // pred_region
    _
  $region25: #{cnn_forward.1} parent=0 // pred_fallthru
    _
  // Predicated region
  $region26: #{cnn_forward.1} parent=0 // pred_check
    _
  $region27: #{cnn_forward.1} parent=0 // pred_check_branch
    %31 = sbr.rel (0) target = $region29
  $region28: #{cnn_forward.1} parent=0 // pred_region
    _
  $region29: #{cnn_forward.1} parent=0 // pred_fallthru
    _
  // Predicated region
  $region30: #{cnn_forward.1} parent=0 // pred_check
    _
  $region31: #{cnn_forward.1} parent=0 // pred_check_branch
    %33 = sbr.rel (0) target = $region33
  $region32: #{cnn_forward.1} parent=0 // pred_region
    _
  $region33: #{cnn_forward.1} parent=0 // pred_fallthru
    _
  // Predicated region
  $region34: #{cnn_forward.1} parent=0 // pred_check
    _
  $region35: #{cnn_forward.1} parent=0 // pred_check_branch
    %35 = sbr.rel (0) target = $region37
  $region36: #{cnn_forward.1} parent=0 // pred_region
    _
  $region37: #{cnn_forward.1} parent=0 // pred_fallthru
    _
  // Predicated region
  $region38: #{cnn_forward.1} parent=0 // pred_check
    _
  $region39: #{cnn_forward.1} parent=0 // pred_check_branch
    %37 = sbr.rel (0) target = $region41
  $region40: #{cnn_forward.1} parent=0 // pred_region
    _
  $region41: #{cnn_forward.1} parent=0 // pred_fallthru
    _
  // Predicated region
  $region42: #{cnn_forward.1} parent=0 // pred_check
    _
  $region43: #{cnn_forward.1} parent=0 // pred_check_branch
    %39 = sbr.rel (0) target = $region45
  $region44: #{cnn_forward.1} parent=0 // pred_region
    _
  $region45: #{cnn_forward.1} parent=0 // pred_fallthru
    _
  %v40 = vld [vmem:[%s0] sm:$0x77]
  %v41 = vld [vmem:[%s0 + $0x8] sm:$0x77]
  %v42 = vld [vmem:[%s0 + $0x10] sm:$0x77]
  %v43 = vld [vmem:[%s1] sm:$0x7]
  %v44 = vld [vmem:[%s3] sm:$0x7]
  %46 = vset.pattern.permute.xlu0 0
  %47 = vperm.xlu0 %46, %v43
  %v48 = vpop.permute.xlu0 %47
  %v53 = vperm.slane %v40, 0
  %v54 = vperm.slane %v40, 4
  %v55 = vperm.slane %v41, 0
  %v56 = vperm.slane %v41, 4
  %v57 = vperm.slane %v42, 0
  %v58 = vperm.slane %v42, 4
  %v65 = vperm.slane %v53, 0
  %v66 = vperm.slane %v54, 0
  %v67 = vperm.slane %v55, 0
  %v68 = vperm.slane %v56, 0
  %v69 = vperm.slane %v57, 0
  %v70 = vperm.slane %v58, 0
  %v71 = vmul.f32 %v48, %v65
  %v72 = vmul.f32 %v48, %v66
  %v73 = vmul.f32 %v48, %v67
  %v74 = vmul.f32 %v48, %v68
  %v75 = vmul.f32 %v48, %v69
  %v76 = vmul.f32 %v48, %v70
  %77 = vset.pattern.permute.xlu0 1
  %78 = vperm.xlu0 %77, %v43
  %v79 = vpop.permute.xlu0 %78
  %v81 = vmul.f32 %v79, %v65
  %v82 = vmul.f32 %v79, %v66
  %v83 = vmul.f32 %v79, %v67
  %v84 = vmul.f32 %v79, %v68
  %v85 = vmul.f32 %v79, %v69
  %v86 = vmul.f32 %v79, %v70
  %93 = vrot.lane.b32.xlu0 %v81, 127
  %v94 = vpop.permute.xlu0 %93
  %95 = vrot.lane.b32.xlu0 %v82, 127
  %v96 = vpop.permute.xlu0 %95
  %97 = vrot.lane.b32.xlu0 %v83, 127
  %v98 = vpop.permute.xlu0 %97
  %99 = vrot.lane.b32.xlu0 %v84, 127
  %v100 = vpop.permute.xlu0 %99
  %101 = vrot.lane.b32.xlu0 %v85, 127
  %v102 = vpop.permute.xlu0 %101
  %103 = vrot.lane.b32.xlu0 %v86, 127
  %v104 = vpop.permute.xlu0 %103
  %vm105 = vcmask 1039360
  %v106 = vsel %vm105, %v94, %v96
  %v107 = vsel %vm105, %v96, %v98
  %v108 = vsel %vm105, %v98, %v100
  %v109 = vsel %vm105, %v100, %v102
  %v110 = vsel %vm105, %v102, %v104
  %v117 = vadd.f32 %v71, %v106
  %v118 = vadd.f32 %v72, %v107
  %v119 = vadd.f32 %v73, %v108
  %v120 = vadd.f32 %v74, %v109
  %v121 = vadd.f32 %v75, %v110
  %v122 = vadd.f32 %v76, %v104
  %123 = vset.pattern.permute.xlu0 2
  %124 = vperm.xlu0 %123, %v43
  %v125 = vpop.permute.xlu0 %124
  %v127 = vmul.f32 %v125, %v65
  %v128 = vmul.f32 %v125, %v66
  %v129 = vmul.f32 %v125, %v67
  %v130 = vmul.f32 %v125, %v68
  %v131 = vmul.f32 %v125, %v69
  %v132 = vmul.f32 %v125, %v70
  %139 = vrot.lane.b32.xlu0 %v127, 126
  %v140 = vpop.permute.xlu0 %139
  %141 = vrot.lane.b32.xlu0 %v128, 126
  %v142 = vpop.permute.xlu0 %141
  %143 = vrot.lane.b32.xlu0 %v129, 126
  %v144 = vpop.permute.xlu0 %143
  %145 = vrot.lane.b32.xlu0 %v130, 126
  %v146 = vpop.permute.xlu0 %145
  %147 = vrot.lane.b32.xlu0 %v131, 126
  %v148 = vpop.permute.xlu0 %147
  %149 = vrot.lane.b32.xlu0 %v132, 126
  %v150 = vpop.permute.xlu0 %149
  %vm151 = vcmask 1031168
  %v152 = vsel %vm151, %v140, %v142
  %v153 = vsel %vm151, %v142, %v144
  %v154 = vsel %vm151, %v144, %v146
  %v155 = vsel %vm151, %v146, %v148
  %v156 = vsel %vm151, %v148, %v150
  %v163 = vadd.f32 %v117, %v152
  %v164 = vadd.f32 %v118, %v153
  %v165 = vadd.f32 %v119, %v154
  %v166 = vadd.f32 %v120, %v155
  %v167 = vadd.f32 %v121, %v156
  %v168 = vadd.f32 %v122, %v150
  %169 = vset.pattern.permute.xlu0 3
  %170 = vperm.xlu0 %169, %v43
  %v171 = vpop.permute.xlu0 %170
  %v173 = vmul.f32 %v171, %v65
  %v174 = vmul.f32 %v171, %v66
  %v175 = vmul.f32 %v171, %v67
  %v176 = vmul.f32 %v171, %v68
  %v177 = vmul.f32 %v171, %v69
  %v178 = vmul.f32 %v171, %v70
  %185 = vrot.lane.b32.xlu0 %v173, 110
  %v186 = vpop.permute.xlu0 %185
  %187 = vrot.lane.b32.xlu0 %v174, 110
  %v188 = vpop.permute.xlu0 %187
  %189 = vrot.lane.b32.xlu0 %v175, 110
  %v190 = vpop.permute.xlu0 %189
  %191 = vrot.lane.b32.xlu0 %v176, 110
  %v192 = vpop.permute.xlu0 %191
  %193 = vrot.lane.b32.xlu0 %v177, 110
  %v194 = vpop.permute.xlu0 %193
  %195 = vrot.lane.b32.xlu0 %v178, 110
  %v196 = vpop.permute.xlu0 %195
  %vm197 = vcmask 900096
  %v198 = vsel %vm197, %v186, %v188
  %v199 = vsel %vm197, %v188, %v190
  %v200 = vsel %vm197, %v190, %v192
  %v201 = vsel %vm197, %v192, %v194
  %v202 = vsel %vm197, %v194, %v196
  %v209 = vadd.f32 %v163, %v198
  %v210 = vadd.f32 %v164, %v199
  %v211 = vadd.f32 %v165, %v200
  %v212 = vadd.f32 %v166, %v201
  %v213 = vadd.f32 %v167, %v202
  %v214 = vadd.f32 %v168, %v196
  %215 = vset.pattern.permute.xlu0 4
  %216 = vperm.xlu0 %215, %v43
  %v217 = vpop.permute.xlu0 %216
  %v219 = vmul.f32 %v217, %v65
  %v220 = vmul.f32 %v217, %v66
  %v221 = vmul.f32 %v217, %v67
  %v222 = vmul.f32 %v217, %v68
  %v223 = vmul.f32 %v217, %v69
  %v224 = vmul.f32 %v217, %v70
  %231 = vrot.lane.b32.xlu0 %v219, 109
  %v232 = vpop.permute.xlu0 %231
  %233 = vrot.lane.b32.xlu0 %v220, 109
  %v234 = vpop.permute.xlu0 %233
  %235 = vrot.lane.b32.xlu0 %v221, 109
  %v236 = vpop.permute.xlu0 %235
  %237 = vrot.lane.b32.xlu0 %v222, 109
  %v238 = vpop.permute.xlu0 %237
  %239 = vrot.lane.b32.xlu0 %v223, 109
  %v240 = vpop.permute.xlu0 %239
  %241 = vrot.lane.b32.xlu0 %v224, 109
  %v242 = vpop.permute.xlu0 %241
  %vm243 = vcmask 891904
  %v244 = vsel %vm243, %v232, %v234
  %v245 = vsel %vm243, %v234, %v236
  %v246 = vsel %vm243, %v236, %v238
  %v247 = vsel %vm243, %v238, %v240
  %v248 = vsel %vm243, %v240, %v242
  %v255 = vadd.f32 %v209, %v244
  %v256 = vadd.f32 %v210, %v245
  %v257 = vadd.f32 %v211, %v246
  %v258 = vadd.f32 %v212, %v247
  %v259 = vadd.f32 %v213, %v248
  %v260 = vadd.f32 %v214, %v242
  %261 = vset.pattern.permute.xlu0 5
  %262 = vperm.xlu0 %261, %v43
  %v263 = vpop.permute.xlu0 %262
  %v265 = vmul.f32 %v263, %v65
  %v266 = vmul.f32 %v263, %v66
  %v267 = vmul.f32 %v263, %v67
  %v268 = vmul.f32 %v263, %v68
  %v269 = vmul.f32 %v263, %v69
  %v270 = vmul.f32 %v263, %v70
  %277 = vrot.lane.b32.xlu0 %v265, 108
  %v278 = vpop.permute.xlu0 %277
  %279 = vrot.lane.b32.xlu0 %v266, 108
  %v280 = vpop.permute.xlu0 %279
  %281 = vrot.lane.b32.xlu0 %v267, 108
  %v282 = vpop.permute.xlu0 %281
  %283 = vrot.lane.b32.xlu0 %v268, 108
  %v284 = vpop.permute.xlu0 %283
  %285 = vrot.lane.b32.xlu0 %v269, 108
  %v286 = vpop.permute.xlu0 %285
  %287 = vrot.lane.b32.xlu0 %v270, 108
  %v288 = vpop.permute.xlu0 %287
  %vm289 = vcmask 883712
  %v290 = vsel %vm289, %v278, %v280
  %v291 = vsel %vm289, %v280, %v282
  %v292 = vsel %vm289, %v282, %v284
  %v293 = vsel %vm289, %v284, %v286
  %v294 = vsel %vm289, %v286, %v288
  %v301 = vadd.f32 %v255, %v290
  %v302 = vadd.f32 %v256, %v291
  %v303 = vadd.f32 %v257, %v292
  %v304 = vadd.f32 %v258, %v293
  %v305 = vadd.f32 %v259, %v294
  %v306 = vadd.f32 %v260, %v288
  %307 = vset.pattern.permute.xlu0 6
  %308 = vperm.xlu0 %307, %v43
  %v309 = vpop.permute.xlu0 %308
  %v311 = vmul.f32 %v309, %v65
  %v312 = vmul.f32 %v309, %v66
  %v313 = vmul.f32 %v309, %v67
  %v314 = vmul.f32 %v309, %v68
  %v315 = vmul.f32 %v309, %v69
  %v316 = vmul.f32 %v309, %v70
  %323 = vrot.lane.b32.xlu0 %v311, 92
  %v324 = vpop.permute.xlu0 %323
  %325 = vrot.lane.b32.xlu0 %v312, 92
  %v326 = vpop.permute.xlu0 %325
  %327 = vrot.lane.b32.xlu0 %v313, 92
  %v328 = vpop.permute.xlu0 %327
  %329 = vrot.lane.b32.xlu0 %v314, 92
  %v330 = vpop.permute.xlu0 %329
  %331 = vrot.lane.b32.xlu0 %v315, 92
  %v332 = vpop.permute.xlu0 %331
  %333 = vrot.lane.b32.xlu0 %v316, 92
  %v334 = vpop.permute.xlu0 %333
  %vm335 = vcmask 752640
  %v336 = vsel %vm335, %v324, %v326
  %v337 = vsel %vm335, %v326, %v328
  %v338 = vsel %vm335, %v328, %v330
  %v339 = vsel %vm335, %v330, %v332
  %v340 = vsel %vm335, %v332, %v334
  %v347 = vadd.f32 %v301, %v336
  %v348 = vadd.f32 %v302, %v337
  %v349 = vadd.f32 %v303, %v338
  %v350 = vadd.f32 %v304, %v339
  %v351 = vadd.f32 %v305, %v340
  %v352 = vadd.f32 %v306, %v334
  %353 = vset.pattern.permute.xlu0 7
  %354 = vperm.xlu0 %353, %v43
  %v355 = vpop.permute.xlu0 %354
  %v357 = vmul.f32 %v355, %v65
  %v358 = vmul.f32 %v355, %v66
  %v359 = vmul.f32 %v355, %v67
  %v360 = vmul.f32 %v355, %v68
  %v361 = vmul.f32 %v355, %v69
  %v362 = vmul.f32 %v355, %v70
  %369 = vrot.lane.b32.xlu0 %v357, 91
  %v370 = vpop.permute.xlu0 %369
  %371 = vrot.lane.b32.xlu0 %v358, 91
  %v372 = vpop.permute.xlu0 %371
  %373 = vrot.lane.b32.xlu0 %v359, 91
  %v374 = vpop.permute.xlu0 %373
  %375 = vrot.lane.b32.xlu0 %v360, 91
  %v376 = vpop.permute.xlu0 %375
  %377 = vrot.lane.b32.xlu0 %v361, 91
  %v378 = vpop.permute.xlu0 %377
  %379 = vrot.lane.b32.xlu0 %v362, 91
  %v380 = vpop.permute.xlu0 %379
  %vm381 = vcmask 744448
  %v382 = vsel %vm381, %v370, %v372
  %v383 = vsel %vm381, %v372, %v374
  %v384 = vsel %vm381, %v374, %v376
  %v385 = vsel %vm381, %v376, %v378
  %v386 = vsel %vm381, %v378, %v380
  %v393 = vadd.f32 %v347, %v382
  %v394 = vadd.f32 %v348, %v383
  %v395 = vadd.f32 %v349, %v384
  %v396 = vadd.f32 %v350, %v385
  %v397 = vadd.f32 %v351, %v386
  %v398 = vadd.f32 %v352, %v380
  %399 = vset.pattern.permute.xlu0 8
  %400 = vperm.xlu0 %399, %v43
  %v401 = vpop.permute.xlu0 %400
  %v403 = vmul.f32 %v401, %v65
  %v404 = vmul.f32 %v401, %v66
  %v405 = vmul.f32 %v401, %v67
  %v406 = vmul.f32 %v401, %v68
  %v407 = vmul.f32 %v401, %v69
  %v408 = vmul.f32 %v401, %v70
  %415 = vrot.lane.b32.xlu0 %v403, 90
  %v416 = vpop.permute.xlu0 %415
  %417 = vrot.lane.b32.xlu0 %v404, 90
  %v418 = vpop.permute.xlu0 %417
  %419 = vrot.lane.b32.xlu0 %v405, 90
  %v420 = vpop.permute.xlu0 %419
  %421 = vrot.lane.b32.xlu0 %v406, 90
  %v422 = vpop.permute.xlu0 %421
  %423 = vrot.lane.b32.xlu0 %v407, 90
  %v424 = vpop.permute.xlu0 %423
  %425 = vrot.lane.b32.xlu0 %v408, 90
  %v426 = vpop.permute.xlu0 %425
  %vm427 = vcmask 736256
  %v428 = vsel %vm427, %v416, %v418
  %v429 = vsel %vm427, %v418, %v420
  %v430 = vsel %vm427, %v420, %v422
  %v431 = vsel %vm427, %v422, %v424
  %v432 = vsel %vm427, %v424, %v426
  %v439 = vadd.f32 %v393, %v428
  %v440 = vadd.f32 %v394, %v429
  %v441 = vadd.f32 %v395, %v430
  %v442 = vadd.f32 %v396, %v431
  %v443 = vadd.f32 %v397, %v432
  %v444 = vadd.f32 %v398, %v426
  %445 = vset.pattern.permute.xlu0 9
  %446 = vperm.xlu0 %445, %v43
  %v447 = vpop.permute.xlu0 %446
  %v449 = vperm.slane %v40, 1
  %v450 = vperm.slane %v40, 5
  %v451 = vperm.slane %v41, 1
  %v452 = vperm.slane %v41, 5
  %v453 = vperm.slane %v42, 1
  %v454 = vperm.slane %v42, 5
  %v461 = vperm.slane %v449, 1
  %v462 = vperm.slane %v450, 1
  %v463 = vperm.slane %v451, 1
  %v464 = vperm.slane %v452, 1
  %v465 = vperm.slane %v453, 1
  %v466 = vperm.slane %v454, 1
  %v467 = vmul.f32 %v447, %v461
  %v468 = vmul.f32 %v447, %v462
  %v469 = vmul.f32 %v447, %v463
  %v470 = vmul.f32 %v447, %v464
  %v471 = vmul.f32 %v447, %v465
  %v472 = vmul.f32 %v447, %v466
  %v473 = vadd.f32 %v439, %v467
  %v474 = vadd.f32 %v440, %v468
  %v475 = vadd.f32 %v441, %v469
  %v476 = vadd.f32 %v442, %v470
  %v477 = vadd.f32 %v443, %v471
  %v478 = vadd.f32 %v444, %v472
  %479 = vset.pattern.permute.xlu0 10
  %480 = vperm.xlu0 %479, %v43
  %v481 = vpop.permute.xlu0 %480
  %v483 = vmul.f32 %v481, %v461
  %v484 = vmul.f32 %v481, %v462
  %v485 = vmul.f32 %v481, %v463
  %v486 = vmul.f32 %v481, %v464
  %v487 = vmul.f32 %v481, %v465
  %v488 = vmul.f32 %v481, %v466
  %495 = vrot.lane.b32.xlu0 %v483, 127
  %v496 = vpop.permute.xlu0 %495
  %497 = vrot.lane.b32.xlu0 %v484, 127
  %v498 = vpop.permute.xlu0 %497
  %499 = vrot.lane.b32.xlu0 %v485, 127
  %v500 = vpop.permute.xlu0 %499
  %501 = vrot.lane.b32.xlu0 %v486, 127
  %v502 = vpop.permute.xlu0 %501
  %503 = vrot.lane.b32.xlu0 %v487, 127
  %v504 = vpop.permute.xlu0 %503
  %505 = vrot.lane.b32.xlu0 %v488, 127
  %v506 = vpop.permute.xlu0 %505
  %v507 = vsel %vm105, %v496, %v498
  %v508 = vsel %vm105, %v498, %v500
  %v509 = vsel %vm105, %v500, %v502
  %v510 = vsel %vm105, %v502, %v504
  %v511 = vsel %vm105, %v504, %v506
  %v518 = vadd.f32 %v473, %v507
  %v519 = vadd.f32 %v474, %v508
  %v520 = vadd.f32 %v475, %v509
  %v521 = vadd.f32 %v476, %v510
  %v522 = vadd.f32 %v477, %v511
  %v523 = vadd.f32 %v478, %v506
  %524 = vset.pattern.permute.xlu0 11
  %525 = vperm.xlu0 %524, %v43
  %v526 = vpop.permute.xlu0 %525
  %v528 = vmul.f32 %v526, %v461
  %v529 = vmul.f32 %v526, %v462
  %v530 = vmul.f32 %v526, %v463
  %v531 = vmul.f32 %v526, %v464
  %v532 = vmul.f32 %v526, %v465
  %v533 = vmul.f32 %v526, %v466
  %540 = vrot.lane.b32.xlu0 %v528, 126
  %v541 = vpop.permute.xlu0 %540
  %542 = vrot.lane.b32.xlu0 %v529, 126
  %v543 = vpop.permute.xlu0 %542
  %544 = vrot.lane.b32.xlu0 %v530, 126
  %v545 = vpop.permute.xlu0 %544
  %546 = vrot.lane.b32.xlu0 %v531, 126
  %v547 = vpop.permute.xlu0 %546
  %548 = vrot.lane.b32.xlu0 %v532, 126
  %v549 = vpop.permute.xlu0 %548
  %550 = vrot.lane.b32.xlu0 %v533, 126
  %v551 = vpop.permute.xlu0 %550
  %v552 = vsel %vm151, %v541, %v543
  %v553 = vsel %vm151, %v543, %v545
  %v554 = vsel %vm151, %v545, %v547
  %v555 = vsel %vm151, %v547, %v549
  %v556 = vsel %vm151, %v549, %v551
  %v563 = vadd.f32 %v518, %v552
  %v564 = vadd.f32 %v519, %v553
  %v565 = vadd.f32 %v520, %v554
  %v566 = vadd.f32 %v521, %v555
  %v567 = vadd.f32 %v522, %v556
  %v568 = vadd.f32 %v523, %v551
  %569 = vset.pattern.permute.xlu0 12
  %570 = vperm.xlu0 %569, %v43
  %v571 = vpop.permute.xlu0 %570
  %v573 = vmul.f32 %v571, %v461
  %v574 = vmul.f32 %v571, %v462
  %v575 = vmul.f32 %v571, %v463
  %v576 = vmul.f32 %v571, %v464
  %v577 = vmul.f32 %v571, %v465
  %v578 = vmul.f32 %v571, %v466
  %585 = vrot.lane.b32.xlu0 %v573, 110
  %v586 = vpop.permute.xlu0 %585
  %587 = vrot.lane.b32.xlu0 %v574, 110
  %v588 = vpop.permute.xlu0 %587
  %589 = vrot.lane.b32.xlu0 %v575, 110
  %v590 = vpop.permute.xlu0 %589
  %591 = vrot.lane.b32.xlu0 %v576, 110
  %v592 = vpop.permute.xlu0 %591
  %593 = vrot.lane.b32.xlu0 %v577, 110
  %v594 = vpop.permute.xlu0 %593
  %595 = vrot.lane.b32.xlu0 %v578, 110
  %v596 = vpop.permute.xlu0 %595
  %v597 = vsel %vm197, %v586, %v588
  %v598 = vsel %vm197, %v588, %v590
  %v599 = vsel %vm197, %v590, %v592
  %v600 = vsel %vm197, %v592, %v594
  %v601 = vsel %vm197, %v594, %v596
  %v608 = vadd.f32 %v563, %v597
  %v609 = vadd.f32 %v564, %v598
  %v610 = vadd.f32 %v565, %v599
  %v611 = vadd.f32 %v566, %v600
  %v612 = vadd.f32 %v567, %v601
  %v613 = vadd.f32 %v568, %v596
  %614 = vset.pattern.permute.xlu0 13
  %615 = vperm.xlu0 %614, %v43
  %v616 = vpop.permute.xlu0 %615
  %v618 = vmul.f32 %v616, %v461
  %v619 = vmul.f32 %v616, %v462
  %v620 = vmul.f32 %v616, %v463
  %v621 = vmul.f32 %v616, %v464
  %v622 = vmul.f32 %v616, %v465
  %v623 = vmul.f32 %v616, %v466
  %630 = vrot.lane.b32.xlu0 %v618, 109
  %v631 = vpop.permute.xlu0 %630
  %632 = vrot.lane.b32.xlu0 %v619, 109
  %v633 = vpop.permute.xlu0 %632
  %634 = vrot.lane.b32.xlu0 %v620, 109
  %v635 = vpop.permute.xlu0 %634
  %636 = vrot.lane.b32.xlu0 %v621, 109
  %v637 = vpop.permute.xlu0 %636
  %638 = vrot.lane.b32.xlu0 %v622, 109
  %v639 = vpop.permute.xlu0 %638
  %640 = vrot.lane.b32.xlu0 %v623, 109
  %v641 = vpop.permute.xlu0 %640
  %v642 = vsel %vm243, %v631, %v633
  %v643 = vsel %vm243, %v633, %v635
  %v644 = vsel %vm243, %v635, %v637
  %v645 = vsel %vm243, %v637, %v639
  %v646 = vsel %vm243, %v639, %v641
  %v653 = vadd.f32 %v608, %v642
  %v654 = vadd.f32 %v609, %v643
  %v655 = vadd.f32 %v610, %v644
  %v656 = vadd.f32 %v611, %v645
  %v657 = vadd.f32 %v612, %v646
  %v658 = vadd.f32 %v613, %v641
  %659 = vset.pattern.permute.xlu0 14
  %660 = vperm.xlu0 %659, %v43
  %v661 = vpop.permute.xlu0 %660
  %v663 = vmul.f32 %v661, %v461
  %v664 = vmul.f32 %v661, %v462
  %v665 = vmul.f32 %v661, %v463
  %v666 = vmul.f32 %v661, %v464
  %v667 = vmul.f32 %v661, %v465
  %v668 = vmul.f32 %v661, %v466
  %675 = vrot.lane.b32.xlu0 %v663, 108
  %v676 = vpop.permute.xlu0 %675
  %677 = vrot.lane.b32.xlu0 %v664, 108
  %v678 = vpop.permute.xlu0 %677
  %679 = vrot.lane.b32.xlu0 %v665, 108
  %v680 = vpop.permute.xlu0 %679
  %681 = vrot.lane.b32.xlu0 %v666, 108
  %v682 = vpop.permute.xlu0 %681
  %683 = vrot.lane.b32.xlu0 %v667, 108
  %v684 = vpop.permute.xlu0 %683
  %685 = vrot.lane.b32.xlu0 %v668, 108
  %v686 = vpop.permute.xlu0 %685
  %v687 = vsel %vm289, %v676, %v678
  %v688 = vsel %vm289, %v678, %v680
  %v689 = vsel %vm289, %v680, %v682
  %v690 = vsel %vm289, %v682, %v684
  %v691 = vsel %vm289, %v684, %v686
  %v698 = vadd.f32 %v653, %v687
  %v699 = vadd.f32 %v654, %v688
  %v700 = vadd.f32 %v655, %v689
  %v701 = vadd.f32 %v656, %v690
  %v702 = vadd.f32 %v657, %v691
  %v703 = vadd.f32 %v658, %v686
  %704 = vset.pattern.permute.xlu0 15
  %705 = vperm.xlu0 %704, %v43
  %v706 = vpop.permute.xlu0 %705
  %v708 = vmul.f32 %v706, %v461
  %v709 = vmul.f32 %v706, %v462
  %v710 = vmul.f32 %v706, %v463
  %v711 = vmul.f32 %v706, %v464
  %v712 = vmul.f32 %v706, %v465
  %v713 = vmul.f32 %v706, %v466
  %720 = vrot.lane.b32.xlu0 %v708, 92
  %v721 = vpop.permute.xlu0 %720
  %722 = vrot.lane.b32.xlu0 %v709, 92
  %v723 = vpop.permute.xlu0 %722
  %724 = vrot.lane.b32.xlu0 %v710, 92
  %v725 = vpop.permute.xlu0 %724
  %726 = vrot.lane.b32.xlu0 %v711, 92
  %v727 = vpop.permute.xlu0 %726
  %728 = vrot.lane.b32.xlu0 %v712, 92
  %v729 = vpop.permute.xlu0 %728
  %730 = vrot.lane.b32.xlu0 %v713, 92
  %v731 = vpop.permute.xlu0 %730
  %v732 = vsel %vm335, %v721, %v723
  %v733 = vsel %vm335, %v723, %v725
  %v734 = vsel %vm335, %v725, %v727
  %v735 = vsel %vm335, %v727, %v729
  %v736 = vsel %vm335, %v729, %v731
  %v743 = vadd.f32 %v698, %v732
  %v744 = vadd.f32 %v699, %v733
  %v745 = vadd.f32 %v700, %v734
  %v746 = vadd.f32 %v701, %v735
  %v747 = vadd.f32 %v702, %v736
  %v748 = vadd.f32 %v703, %v731
  %749 = vset.pattern.permute.xlu0 16
  %750 = vperm.xlu0 %749, %v43
  %v751 = vpop.permute.xlu0 %750
  %v753 = vmul.f32 %v751, %v461
  %v754 = vmul.f32 %v751, %v462
  %v755 = vmul.f32 %v751, %v463
  %v756 = vmul.f32 %v751, %v464
  %v757 = vmul.f32 %v751, %v465
  %v758 = vmul.f32 %v751, %v466
  %765 = vrot.lane.b32.xlu0 %v753, 91
  %v766 = vpop.permute.xlu0 %765
  %767 = vrot.lane.b32.xlu0 %v754, 91
  %v768 = vpop.permute.xlu0 %767
  %769 = vrot.lane.b32.xlu0 %v755, 91
  %v770 = vpop.permute.xlu0 %769
  %771 = vrot.lane.b32.xlu0 %v756, 91
  %v772 = vpop.permute.xlu0 %771
  %773 = vrot.lane.b32.xlu0 %v757, 91
  %v774 = vpop.permute.xlu0 %773
  %775 = vrot.lane.b32.xlu0 %v758, 91
  %v776 = vpop.permute.xlu0 %775
  %v777 = vsel %vm381, %v766, %v768
  %v778 = vsel %vm381, %v768, %v770
  %v779 = vsel %vm381, %v770, %v772
  %v780 = vsel %vm381, %v772, %v774
  %v781 = vsel %vm381, %v774, %v776
  %v788 = vadd.f32 %v743, %v777
  %v789 = vadd.f32 %v744, %v778
  %v790 = vadd.f32 %v745, %v779
  %v791 = vadd.f32 %v746, %v780
  %v792 = vadd.f32 %v747, %v781
  %v793 = vadd.f32 %v748, %v776
  %794 = vset.pattern.permute.xlu0 17
  %795 = vperm.xlu0 %794, %v43
  %v796 = vpop.permute.xlu0 %795
  %v798 = vmul.f32 %v796, %v461
  %v799 = vmul.f32 %v796, %v462
  %v800 = vmul.f32 %v796, %v463
  %v801 = vmul.f32 %v796, %v464
  %v802 = vmul.f32 %v796, %v465
  %v803 = vmul.f32 %v796, %v466
  %810 = vrot.lane.b32.xlu0 %v798, 90
  %v811 = vpop.permute.xlu0 %810
  %812 = vrot.lane.b32.xlu0 %v799, 90
  %v813 = vpop.permute.xlu0 %812
  %814 = vrot.lane.b32.xlu0 %v800, 90
  %v815 = vpop.permute.xlu0 %814
  %816 = vrot.lane.b32.xlu0 %v801, 90
  %v817 = vpop.permute.xlu0 %816
  %818 = vrot.lane.b32.xlu0 %v802, 90
  %v819 = vpop.permute.xlu0 %818
  %820 = vrot.lane.b32.xlu0 %v803, 90
  %v821 = vpop.permute.xlu0 %820
  %v822 = vsel %vm427, %v811, %v813
  %v823 = vsel %vm427, %v813, %v815
  %v824 = vsel %vm427, %v815, %v817
  %v825 = vsel %vm427, %v817, %v819
  %v826 = vsel %vm427, %v819, %v821
  %v833 = vadd.f32 %v788, %v822
  %v834 = vadd.f32 %v789, %v823
  %v835 = vadd.f32 %v790, %v824
  %v836 = vadd.f32 %v791, %v825
  %v837 = vadd.f32 %v792, %v826
  %v838 = vadd.f32 %v793, %v821
  %839 = vset.pattern.permute.xlu0 18
  %840 = vperm.xlu0 %839, %v43
  %v841 = vpop.permute.xlu0 %840
  %v843 = vperm.slane %v40, 2
  %v844 = vperm.slane %v40, 6
  %v845 = vperm.slane %v41, 2
  %v846 = vperm.slane %v41, 6
  %v847 = vperm.slane %v42, 2
  %v848 = vperm.slane %v42, 6
  %v855 = vperm.slane %v843, 2
  %v856 = vperm.slane %v844, 2
  %v857 = vperm.slane %v845, 2
  %v858 = vperm.slane %v846, 2
  %v859 = vperm.slane %v847, 2
  %v860 = vperm.slane %v848, 2
  %v861 = vmul.f32 %v841, %v855
  %v862 = vmul.f32 %v841, %v856
  %v863 = vmul.f32 %v841, %v857
  %v864 = vmul.f32 %v841, %v858
  %v865 = vmul.f32 %v841, %v859
  %v866 = vmul.f32 %v841, %v860
  %v867 = vadd.f32 %v833, %v861
  %v868 = vadd.f32 %v834, %v862
  %v869 = vadd.f32 %v835, %v863
  %v870 = vadd.f32 %v836, %v864
  %v871 = vadd.f32 %v837, %v865
  %v872 = vadd.f32 %v838, %v866
  %873 = vset.pattern.permute.xlu0 19
  %874 = vperm.xlu0 %873, %v43
  %v875 = vpop.permute.xlu0 %874
  %v877 = vmul.f32 %v875, %v855
  %v878 = vmul.f32 %v875, %v856
  %v879 = vmul.f32 %v875, %v857
  %v880 = vmul.f32 %v875, %v858
  %v881 = vmul.f32 %v875, %v859
  %v882 = vmul.f32 %v875, %v860
  %889 = vrot.lane.b32.xlu0 %v877, 127
  %v890 = vpop.permute.xlu0 %889
  %891 = vrot.lane.b32.xlu0 %v878, 127
  %v892 = vpop.permute.xlu0 %891
  %893 = vrot.lane.b32.xlu0 %v879, 127
  %v894 = vpop.permute.xlu0 %893
  %895 = vrot.lane.b32.xlu0 %v880, 127
  %v896 = vpop.permute.xlu0 %895
  %897 = vrot.lane.b32.xlu0 %v881, 127
  %v898 = vpop.permute.xlu0 %897
  %899 = vrot.lane.b32.xlu0 %v882, 127
  %v900 = vpop.permute.xlu0 %899
  %v901 = vsel %vm105, %v890, %v892
  %v902 = vsel %vm105, %v892, %v894
  %v903 = vsel %vm105, %v894, %v896
  %v904 = vsel %vm105, %v896, %v898
  %v905 = vsel %vm105, %v898, %v900
  %v912 = vadd.f32 %v867, %v901
  %v913 = vadd.f32 %v868, %v902
  %v914 = vadd.f32 %v869, %v903
  %v915 = vadd.f32 %v870, %v904
  %v916 = vadd.f32 %v871, %v905
  %v917 = vadd.f32 %v872, %v900
  %918 = vset.pattern.permute.xlu0 20
  %919 = vperm.xlu0 %918, %v43
  %v920 = vpop.permute.xlu0 %919
  %v922 = vmul.f32 %v920, %v855
  %v923 = vmul.f32 %v920, %v856
  %v924 = vmul.f32 %v920, %v857
  %v925 = vmul.f32 %v920, %v858
  %v926 = vmul.f32 %v920, %v859
  %v927 = vmul.f32 %v920, %v860
  %934 = vrot.lane.b32.xlu0 %v922, 126
  %v935 = vpop.permute.xlu0 %934
  %936 = vrot.lane.b32.xlu0 %v923, 126
  %v937 = vpop.permute.xlu0 %936
  %938 = vrot.lane.b32.xlu0 %v924, 126
  %v939 = vpop.permute.xlu0 %938
  %940 = vrot.lane.b32.xlu0 %v925, 126
  %v941 = vpop.permute.xlu0 %940
  %942 = vrot.lane.b32.xlu0 %v926, 126
  %v943 = vpop.permute.xlu0 %942
  %944 = vrot.lane.b32.xlu0 %v927, 126
  %v945 = vpop.permute.xlu0 %944
  %v946 = vsel %vm151, %v935, %v937
  %v947 = vsel %vm151, %v937, %v939
  %v948 = vsel %vm151, %v939, %v941
  %v949 = vsel %vm151, %v941, %v943
  %v950 = vsel %vm151, %v943, %v945
  %v957 = vadd.f32 %v912, %v946
  %v958 = vadd.f32 %v913, %v947
  %v959 = vadd.f32 %v914, %v948
  %v960 = vadd.f32 %v915, %v949
  %v961 = vadd.f32 %v916, %v950
  %v962 = vadd.f32 %v917, %v945
  %963 = vset.pattern.permute.xlu0 21
  %964 = vperm.xlu0 %963, %v43
  %v965 = vpop.permute.xlu0 %964
  %v967 = vmul.f32 %v965, %v855
  %v968 = vmul.f32 %v965, %v856
  %v969 = vmul.f32 %v965, %v857
  %v970 = vmul.f32 %v965, %v858
  %v971 = vmul.f32 %v965, %v859
  %v972 = vmul.f32 %v965, %v860
  %979 = vrot.lane.b32.xlu0 %v967, 110
  %v980 = vpop.permute.xlu0 %979
  %981 = vrot.lane.b32.xlu0 %v968, 110
  %v982 = vpop.permute.xlu0 %981
  %983 = vrot.lane.b32.xlu0 %v969, 110
  %v984 = vpop.permute.xlu0 %983
  %985 = vrot.lane.b32.xlu0 %v970, 110
  %v986 = vpop.permute.xlu0 %985
  %987 = vrot.lane.b32.xlu0 %v971, 110
  %v988 = vpop.permute.xlu0 %987
  %989 = vrot.lane.b32.xlu0 %v972, 110
  %v990 = vpop.permute.xlu0 %989
  %v991 = vsel %vm197, %v980, %v982
  %v992 = vsel %vm197, %v982, %v984
  %v993 = vsel %vm197, %v984, %v986
  %v994 = vsel %vm197, %v986, %v988
  %v995 = vsel %vm197, %v988, %v990
  %v1002 = vadd.f32 %v957, %v991
  %v1003 = vadd.f32 %v958, %v992
  %v1004 = vadd.f32 %v959, %v993
  %v1005 = vadd.f32 %v960, %v994
  %v1006 = vadd.f32 %v961, %v995
  %v1007 = vadd.f32 %v962, %v990
  %1008 = vset.pattern.permute.xlu0 22
  %1009 = vperm.xlu0 %1008, %v43
  %v1010 = vpop.permute.xlu0 %1009
  %v1012 = vmul.f32 %v1010, %v855
  %v1013 = vmul.f32 %v1010, %v856
  %v1014 = vmul.f32 %v1010, %v857
  %v1015 = vmul.f32 %v1010, %v858
  %v1016 = vmul.f32 %v1010, %v859
  %v1017 = vmul.f32 %v1010, %v860
  %1024 = vrot.lane.b32.xlu0 %v1012, 109
  %v1025 = vpop.permute.xlu0 %1024
  %1026 = vrot.lane.b32.xlu0 %v1013, 109
  %v1027 = vpop.permute.xlu0 %1026
  %1028 = vrot.lane.b32.xlu0 %v1014, 109
  %v1029 = vpop.permute.xlu0 %1028
  %1030 = vrot.lane.b32.xlu0 %v1015, 109
  %v1031 = vpop.permute.xlu0 %1030
  %1032 = vrot.lane.b32.xlu0 %v1016, 109
  %v1033 = vpop.permute.xlu0 %1032
  %1034 = vrot.lane.b32.xlu0 %v1017, 109
  %v1035 = vpop.permute.xlu0 %1034
  %v1036 = vsel %vm243, %v1025, %v1027
  %v1037 = vsel %vm243, %v1027, %v1029
  %v1038 = vsel %vm243, %v1029, %v1031
  %v1039 = vsel %vm243, %v1031, %v1033
  %v1040 = vsel %vm243, %v1033, %v1035
  %v1047 = vadd.f32 %v1002, %v1036
  %v1048 = vadd.f32 %v1003, %v1037
  %v1049 = vadd.f32 %v1004, %v1038
  %v1050 = vadd.f32 %v1005, %v1039
  %v1051 = vadd.f32 %v1006, %v1040
  %v1052 = vadd.f32 %v1007, %v1035
  %1053 = vset.pattern.permute.xlu0 23
  %1054 = vperm.xlu0 %1053, %v43
  %v1055 = vpop.permute.xlu0 %1054
  %v1057 = vmul.f32 %v1055, %v855
  %v1058 = vmul.f32 %v1055, %v856
  %v1059 = vmul.f32 %v1055, %v857
  %v1060 = vmul.f32 %v1055, %v858
  %v1061 = vmul.f32 %v1055, %v859
  %v1062 = vmul.f32 %v1055, %v860
  %1069 = vrot.lane.b32.xlu0 %v1057, 108
  %v1070 = vpop.permute.xlu0 %1069
  %1071 = vrot.lane.b32.xlu0 %v1058, 108
  %v1072 = vpop.permute.xlu0 %1071
  %1073 = vrot.lane.b32.xlu0 %v1059, 108
  %v1074 = vpop.permute.xlu0 %1073
  %1075 = vrot.lane.b32.xlu0 %v1060, 108
  %v1076 = vpop.permute.xlu0 %1075
  %1077 = vrot.lane.b32.xlu0 %v1061, 108
  %v1078 = vpop.permute.xlu0 %1077
  %1079 = vrot.lane.b32.xlu0 %v1062, 108
  %v1080 = vpop.permute.xlu0 %1079
  %v1081 = vsel %vm289, %v1070, %v1072
  %v1082 = vsel %vm289, %v1072, %v1074
  %v1083 = vsel %vm289, %v1074, %v1076
  %v1084 = vsel %vm289, %v1076, %v1078
  %v1085 = vsel %vm289, %v1078, %v1080
  %v1092 = vadd.f32 %v1047, %v1081
  %v1093 = vadd.f32 %v1048, %v1082
  %v1094 = vadd.f32 %v1049, %v1083
  %v1095 = vadd.f32 %v1050, %v1084
  %v1096 = vadd.f32 %v1051, %v1085
  %v1097 = vadd.f32 %v1052, %v1080
  %1098 = vset.pattern.permute.xlu0 24
  %1099 = vperm.xlu0 %1098, %v43
  %v1100 = vpop.permute.xlu0 %1099
  %v1102 = vmul.f32 %v1100, %v855
  %v1103 = vmul.f32 %v1100, %v856
  %v1104 = vmul.f32 %v1100, %v857
  %v1105 = vmul.f32 %v1100, %v858
  %v1106 = vmul.f32 %v1100, %v859
  %v1107 = vmul.f32 %v1100, %v860
  %1114 = vrot.lane.b32.xlu0 %v1102, 92
  %v1115 = vpop.permute.xlu0 %1114
  %1116 = vrot.lane.b32.xlu0 %v1103, 92
  %v1117 = vpop.permute.xlu0 %1116
  %1118 = vrot.lane.b32.xlu0 %v1104, 92
  %v1119 = vpop.permute.xlu0 %1118
  %1120 = vrot.lane.b32.xlu0 %v1105, 92
  %v1121 = vpop.permute.xlu0 %1120
  %1122 = vrot.lane.b32.xlu0 %v1106, 92
  %v1123 = vpop.permute.xlu0 %1122
  %1124 = vrot.lane.b32.xlu0 %v1107, 92
  %v1125 = vpop.permute.xlu0 %1124
  %v1126 = vsel %vm335, %v1115, %v1117
  %v1127 = vsel %vm335, %v1117, %v1119
  %v1128 = vsel %vm335, %v1119, %v1121
  %v1129 = vsel %vm335, %v1121, %v1123
  %v1130 = vsel %vm335, %v1123, %v1125
  %v1137 = vadd.f32 %v1092, %v1126
  %v1138 = vadd.f32 %v1093, %v1127
  %v1139 = vadd.f32 %v1094, %v1128
  %v1140 = vadd.f32 %v1095, %v1129
  %v1141 = vadd.f32 %v1096, %v1130
  %v1142 = vadd.f32 %v1097, %v1125
  %1143 = vset.pattern.permute.xlu0 25
  %1144 = vperm.xlu0 %1143, %v43
  %v1145 = vpop.permute.xlu0 %1144
  %v1147 = vmul.f32 %v1145, %v855
  %v1148 = vmul.f32 %v1145, %v856
  %v1149 = vmul.f32 %v1145, %v857
  %v1150 = vmul.f32 %v1145, %v858
  %v1151 = vmul.f32 %v1145, %v859
  %v1152 = vmul.f32 %v1145, %v860
  %1159 = vrot.lane.b32.xlu0 %v1147, 91
  %v1160 = vpop.permute.xlu0 %1159
  %1161 = vrot.lane.b32.xlu0 %v1148, 91
  %v1162 = vpop.permute.xlu0 %1161
  %1163 = vrot.lane.b32.xlu0 %v1149, 91
  %v1164 = vpop.permute.xlu0 %1163
  %1165 = vrot.lane.b32.xlu0 %v1150, 91
  %v1166 = vpop.permute.xlu0 %1165
  %1167 = vrot.lane.b32.xlu0 %v1151, 91
  %v1168 = vpop.permute.xlu0 %1167
  %1169 = vrot.lane.b32.xlu0 %v1152, 91
  %v1170 = vpop.permute.xlu0 %1169
  %v1171 = vsel %vm381, %v1160, %v1162
  %v1172 = vsel %vm381, %v1162, %v1164
  %v1173 = vsel %vm381, %v1164, %v1166
  %v1174 = vsel %vm381, %v1166, %v1168
  %v1175 = vsel %vm381, %v1168, %v1170
  %v1182 = vadd.f32 %v1137, %v1171
  %v1183 = vadd.f32 %v1138, %v1172
  %v1184 = vadd.f32 %v1139, %v1173
  %v1185 = vadd.f32 %v1140, %v1174
  %v1186 = vadd.f32 %v1141, %v1175
  %v1187 = vadd.f32 %v1142, %v1170
  %1188 = vset.pattern.permute.xlu0 26
  %1189 = vperm.xlu0 %1188, %v43
  %v1190 = vpop.permute.xlu0 %1189
  %v1192 = vmul.f32 %v1190, %v855
  %v1193 = vmul.f32 %v1190, %v856
  %v1194 = vmul.f32 %v1190, %v857
  %v1195 = vmul.f32 %v1190, %v858
  %v1196 = vmul.f32 %v1190, %v859
  %v1197 = vmul.f32 %v1190, %v860
  %1204 = vrot.lane.b32.xlu0 %v1192, 90
  %v1205 = vpop.permute.xlu0 %1204
  %1206 = vrot.lane.b32.xlu0 %v1193, 90
  %v1207 = vpop.permute.xlu0 %1206
  %1208 = vrot.lane.b32.xlu0 %v1194, 90
  %v1209 = vpop.permute.xlu0 %1208
  %1210 = vrot.lane.b32.xlu0 %v1195, 90
  %v1211 = vpop.permute.xlu0 %1210
  %1212 = vrot.lane.b32.xlu0 %v1196, 90
  %v1213 = vpop.permute.xlu0 %1212
  %1214 = vrot.lane.b32.xlu0 %v1197, 90
  %v1215 = vpop.permute.xlu0 %1214
  %v1216 = vsel %vm427, %v1205, %v1207
  %v1217 = vsel %vm427, %v1207, %v1209
  %v1218 = vsel %vm427, %v1209, %v1211
  %v1219 = vsel %vm427, %v1211, %v1213
  %v1220 = vsel %vm427, %v1213, %v1215
  %v1227 = vadd.f32 %v1182, %v1216
  %v1228 = vadd.f32 %v1183, %v1217
  %v1229 = vadd.f32 %v1184, %v1218
  %v1230 = vadd.f32 %v1185, %v1219
  %v1231 = vadd.f32 %v1186, %v1220
  %v1232 = vadd.f32 %v1187, %v1215
  %v1233 = vld [vmem:[%s2] sm:$0x7]
  %1235 = vset.pattern.permute.xlu0 0
  %1236 = vperm.xlu0 %1235, %v1233
  %v1237 = vpop.permute.xlu0 %1236
  %v1239 = vadd.f32 %v1227, %v1237
  %v1240 = vadd.f32 %v1228, %v1237
  %v1241 = vadd.f32 %v1229, %v1237
  %v1242 = vadd.f32 %v1230, %v1237
  %v1243 = vadd.f32 %v1231, %v1237
  %v1244 = vadd.f32 %v1232, %v1237
  %v1245 = vmax.f32 %v1239, 0.0
  %v1246 = vmax.f32 %v1240, 0.0
  %v1247 = vmax.f32 %v1241, 0.0
  %v1248 = vmax.f32 %v1242, 0.0
  %v1249 = vmax.f32 %v1243, 0.0
  %v1250 = vmax.f32 %v1244, 0.0
  %1257 = vrot.lane.b32.xlu0 %v1245, 127
  %v1258 = vpop.permute.xlu0 %1257
  %1259 = vrot.lane.b32.xlu0 %v1246, 127
  %v1260 = vpop.permute.xlu0 %1259
  %1261 = vrot.lane.b32.xlu0 %v1247, 127
  %v1262 = vpop.permute.xlu0 %1261
  %1263 = vrot.lane.b32.xlu0 %v1248, 127
  %v1264 = vpop.permute.xlu0 %1263
  %1265 = vrot.lane.b32.xlu0 %v1249, 127
  %v1266 = vpop.permute.xlu0 %1265
  %1267 = vrot.lane.b32.xlu0 %v1250, 127
  %v1268 = vpop.permute.xlu0 %1267
  %v1269 = vsel %vm105, %v1258, %v1260
  %v1270 = vsel %vm105, %v1260, %v1262
  %v1271 = vsel %vm105, %v1262, %v1264
  %v1272 = vsel %vm105, %v1264, %v1266
  %v1273 = vsel %vm105, %v1266, %v1268
  %v1280 = vmax.f32 %v1245, %v1269
  %v1281 = vmax.f32 %v1246, %v1270
  %v1282 = vmax.f32 %v1247, %v1271
  %v1283 = vmax.f32 %v1248, %v1272
  %v1284 = vmax.f32 %v1249, %v1273
  %v1285 = vmax.f32 %v1250, %v1268
  %1292 = vrot.lane.b32.xlu0 %v1280, 110
  %v1293 = vpop.permute.xlu0 %1292
  %1294 = vrot.lane.b32.xlu0 %v1281, 110
  %v1295 = vpop.permute.xlu0 %1294
  %1296 = vrot.lane.b32.xlu0 %v1282, 110
  %v1297 = vpop.permute.xlu0 %1296
  %1298 = vrot.lane.b32.xlu0 %v1283, 110
  %v1299 = vpop.permute.xlu0 %1298
  %1300 = vrot.lane.b32.xlu0 %v1284, 110
  %v1301 = vpop.permute.xlu0 %1300
  %1302 = vrot.lane.b32.xlu0 %v1285, 110
  %v1303 = vpop.permute.xlu0 %1302
  %v1304 = vsel %vm197, %v1293, %v1295
  %v1305 = vsel %vm197, %v1295, %v1297
  %v1306 = vsel %vm197, %v1297, %v1299
  %v1307 = vsel %vm197, %v1299, %v1301
  %v1308 = vsel %vm197, %v1301, %v1303
  %v1315 = vmax.f32 %v1280, %v1304
  %v1316 = vmax.f32 %v1281, %v1305
  %v1317 = vmax.f32 %v1282, %v1306
  %v1318 = vmax.f32 %v1283, %v1307
  %v1319 = vmax.f32 %v1284, %v1308
  %v1320 = vmax.f32 %v1285, %v1303
  %v1321 = vld [vmem:[%s5] sm:$0x3f]
  %v1323 = vperm.slane %v1321, 0
  %v1324 = vperm.slane %v1321, 1
  %v1325 = vperm.slane %v1321, 2
  %v1326 = vperm.slane %v1321, 3
  %v1327 = vperm.slane %v1321, 4
  %v1328 = vperm.slane %v1321, 5
  %v1335 = vmul.f32 %v1315, %v1323
  %v1336 = vmul.f32 %v1316, %v1324
  %v1337 = vmul.f32 %v1317, %v1325
  %v1338 = vmul.f32 %v1318, %v1326
  %v1339 = vmul.f32 %v1319, %v1327
  %v1340 = vmul.f32 %v1320, %v1328
  %1342 = vset.pattern.permute.xlu0 0
  %1343 = vperm.xlu0 %1342, %v44
  %v1344 = vpop.permute.xlu0 %1343
  %v1346 = vperm.slane %v1335, 0
  %v1347 = vperm.slane %v1336, 0
  %v1348 = vperm.slane %v1337, 0
  %v1349 = vperm.slane %v1338, 0
  %v1350 = vperm.slane %v1339, 0
  %v1351 = vmul.f32 %v1344, %v1346
  %v1352 = vmul.f32 %v1344, %v1347
  %v1353 = vmul.f32 %v1344, %v1348
  %v1354 = vmul.f32 %v1344, %v1349
  %v1355 = vmul.f32 %v1344, %v1350
  %1356 = vset.pattern.permute.xlu0 1
  %1357 = vperm.xlu0 %1356, %v44
  %v1358 = vpop.permute.xlu0 %1357
  %v1360 = vmul.f32 %v1358, %v1346
  %v1361 = vmul.f32 %v1358, %v1347
  %v1362 = vmul.f32 %v1358, %v1348
  %v1363 = vmul.f32 %v1358, %v1349
  %v1364 = vmul.f32 %v1358, %v1350
  %1370 = vrot.lane.b32.xlu0 %v1360, 126
  %v1371 = vpop.permute.xlu0 %1370
  %1372 = vrot.lane.b32.xlu0 %v1361, 126
  %v1373 = vpop.permute.xlu0 %1372
  %1374 = vrot.lane.b32.xlu0 %v1362, 126
  %v1375 = vpop.permute.xlu0 %1374
  %1376 = vrot.lane.b32.xlu0 %v1363, 126
  %v1377 = vpop.permute.xlu0 %1376
  %1378 = vrot.lane.b32.xlu0 %v1364, 126
  %v1379 = vpop.permute.xlu0 %1378
  %v1380 = vsel %vm151, %v1371, %v1373
  %v1381 = vsel %vm151, %v1373, %v1375
  %v1382 = vsel %vm151, %v1375, %v1377
  %v1383 = vsel %vm151, %v1377, %v1379
  %v1389 = vadd.f32 %v1351, %v1380
  %v1390 = vadd.f32 %v1352, %v1381
  %v1391 = vadd.f32 %v1353, %v1382
  %v1392 = vadd.f32 %v1354, %v1383
  %v1393 = vadd.f32 %v1355, %v1379
  %1394 = vset.pattern.permute.xlu0 2
  %1395 = vperm.xlu0 %1394, %v44
  %v1396 = vpop.permute.xlu0 %1395
  %v1398 = vmul.f32 %v1396, %v1346
  %v1399 = vmul.f32 %v1396, %v1347
  %v1400 = vmul.f32 %v1396, %v1348
  %v1401 = vmul.f32 %v1396, %v1349
  %v1402 = vmul.f32 %v1396, %v1350
  %1408 = vrot.lane.b32.xlu0 %v1398, 124
  %v1409 = vpop.permute.xlu0 %1408
  %1410 = vrot.lane.b32.xlu0 %v1399, 124
  %v1411 = vpop.permute.xlu0 %1410
  %1412 = vrot.lane.b32.xlu0 %v1400, 124
  %v1413 = vpop.permute.xlu0 %1412
  %1414 = vrot.lane.b32.xlu0 %v1401, 124
  %v1415 = vpop.permute.xlu0 %1414
  %1416 = vrot.lane.b32.xlu0 %v1402, 124
  %v1417 = vpop.permute.xlu0 %1416
  %vm1418 = vcmask 1014784
  %v1419 = vsel %vm1418, %v1409, %v1411
  %v1420 = vsel %vm1418, %v1411, %v1413
  %v1421 = vsel %vm1418, %v1413, %v1415
  %v1422 = vsel %vm1418, %v1415, %v1417
  %v1428 = vadd.f32 %v1389, %v1419
  %v1429 = vadd.f32 %v1390, %v1420
  %v1430 = vadd.f32 %v1391, %v1421
  %v1431 = vadd.f32 %v1392, %v1422
  %v1432 = vadd.f32 %v1393, %v1417
  %1433 = vset.pattern.permute.xlu0 3
  %1434 = vperm.xlu0 %1433, %v44
  %v1435 = vpop.permute.xlu0 %1434
  %v1437 = vmul.f32 %v1435, %v1346
  %v1438 = vmul.f32 %v1435, %v1347
  %v1439 = vmul.f32 %v1435, %v1348
  %v1440 = vmul.f32 %v1435, %v1349
  %v1441 = vmul.f32 %v1435, %v1350
  %1447 = vrot.lane.b32.xlu0 %v1437, 92
  %v1448 = vpop.permute.xlu0 %1447
  %1449 = vrot.lane.b32.xlu0 %v1438, 92
  %v1450 = vpop.permute.xlu0 %1449
  %1451 = vrot.lane.b32.xlu0 %v1439, 92
  %v1452 = vpop.permute.xlu0 %1451
  %1453 = vrot.lane.b32.xlu0 %v1440, 92
  %v1454 = vpop.permute.xlu0 %1453
  %1455 = vrot.lane.b32.xlu0 %v1441, 92
  %v1456 = vpop.permute.xlu0 %1455
  %v1457 = vsel %vm335, %v1448, %v1450
  %v1458 = vsel %vm335, %v1450, %v1452
  %v1459 = vsel %vm335, %v1452, %v1454
  %v1460 = vsel %vm335, %v1454, %v1456
  %v1466 = vadd.f32 %v1428, %v1457
  %v1467 = vadd.f32 %v1429, %v1458
  %v1468 = vadd.f32 %v1430, %v1459
  %v1469 = vadd.f32 %v1431, %v1460
  %v1470 = vadd.f32 %v1432, %v1456
  %1471 = vset.pattern.permute.xlu0 4
  %1472 = vperm.xlu0 %1471, %v44
  %v1473 = vpop.permute.xlu0 %1472
  %v1475 = vmul.f32 %v1473, %v1346
  %v1476 = vmul.f32 %v1473, %v1347
  %v1477 = vmul.f32 %v1473, %v1348
  %v1478 = vmul.f32 %v1473, %v1349
  %v1479 = vmul.f32 %v1473, %v1350
  %1485 = vrot.lane.b32.xlu0 %v1475, 90
  %v1486 = vpop.permute.xlu0 %1485
  %1487 = vrot.lane.b32.xlu0 %v1476, 90
  %v1488 = vpop.permute.xlu0 %1487
  %1489 = vrot.lane.b32.xlu0 %v1477, 90
  %v1490 = vpop.permute.xlu0 %1489
  %1491 = vrot.lane.b32.xlu0 %v1478, 90
  %v1492 = vpop.permute.xlu0 %1491
  %1493 = vrot.lane.b32.xlu0 %v1479, 90
  %v1494 = vpop.permute.xlu0 %1493
  %v1495 = vsel %vm427, %v1486, %v1488
  %v1496 = vsel %vm427, %v1488, %v1490
  %v1497 = vsel %vm427, %v1490, %v1492
  %v1498 = vsel %vm427, %v1492, %v1494
  %v1504 = vadd.f32 %v1466, %v1495
  %v1505 = vadd.f32 %v1467, %v1496
  %v1506 = vadd.f32 %v1468, %v1497
  %v1507 = vadd.f32 %v1469, %v1498
  %v1508 = vadd.f32 %v1470, %v1494
  %1509 = vset.pattern.permute.xlu0 5
  %1510 = vperm.xlu0 %1509, %v44
  %v1511 = vpop.permute.xlu0 %1510
  %v1513 = vmul.f32 %v1511, %v1346
  %v1514 = vmul.f32 %v1511, %v1347
  %v1515 = vmul.f32 %v1511, %v1348
  %v1516 = vmul.f32 %v1511, %v1349
  %v1517 = vmul.f32 %v1511, %v1350
  %1523 = vrot.lane.b32.xlu0 %v1513, 88
  %v1524 = vpop.permute.xlu0 %1523
  %1525 = vrot.lane.b32.xlu0 %v1514, 88
  %v1526 = vpop.permute.xlu0 %1525
  %1527 = vrot.lane.b32.xlu0 %v1515, 88
  %v1528 = vpop.permute.xlu0 %1527
  %1529 = vrot.lane.b32.xlu0 %v1516, 88
  %v1530 = vpop.permute.xlu0 %1529
  %1531 = vrot.lane.b32.xlu0 %v1517, 88
  %v1532 = vpop.permute.xlu0 %1531
  %vm1533 = vcmask 719872
  %v1534 = vsel %vm1533, %v1524, %v1526
  %v1535 = vsel %vm1533, %v1526, %v1528
  %v1536 = vsel %vm1533, %v1528, %v1530
  %v1537 = vsel %vm1533, %v1530, %v1532
  %v1543 = vadd.f32 %v1504, %v1534
  %v1544 = vadd.f32 %v1505, %v1535
  %v1545 = vadd.f32 %v1506, %v1536
  %v1546 = vadd.f32 %v1507, %v1537
  %v1547 = vadd.f32 %v1508, %v1532
  %1548 = vset.pattern.permute.xlu0 6
  %1549 = vperm.xlu0 %1548, %v44
  %v1550 = vpop.permute.xlu0 %1549
  %v1552 = vperm.slane %v1340, 0
  %v1553 = vmul.f32 %v1550, %v1346
  %v1554 = vmul.f32 %v1550, %v1347
  %v1555 = vmul.f32 %v1550, %v1348
  %v1556 = vmul.f32 %v1550, %v1349
  %v1557 = vmul.f32 %v1550, %v1350
  %v1558 = vmul.f32 %v1550, %v1552
  %1565 = vrot.lane.b32.xlu0 %v1553, 56
  %v1566 = vpop.permute.xlu0 %1565
  %1567 = vrot.lane.b32.xlu0 %v1554, 56
  %v1568 = vpop.permute.xlu0 %1567
  %1569 = vrot.lane.b32.xlu0 %v1555, 56
  %v1570 = vpop.permute.xlu0 %1569
  %1571 = vrot.lane.b32.xlu0 %v1556, 56
  %v1572 = vpop.permute.xlu0 %1571
  %1573 = vrot.lane.b32.xlu0 %v1557, 56
  %v1574 = vpop.permute.xlu0 %1573
  %1575 = vrot.lane.b32.xlu0 %v1558, 56
  %v1576 = vpop.permute.xlu0 %1575
  %vm1577 = vcmask 457728
  %v1578 = vsel %vm1577, %v1566, %v1568
  %v1579 = vsel %vm1577, %v1568, %v1570
  %v1580 = vsel %vm1577, %v1570, %v1572
  %v1581 = vsel %vm1577, %v1572, %v1574
  %v1582 = vsel %vm1577, %v1574, %v1576
  %v1588 = vadd.f32 %v1543, %v1578
  %v1589 = vadd.f32 %v1544, %v1579
  %v1590 = vadd.f32 %v1545, %v1580
  %v1591 = vadd.f32 %v1546, %v1581
  %v1592 = vadd.f32 %v1547, %v1582
  %1593 = vset.pattern.permute.xlu0 7
  %1594 = vperm.xlu0 %1593, %v44
  %v1595 = vpop.permute.xlu0 %1594
  %v1597 = vmul.f32 %v1595, %v1346
  %v1598 = vmul.f32 %v1595, %v1347
  %v1599 = vmul.f32 %v1595, %v1348
  %v1600 = vmul.f32 %v1595, %v1349
  %v1601 = vmul.f32 %v1595, %v1350
  %v1602 = vmul.f32 %v1595, %v1552
  %1609 = vrot.lane.b32.xlu0 %v1597, 54
  %v1610 = vpop.permute.xlu0 %1609
  %1611 = vrot.lane.b32.xlu0 %v1598, 54
  %v1612 = vpop.permute.xlu0 %1611
  %1613 = vrot.lane.b32.xlu0 %v1599, 54
  %v1614 = vpop.permute.xlu0 %1613
  %1615 = vrot.lane.b32.xlu0 %v1600, 54
  %v1616 = vpop.permute.xlu0 %1615
  %1617 = vrot.lane.b32.xlu0 %v1601, 54
  %v1618 = vpop.permute.xlu0 %1617
  %1619 = vrot.lane.b32.xlu0 %v1602, 54
  %v1620 = vpop.permute.xlu0 %1619
  %vm1621 = vcmask 441344
  %v1622 = vsel %vm1621, %v1610, %v1612
  %v1623 = vsel %vm1621, %v1612, %v1614
  %v1624 = vsel %vm1621, %v1614, %v1616
  %v1625 = vsel %vm1621, %v1616, %v1618
  %v1626 = vsel %vm1621, %v1618, %v1620
  %v1632 = vadd.f32 %v1588, %v1622
  %v1633 = vadd.f32 %v1589, %v1623
  %v1634 = vadd.f32 %v1590, %v1624
  %v1635 = vadd.f32 %v1591, %v1625
  %v1636 = vadd.f32 %v1592, %v1626
  %1637 = vset.pattern.permute.xlu0 8
  %1638 = vperm.xlu0 %1637, %v44
  %v1639 = vpop.permute.xlu0 %1638
  %v1641 = vmul.f32 %v1639, %v1346
  %v1642 = vmul.f32 %v1639, %v1347
  %v1643 = vmul.f32 %v1639, %v1348
  %v1644 = vmul.f32 %v1639, %v1349
  %v1645 = vmul.f32 %v1639, %v1350
  %v1646 = vmul.f32 %v1639, %v1552
  %1653 = vrot.lane.b32.xlu0 %v1641, 52
  %v1654 = vpop.permute.xlu0 %1653
  %1655 = vrot.lane.b32.xlu0 %v1642, 52
  %v1656 = vpop.permute.xlu0 %1655
  %1657 = vrot.lane.b32.xlu0 %v1643, 52
  %v1658 = vpop.permute.xlu0 %1657
  %1659 = vrot.lane.b32.xlu0 %v1644, 52
  %v1660 = vpop.permute.xlu0 %1659
  %1661 = vrot.lane.b32.xlu0 %v1645, 52
  %v1662 = vpop.permute.xlu0 %1661
  %1663 = vrot.lane.b32.xlu0 %v1646, 52
  %v1664 = vpop.permute.xlu0 %1663
  %vm1665 = vcmask 424960
  %v1666 = vsel %vm1665, %v1654, %v1656
  %v1667 = vsel %vm1665, %v1656, %v1658
  %v1668 = vsel %vm1665, %v1658, %v1660
  %v1669 = vsel %vm1665, %v1660, %v1662
  %v1670 = vsel %vm1665, %v1662, %v1664
  %v1676 = vadd.f32 %v1632, %v1666
  %v1677 = vadd.f32 %v1633, %v1667
  %v1678 = vadd.f32 %v1634, %v1668
  %v1679 = vadd.f32 %v1635, %v1669
  %v1680 = vadd.f32 %v1636, %v1670
  %1681 = vset.pattern.permute.xlu0 9
  %1682 = vperm.xlu0 %1681, %v44
  %v1683 = vpop.permute.xlu0 %1682
  %v1685 = vperm.slane %v1335, 1
  %v1686 = vperm.slane %v1336, 1
  %v1687 = vperm.slane %v1337, 1
  %v1688 = vperm.slane %v1338, 1
  %v1689 = vperm.slane %v1339, 1
  %v1690 = vmul.f32 %v1683, %v1685
  %v1691 = vmul.f32 %v1683, %v1686
  %v1692 = vmul.f32 %v1683, %v1687
  %v1693 = vmul.f32 %v1683, %v1688
  %v1694 = vmul.f32 %v1683, %v1689
  %v1695 = vadd.f32 %v1676, %v1690
  %v1696 = vadd.f32 %v1677, %v1691
  %v1697 = vadd.f32 %v1678, %v1692
  %v1698 = vadd.f32 %v1679, %v1693
  %v1699 = vadd.f32 %v1680, %v1694
  %1700 = vset.pattern.permute.xlu0 10
  %1701 = vperm.xlu0 %1700, %v44
  %v1702 = vpop.permute.xlu0 %1701
  %v1704 = vmul.f32 %v1702, %v1685
  %v1705 = vmul.f32 %v1702, %v1686
  %v1706 = vmul.f32 %v1702, %v1687
  %v1707 = vmul.f32 %v1702, %v1688
  %v1708 = vmul.f32 %v1702, %v1689
  %1714 = vrot.lane.b32.xlu0 %v1704, 126
  %v1715 = vpop.permute.xlu0 %1714
  %1716 = vrot.lane.b32.xlu0 %v1705, 126
  %v1717 = vpop.permute.xlu0 %1716
  %1718 = vrot.lane.b32.xlu0 %v1706, 126
  %v1719 = vpop.permute.xlu0 %1718
  %1720 = vrot.lane.b32.xlu0 %v1707, 126
  %v1721 = vpop.permute.xlu0 %1720
  %1722 = vrot.lane.b32.xlu0 %v1708, 126
  %v1723 = vpop.permute.xlu0 %1722
  %v1724 = vsel %vm151, %v1715, %v1717
  %v1725 = vsel %vm151, %v1717, %v1719
  %v1726 = vsel %vm151, %v1719, %v1721
  %v1727 = vsel %vm151, %v1721, %v1723
  %v1733 = vadd.f32 %v1695, %v1724
  %v1734 = vadd.f32 %v1696, %v1725
  %v1735 = vadd.f32 %v1697, %v1726
  %v1736 = vadd.f32 %v1698, %v1727
  %v1737 = vadd.f32 %v1699, %v1723
  %1738 = vset.pattern.permute.xlu0 11
  %1739 = vperm.xlu0 %1738, %v44
  %v1740 = vpop.permute.xlu0 %1739
  %v1742 = vmul.f32 %v1740, %v1685
  %v1743 = vmul.f32 %v1740, %v1686
  %v1744 = vmul.f32 %v1740, %v1687
  %v1745 = vmul.f32 %v1740, %v1688
  %v1746 = vmul.f32 %v1740, %v1689
  %1752 = vrot.lane.b32.xlu0 %v1742, 124
  %v1753 = vpop.permute.xlu0 %1752
  %1754 = vrot.lane.b32.xlu0 %v1743, 124
  %v1755 = vpop.permute.xlu0 %1754
  %1756 = vrot.lane.b32.xlu0 %v1744, 124
  %v1757 = vpop.permute.xlu0 %1756
  %1758 = vrot.lane.b32.xlu0 %v1745, 124
  %v1759 = vpop.permute.xlu0 %1758
  %1760 = vrot.lane.b32.xlu0 %v1746, 124
  %v1761 = vpop.permute.xlu0 %1760
  %v1762 = vsel %vm1418, %v1753, %v1755
  %v1763 = vsel %vm1418, %v1755, %v1757
  %v1764 = vsel %vm1418, %v1757, %v1759
  %v1765 = vsel %vm1418, %v1759, %v1761
  %v1771 = vadd.f32 %v1733, %v1762
  %v1772 = vadd.f32 %v1734, %v1763
  %v1773 = vadd.f32 %v1735, %v1764
  %v1774 = vadd.f32 %v1736, %v1765
  %v1775 = vadd.f32 %v1737, %v1761
  %1776 = vset.pattern.permute.xlu0 12
  %1777 = vperm.xlu0 %1776, %v44
  %v1778 = vpop.permute.xlu0 %1777
  %v1780 = vmul.f32 %v1778, %v1685
  %v1781 = vmul.f32 %v1778, %v1686
  %v1782 = vmul.f32 %v1778, %v1687
  %v1783 = vmul.f32 %v1778, %v1688
  %v1784 = vmul.f32 %v1778, %v1689
  %1790 = vrot.lane.b32.xlu0 %v1780, 92
  %v1791 = vpop.permute.xlu0 %1790
  %1792 = vrot.lane.b32.xlu0 %v1781, 92
  %v1793 = vpop.permute.xlu0 %1792
  %1794 = vrot.lane.b32.xlu0 %v1782, 92
  %v1795 = vpop.permute.xlu0 %1794
  %1796 = vrot.lane.b32.xlu0 %v1783, 92
  %v1797 = vpop.permute.xlu0 %1796
  %1798 = vrot.lane.b32.xlu0 %v1784, 92
  %v1799 = vpop.permute.xlu0 %1798
  %v1800 = vsel %vm335, %v1791, %v1793
  %v1801 = vsel %vm335, %v1793, %v1795
  %v1802 = vsel %vm335, %v1795, %v1797
  %v1803 = vsel %vm335, %v1797, %v1799
  %v1809 = vadd.f32 %v1771, %v1800
  %v1810 = vadd.f32 %v1772, %v1801
  %v1811 = vadd.f32 %v1773, %v1802
  %v1812 = vadd.f32 %v1774, %v1803
  %v1813 = vadd.f32 %v1775, %v1799
  %1814 = vset.pattern.permute.xlu0 13
  %1815 = vperm.xlu0 %1814, %v44
  %v1816 = vpop.permute.xlu0 %1815
  %v1818 = vmul.f32 %v1816, %v1685
  %v1819 = vmul.f32 %v1816, %v1686
  %v1820 = vmul.f32 %v1816, %v1687
  %v1821 = vmul.f32 %v1816, %v1688
  %v1822 = vmul.f32 %v1816, %v1689
  %1828 = vrot.lane.b32.xlu0 %v1818, 90
  %v1829 = vpop.permute.xlu0 %1828
  %1830 = vrot.lane.b32.xlu0 %v1819, 90
  %v1831 = vpop.permute.xlu0 %1830
  %1832 = vrot.lane.b32.xlu0 %v1820, 90
  %v1833 = vpop.permute.xlu0 %1832
  %1834 = vrot.lane.b32.xlu0 %v1821, 90
  %v1835 = vpop.permute.xlu0 %1834
  %1836 = vrot.lane.b32.xlu0 %v1822, 90
  %v1837 = vpop.permute.xlu0 %1836
  %v1838 = vsel %vm427, %v1829, %v1831
  %v1839 = vsel %vm427, %v1831, %v1833
  %v1840 = vsel %vm427, %v1833, %v1835
  %v1841 = vsel %vm427, %v1835, %v1837
  %v1847 = vadd.f32 %v1809, %v1838
  %v1848 = vadd.f32 %v1810, %v1839
  %v1849 = vadd.f32 %v1811, %v1840
  %v1850 = vadd.f32 %v1812, %v1841
  %v1851 = vadd.f32 %v1813, %v1837
  %1852 = vset.pattern.permute.xlu0 14
  %1853 = vperm.xlu0 %1852, %v44
  %v1854 = vpop.permute.xlu0 %1853
  %v1856 = vmul.f32 %v1854, %v1685
  %v1857 = vmul.f32 %v1854, %v1686
  %v1858 = vmul.f32 %v1854, %v1687
  %v1859 = vmul.f32 %v1854, %v1688
  %v1860 = vmul.f32 %v1854, %v1689
  %1866 = vrot.lane.b32.xlu0 %v1856, 88
  %v1867 = vpop.permute.xlu0 %1866
  %1868 = vrot.lane.b32.xlu0 %v1857, 88
  %v1869 = vpop.permute.xlu0 %1868
  %1870 = vrot.lane.b32.xlu0 %v1858, 88
  %v1871 = vpop.permute.xlu0 %1870
  %1872 = vrot.lane.b32.xlu0 %v1859, 88
  %v1873 = vpop.permute.xlu0 %1872
  %1874 = vrot.lane.b32.xlu0 %v1860, 88
  %v1875 = vpop.permute.xlu0 %1874
  %v1876 = vsel %vm1533, %v1867, %v1869
  %v1877 = vsel %vm1533, %v1869, %v1871
  %v1878 = vsel %vm1533, %v1871, %v1873
  %v1879 = vsel %vm1533, %v1873, %v1875
  %v1885 = vadd.f32 %v1847, %v1876
  %v1886 = vadd.f32 %v1848, %v1877
  %v1887 = vadd.f32 %v1849, %v1878
  %v1888 = vadd.f32 %v1850, %v1879
  %v1889 = vadd.f32 %v1851, %v1875
  %1890 = vset.pattern.permute.xlu0 15
  %1891 = vperm.xlu0 %1890, %v44
  %v1892 = vpop.permute.xlu0 %1891
  %v1894 = vperm.slane %v1340, 1
  %v1895 = vmul.f32 %v1892, %v1685
  %v1896 = vmul.f32 %v1892, %v1686
  %v1897 = vmul.f32 %v1892, %v1687
  %v1898 = vmul.f32 %v1892, %v1688
  %v1899 = vmul.f32 %v1892, %v1689
  %v1900 = vmul.f32 %v1892, %v1894
  %1907 = vrot.lane.b32.xlu0 %v1895, 56
  %v1908 = vpop.permute.xlu0 %1907
  %1909 = vrot.lane.b32.xlu0 %v1896, 56
  %v1910 = vpop.permute.xlu0 %1909
  %1911 = vrot.lane.b32.xlu0 %v1897, 56
  %v1912 = vpop.permute.xlu0 %1911
  %1913 = vrot.lane.b32.xlu0 %v1898, 56
  %v1914 = vpop.permute.xlu0 %1913
  %1915 = vrot.lane.b32.xlu0 %v1899, 56
  %v1916 = vpop.permute.xlu0 %1915
  %1917 = vrot.lane.b32.xlu0 %v1900, 56
  %v1918 = vpop.permute.xlu0 %1917
  %v1919 = vsel %vm1577, %v1908, %v1910
  %v1920 = vsel %vm1577, %v1910, %v1912
  %v1921 = vsel %vm1577, %v1912, %v1914
  %v1922 = vsel %vm1577, %v1914, %v1916
  %v1923 = vsel %vm1577, %v1916, %v1918
  %v1929 = vadd.f32 %v1885, %v1919
  %v1930 = vadd.f32 %v1886, %v1920
  %v1931 = vadd.f32 %v1887, %v1921
  %v1932 = vadd.f32 %v1888, %v1922
  %v1933 = vadd.f32 %v1889, %v1923
  %1934 = vset.pattern.permute.xlu0 16
  %1935 = vperm.xlu0 %1934, %v44
  %v1936 = vpop.permute.xlu0 %1935
  %v1938 = vmul.f32 %v1936, %v1685
  %v1939 = vmul.f32 %v1936, %v1686
  %v1940 = vmul.f32 %v1936, %v1687
  %v1941 = vmul.f32 %v1936, %v1688
  %v1942 = vmul.f32 %v1936, %v1689
  %v1943 = vmul.f32 %v1936, %v1894
  %1950 = vrot.lane.b32.xlu0 %v1938, 54
  %v1951 = vpop.permute.xlu0 %1950
  %1952 = vrot.lane.b32.xlu0 %v1939, 54
  %v1953 = vpop.permute.xlu0 %1952
  %1954 = vrot.lane.b32.xlu0 %v1940, 54
  %v1955 = vpop.permute.xlu0 %1954
  %1956 = vrot.lane.b32.xlu0 %v1941, 54
  %v1957 = vpop.permute.xlu0 %1956
  %1958 = vrot.lane.b32.xlu0 %v1942, 54
  %v1959 = vpop.permute.xlu0 %1958
  %1960 = vrot.lane.b32.xlu0 %v1943, 54
  %v1961 = vpop.permute.xlu0 %1960
  %v1962 = vsel %vm1621, %v1951, %v1953
  %v1963 = vsel %vm1621, %v1953, %v1955
  %v1964 = vsel %vm1621, %v1955, %v1957
  %v1965 = vsel %vm1621, %v1957, %v1959
  %v1966 = vsel %vm1621, %v1959, %v1961
  %v1972 = vadd.f32 %v1929, %v1962
  %v1973 = vadd.f32 %v1930, %v1963
  %v1974 = vadd.f32 %v1931, %v1964
  %v1975 = vadd.f32 %v1932, %v1965
  %v1976 = vadd.f32 %v1933, %v1966
  %1977 = vset.pattern.permute.xlu0 17
  %1978 = vperm.xlu0 %1977, %v44
  %v1979 = vpop.permute.xlu0 %1978
  %v1981 = vmul.f32 %v1979, %v1685
  %v1982 = vmul.f32 %v1979, %v1686
  %v1983 = vmul.f32 %v1979, %v1687
  %v1984 = vmul.f32 %v1979, %v1688
  %v1985 = vmul.f32 %v1979, %v1689
  %v1986 = vmul.f32 %v1979, %v1894
  %1993 = vrot.lane.b32.xlu0 %v1981, 52
  %v1994 = vpop.permute.xlu0 %1993
  %1995 = vrot.lane.b32.xlu0 %v1982, 52
  %v1996 = vpop.permute.xlu0 %1995
  %1997 = vrot.lane.b32.xlu0 %v1983, 52
  %v1998 = vpop.permute.xlu0 %1997
  %1999 = vrot.lane.b32.xlu0 %v1984, 52
  %v2000 = vpop.permute.xlu0 %1999
  %2001 = vrot.lane.b32.xlu0 %v1985, 52
  %v2002 = vpop.permute.xlu0 %2001
  %2003 = vrot.lane.b32.xlu0 %v1986, 52
  %v2004 = vpop.permute.xlu0 %2003
  %v2005 = vsel %vm1665, %v1994, %v1996
  %v2006 = vsel %vm1665, %v1996, %v1998
  %v2007 = vsel %vm1665, %v1998, %v2000
  %v2008 = vsel %vm1665, %v2000, %v2002
  %v2009 = vsel %vm1665, %v2002, %v2004
  %v2015 = vadd.f32 %v1972, %v2005
  %v2016 = vadd.f32 %v1973, %v2006
  %v2017 = vadd.f32 %v1974, %v2007
  %v2018 = vadd.f32 %v1975, %v2008
  %v2019 = vadd.f32 %v1976, %v2009
  %2020 = vset.pattern.permute.xlu0 18
  %2021 = vperm.xlu0 %2020, %v44
  %v2022 = vpop.permute.xlu0 %2021
  %v2024 = vperm.slane %v1335, 2
  %v2025 = vperm.slane %v1336, 2
  %v2026 = vperm.slane %v1337, 2
  %v2027 = vperm.slane %v1338, 2
  %v2028 = vperm.slane %v1339, 2
  %v2029 = vmul.f32 %v2022, %v2024
  %v2030 = vmul.f32 %v2022, %v2025
  %v2031 = vmul.f32 %v2022, %v2026
  %v2032 = vmul.f32 %v2022, %v2027
  %v2033 = vmul.f32 %v2022, %v2028
  %v2034 = vadd.f32 %v2015, %v2029
  %v2035 = vadd.f32 %v2016, %v2030
  %v2036 = vadd.f32 %v2017, %v2031
  %v2037 = vadd.f32 %v2018, %v2032
  %v2038 = vadd.f32 %v2019, %v2033
  %2039 = vset.pattern.permute.xlu0 19
  %2040 = vperm.xlu0 %2039, %v44
  %v2041 = vpop.permute.xlu0 %2040
  %v2043 = vmul.f32 %v2041, %v2024
  %v2044 = vmul.f32 %v2041, %v2025
  %v2045 = vmul.f32 %v2041, %v2026
  %v2046 = vmul.f32 %v2041, %v2027
  %v2047 = vmul.f32 %v2041, %v2028
  %2053 = vrot.lane.b32.xlu0 %v2043, 126
  %v2054 = vpop.permute.xlu0 %2053
  %2055 = vrot.lane.b32.xlu0 %v2044, 126
  %v2056 = vpop.permute.xlu0 %2055
  %2057 = vrot.lane.b32.xlu0 %v2045, 126
  %v2058 = vpop.permute.xlu0 %2057
  %2059 = vrot.lane.b32.xlu0 %v2046, 126
  %v2060 = vpop.permute.xlu0 %2059
  %2061 = vrot.lane.b32.xlu0 %v2047, 126
  %v2062 = vpop.permute.xlu0 %2061
  %v2063 = vsel %vm151, %v2054, %v2056
  %v2064 = vsel %vm151, %v2056, %v2058
  %v2065 = vsel %vm151, %v2058, %v2060
  %v2066 = vsel %vm151, %v2060, %v2062
  %v2072 = vadd.f32 %v2034, %v2063
  %v2073 = vadd.f32 %v2035, %v2064
  %v2074 = vadd.f32 %v2036, %v2065
  %v2075 = vadd.f32 %v2037, %v2066
  %v2076 = vadd.f32 %v2038, %v2062
  %2077 = vset.pattern.permute.xlu0 20
  %2078 = vperm.xlu0 %2077, %v44
  %v2079 = vpop.permute.xlu0 %2078
  %v2081 = vmul.f32 %v2079, %v2024
  %v2082 = vmul.f32 %v2079, %v2025
  %v2083 = vmul.f32 %v2079, %v2026
  %v2084 = vmul.f32 %v2079, %v2027
  %v2085 = vmul.f32 %v2079, %v2028
  %2091 = vrot.lane.b32.xlu0 %v2081, 124
  %v2092 = vpop.permute.xlu0 %2091
  %2093 = vrot.lane.b32.xlu0 %v2082, 124
  %v2094 = vpop.permute.xlu0 %2093
  %2095 = vrot.lane.b32.xlu0 %v2083, 124
  %v2096 = vpop.permute.xlu0 %2095
  %2097 = vrot.lane.b32.xlu0 %v2084, 124
  %v2098 = vpop.permute.xlu0 %2097
  %2099 = vrot.lane.b32.xlu0 %v2085, 124
  %v2100 = vpop.permute.xlu0 %2099
  %v2101 = vsel %vm1418, %v2092, %v2094
  %v2102 = vsel %vm1418, %v2094, %v2096
  %v2103 = vsel %vm1418, %v2096, %v2098
  %v2104 = vsel %vm1418, %v2098, %v2100
  %v2110 = vadd.f32 %v2072, %v2101
  %v2111 = vadd.f32 %v2073, %v2102
  %v2112 = vadd.f32 %v2074, %v2103
  %v2113 = vadd.f32 %v2075, %v2104
  %v2114 = vadd.f32 %v2076, %v2100
  %2115 = vset.pattern.permute.xlu0 21
  %2116 = vperm.xlu0 %2115, %v44
  %v2117 = vpop.permute.xlu0 %2116
  %v2119 = vmul.f32 %v2117, %v2024
  %v2120 = vmul.f32 %v2117, %v2025
  %v2121 = vmul.f32 %v2117, %v2026
  %v2122 = vmul.f32 %v2117, %v2027
  %v2123 = vmul.f32 %v2117, %v2028
  %2129 = vrot.lane.b32.xlu0 %v2119, 92
  %v2130 = vpop.permute.xlu0 %2129
  %2131 = vrot.lane.b32.xlu0 %v2120, 92
  %v2132 = vpop.permute.xlu0 %2131
  %2133 = vrot.lane.b32.xlu0 %v2121, 92
  %v2134 = vpop.permute.xlu0 %2133
  %2135 = vrot.lane.b32.xlu0 %v2122, 92
  %v2136 = vpop.permute.xlu0 %2135
  %2137 = vrot.lane.b32.xlu0 %v2123, 92
  %v2138 = vpop.permute.xlu0 %2137
  %v2139 = vsel %vm335, %v2130, %v2132
  %v2140 = vsel %vm335, %v2132, %v2134
  %v2141 = vsel %vm335, %v2134, %v2136
  %v2142 = vsel %vm335, %v2136, %v2138
  %v2148 = vadd.f32 %v2110, %v2139
  %v2149 = vadd.f32 %v2111, %v2140
  %v2150 = vadd.f32 %v2112, %v2141
  %v2151 = vadd.f32 %v2113, %v2142
  %v2152 = vadd.f32 %v2114, %v2138
  %2153 = vset.pattern.permute.xlu0 22
  %2154 = vperm.xlu0 %2153, %v44
  %v2155 = vpop.permute.xlu0 %2154
  %v2157 = vmul.f32 %v2155, %v2024
  %v2158 = vmul.f32 %v2155, %v2025
  %v2159 = vmul.f32 %v2155, %v2026
  %v2160 = vmul.f32 %v2155, %v2027
  %v2161 = vmul.f32 %v2155, %v2028
  %2167 = vrot.lane.b32.xlu0 %v2157, 90
  %v2168 = vpop.permute.xlu0 %2167
  %2169 = vrot.lane.b32.xlu0 %v2158, 90
  %v2170 = vpop.permute.xlu0 %2169
  %2171 = vrot.lane.b32.xlu0 %v2159, 90
  %v2172 = vpop.permute.xlu0 %2171
  %2173 = vrot.lane.b32.xlu0 %v2160, 90
  %v2174 = vpop.permute.xlu0 %2173
  %2175 = vrot.lane.b32.xlu0 %v2161, 90
  %v2176 = vpop.permute.xlu0 %2175
  %v2177 = vsel %vm427, %v2168, %v2170
  %v2178 = vsel %vm427, %v2170, %v2172
  %v2179 = vsel %vm427, %v2172, %v2174
  %v2180 = vsel %vm427, %v2174, %v2176
  %v2186 = vadd.f32 %v2148, %v2177
  %v2187 = vadd.f32 %v2149, %v2178
  %v2188 = vadd.f32 %v2150, %v2179
  %v2189 = vadd.f32 %v2151, %v2180
  %v2190 = vadd.f32 %v2152, %v2176
  %2191 = vset.pattern.permute.xlu0 23
  %2192 = vperm.xlu0 %2191, %v44
  %v2193 = vpop.permute.xlu0 %2192
  %v2195 = vmul.f32 %v2193, %v2024
  %v2196 = vmul.f32 %v2193, %v2025
  %v2197 = vmul.f32 %v2193, %v2026
  %v2198 = vmul.f32 %v2193, %v2027
  %v2199 = vmul.f32 %v2193, %v2028
  %2205 = vrot.lane.b32.xlu0 %v2195, 88
  %v2206 = vpop.permute.xlu0 %2205
  %2207 = vrot.lane.b32.xlu0 %v2196, 88
  %v2208 = vpop.permute.xlu0 %2207
  %2209 = vrot.lane.b32.xlu0 %v2197, 88
  %v2210 = vpop.permute.xlu0 %2209
  %2211 = vrot.lane.b32.xlu0 %v2198, 88
  %v2212 = vpop.permute.xlu0 %2211
  %2213 = vrot.lane.b32.xlu0 %v2199, 88
  %v2214 = vpop.permute.xlu0 %2213
  %v2215 = vsel %vm1533, %v2206, %v2208
  %v2216 = vsel %vm1533, %v2208, %v2210
  %v2217 = vsel %vm1533, %v2210, %v2212
  %v2218 = vsel %vm1533, %v2212, %v2214
  %v2224 = vadd.f32 %v2186, %v2215
  %v2225 = vadd.f32 %v2187, %v2216
  %v2226 = vadd.f32 %v2188, %v2217
  %v2227 = vadd.f32 %v2189, %v2218
  %v2228 = vadd.f32 %v2190, %v2214
  %2229 = vset.pattern.permute.xlu0 24
  %2230 = vperm.xlu0 %2229, %v44
  %v2231 = vpop.permute.xlu0 %2230
  %v2233 = vperm.slane %v1340, 2
  %v2234 = vmul.f32 %v2231, %v2024
  %v2235 = vmul.f32 %v2231, %v2025
  %v2236 = vmul.f32 %v2231, %v2026
  %v2237 = vmul.f32 %v2231, %v2027
  %v2238 = vmul.f32 %v2231, %v2028
  %v2239 = vmul.f32 %v2231, %v2233
  %2246 = vrot.lane.b32.xlu0 %v2234, 56
  %v2247 = vpop.permute.xlu0 %2246
  %2248 = vrot.lane.b32.xlu0 %v2235, 56
  %v2249 = vpop.permute.xlu0 %2248
  %2250 = vrot.lane.b32.xlu0 %v2236, 56
  %v2251 = vpop.permute.xlu0 %2250
  %2252 = vrot.lane.b32.xlu0 %v2237, 56
  %v2253 = vpop.permute.xlu0 %2252
  %2254 = vrot.lane.b32.xlu0 %v2238, 56
  %v2255 = vpop.permute.xlu0 %2254
  %2256 = vrot.lane.b32.xlu0 %v2239, 56
  %v2257 = vpop.permute.xlu0 %2256
  %v2258 = vsel %vm1577, %v2247, %v2249
  %v2259 = vsel %vm1577, %v2249, %v2251
  %v2260 = vsel %vm1577, %v2251, %v2253
  %v2261 = vsel %vm1577, %v2253, %v2255
  %v2262 = vsel %vm1577, %v2255, %v2257
  %v2268 = vadd.f32 %v2224, %v2258
  %v2269 = vadd.f32 %v2225, %v2259
  %v2270 = vadd.f32 %v2226, %v2260
  %v2271 = vadd.f32 %v2227, %v2261
  %v2272 = vadd.f32 %v2228, %v2262
  %2273 = vset.pattern.permute.xlu0 25
  %2274 = vperm.xlu0 %2273, %v44
  %v2275 = vpop.permute.xlu0 %2274
  %v2277 = vmul.f32 %v2275, %v2024
  %v2278 = vmul.f32 %v2275, %v2025
  %v2279 = vmul.f32 %v2275, %v2026
  %v2280 = vmul.f32 %v2275, %v2027
  %v2281 = vmul.f32 %v2275, %v2028
  %v2282 = vmul.f32 %v2275, %v2233
  %2289 = vrot.lane.b32.xlu0 %v2277, 54
  %v2290 = vpop.permute.xlu0 %2289
  %2291 = vrot.lane.b32.xlu0 %v2278, 54
  %v2292 = vpop.permute.xlu0 %2291
  %2293 = vrot.lane.b32.xlu0 %v2279, 54
  %v2294 = vpop.permute.xlu0 %2293
  %2295 = vrot.lane.b32.xlu0 %v2280, 54
  %v2296 = vpop.permute.xlu0 %2295
  %2297 = vrot.lane.b32.xlu0 %v2281, 54
  %v2298 = vpop.permute.xlu0 %2297
  %2299 = vrot.lane.b32.xlu0 %v2282, 54
  %v2300 = vpop.permute.xlu0 %2299
  %v2301 = vsel %vm1621, %v2290, %v2292
  %v2302 = vsel %vm1621, %v2292, %v2294
  %v2303 = vsel %vm1621, %v2294, %v2296
  %v2304 = vsel %vm1621, %v2296, %v2298
  %v2305 = vsel %vm1621, %v2298, %v2300
  %v2311 = vadd.f32 %v2268, %v2301
  %v2312 = vadd.f32 %v2269, %v2302
  %v2313 = vadd.f32 %v2270, %v2303
  %v2314 = vadd.f32 %v2271, %v2304
  %v2315 = vadd.f32 %v2272, %v2305
  %2316 = vset.pattern.permute.xlu0 26
  %2317 = vperm.xlu0 %2316, %v44
  %v2318 = vpop.permute.xlu0 %2317
  %v2320 = vmul.f32 %v2318, %v2024
  %v2321 = vmul.f32 %v2318, %v2025
  %v2322 = vmul.f32 %v2318, %v2026
  %v2323 = vmul.f32 %v2318, %v2027
  %v2324 = vmul.f32 %v2318, %v2028
  %v2325 = vmul.f32 %v2318, %v2233
  %2332 = vrot.lane.b32.xlu0 %v2320, 52
  %v2333 = vpop.permute.xlu0 %2332
  %2334 = vrot.lane.b32.xlu0 %v2321, 52
  %v2335 = vpop.permute.xlu0 %2334
  %2336 = vrot.lane.b32.xlu0 %v2322, 52
  %v2337 = vpop.permute.xlu0 %2336
  %2338 = vrot.lane.b32.xlu0 %v2323, 52
  %v2339 = vpop.permute.xlu0 %2338
  %2340 = vrot.lane.b32.xlu0 %v2324, 52
  %v2341 = vpop.permute.xlu0 %2340
  %2342 = vrot.lane.b32.xlu0 %v2325, 52
  %v2343 = vpop.permute.xlu0 %2342
  %v2344 = vsel %vm1665, %v2333, %v2335
  %v2345 = vsel %vm1665, %v2335, %v2337
  %v2346 = vsel %vm1665, %v2337, %v2339
  %v2347 = vsel %vm1665, %v2339, %v2341
  %v2348 = vsel %vm1665, %v2341, %v2343
  %v2354 = vadd.f32 %v2311, %v2344
  %v2355 = vadd.f32 %v2312, %v2345
  %v2356 = vadd.f32 %v2313, %v2346
  %v2357 = vadd.f32 %v2314, %v2347
  %v2358 = vadd.f32 %v2315, %v2348
  %v2359 = vld [vmem:[%s4] sm:$0x7]
  %2361 = vset.pattern.permute.xlu0 0
  %2362 = vperm.xlu0 %2361, %v2359
  %v2363 = vpop.permute.xlu0 %2362
  %v2365 = vadd.f32 %v2354, %v2363
  %v2366 = vadd.f32 %v2355, %v2363
  %v2367 = vadd.f32 %v2356, %v2363
  %v2368 = vadd.f32 %v2357, %v2363
  %v2369 = vadd.f32 %v2358, %v2363
  %v2370 = vmax.f32 %v2365, 0.0
  %v2371 = vmax.f32 %v2366, 0.0
  %v2372 = vmax.f32 %v2367, 0.0
  %v2373 = vmax.f32 %v2368, 0.0
  %v2374 = vmax.f32 %v2369, 0.0
  %2380 = vrot.lane.b32.xlu0 %v2370, 126
  %v2381 = vpop.permute.xlu0 %2380
  %2382 = vrot.lane.b32.xlu0 %v2371, 126
  %v2383 = vpop.permute.xlu0 %2382
  %2384 = vrot.lane.b32.xlu0 %v2372, 126
  %v2385 = vpop.permute.xlu0 %2384
  %2386 = vrot.lane.b32.xlu0 %v2373, 126
  %v2387 = vpop.permute.xlu0 %2386
  %2388 = vrot.lane.b32.xlu0 %v2374, 126
  %v2389 = vpop.permute.xlu0 %2388
  %v2390 = vsel %vm151, %v2381, %v2383
  %v2391 = vsel %vm151, %v2383, %v2385
  %v2392 = vsel %vm151, %v2385, %v2387
  %v2393 = vsel %vm151, %v2387, %v2389
  %v2399 = vmax.f32 %v2370, %v2390
  %v2400 = vmax.f32 %v2371, %v2391
  %v2401 = vmax.f32 %v2372, %v2392
  %v2402 = vmax.f32 %v2373, %v2393
  %v2403 = vmax.f32 %v2374, %v2389
  %2409 = vrot.lane.b32.xlu0 %v2399, 92
  %v2410 = vpop.permute.xlu0 %2409
  %2411 = vrot.lane.b32.xlu0 %v2400, 92
  %v2412 = vpop.permute.xlu0 %2411
  %2413 = vrot.lane.b32.xlu0 %v2401, 92
  %v2414 = vpop.permute.xlu0 %2413
  %2415 = vrot.lane.b32.xlu0 %v2402, 92
  %v2416 = vpop.permute.xlu0 %2415
  %2417 = vrot.lane.b32.xlu0 %v2403, 92
  %v2418 = vpop.permute.xlu0 %2417
  %v2419 = vsel %vm335, %v2410, %v2412
  %v2420 = vsel %vm335, %v2412, %v2414
  %v2421 = vsel %vm335, %v2414, %v2416
  %v2422 = vsel %vm335, %v2416, %v2418
  %v2428 = vmax.f32 %v2399, %v2419
  %v2429 = vmax.f32 %v2400, %v2420
  %v2430 = vmax.f32 %v2401, %v2421
  %v2431 = vmax.f32 %v2402, %v2422
  %v2432 = vmax.f32 %v2403, %v2418
  %v2433 = vld [vmem:[%s6] sm:$0xff]
  %v2434 = vld [vmem:[%s6 + $0x8] sm:$0xff]
  %v2435 = vld [vmem:[%s6 + $0x10] sm:$0xff]
  %v2436 = vld [vmem:[%s6 + $0x18] sm:$0xff]
  %v2437 = vld [vmem:[%s6 + $0x20] sm:$0xff]
  %v2438 = vld [vmem:[%s6 + $0x28] sm:$0xff]
  %v2439 = vld [vmem:[%s6 + $0x30] sm:$0xff]
  %v2440 = vld [vmem:[%s6 + $0x38] sm:$0xff]
  %v2441 = vld [vmem:[%s6 + $0x40] sm:$0xff]
  %v2442 = vld [vmem:[%s6 + $0x48] sm:$0xff]
  %v2443 = vld [vmem:[%s6 + $0x50] sm:$0xff]
  %v2444 = vld [vmem:[%s6 + $0x58] sm:$0xff]
  %v2445 = vld [vmem:[%s6 + $0x60] sm:$0xff]
  %v2446 = vld [vmem:[%s6 + $0x68] sm:$0xff]
  %v2447 = vld [vmem:[%s6 + $0x70] sm:$0xff]
  %v2448 = vld [vmem:[%s6 + $0x78] sm:$0xff]
  %v2449 = vld [vmem:[%s6 + $0x80] sm:$0xff]
  %v2450 = vld [vmem:[%s6 + $0x88] sm:$0xff]
  %v2451 = vld [vmem:[%s6 + $0x90] sm:$0xff]
  %v2452 = vld [vmem:[%s6 + $0x98] sm:$0xff]
  %v2453 = vld [vmem:[%s6 + $0xa0] sm:$0xff]
  %v2454 = vld [vmem:[%s6 + $0xa8] sm:$0xff]
  %v2455 = vld [vmem:[%s6 + $0xb0] sm:$0xff]
  %v2456 = vld [vmem:[%s6 + $0xb8] sm:$0xff]
  %v2457 = vld [vmem:[%s6 + $0xc0] sm:$0xff]
  %v2458 = vld [vmem:[%s6 + $0xc8] sm:$0xff]
  %v2459 = vld [vmem:[%s6 + $0xd0] sm:$0xff]
  %v2460 = vld [vmem:[%s6 + $0xd8] sm:$0xff]
  %v2461 = vld [vmem:[%s6 + $0xe0] sm:$0xff]
  %v2462 = vld [vmem:[%s6 + $0xe8] sm:$0xff]
  %v2463 = vld [vmem:[%s6 + $0xf0] sm:$0xff]
  %v2464 = vld [vmem:[%s6 + $0xf8] sm:$0xff]
  %v2465 = vld [vmem:[%s6 + $0x100] sm:$0xff]
  %v2466 = vld [vmem:[%s6 + $0x108] sm:$0xff]
  %v2467 = vld [vmem:[%s6 + $0x110] sm:$0xff]
  %v2468 = vld [vmem:[%s6 + $0x118] sm:$0xff]
  %v2469 = vld [vmem:[%s6 + $0x120] sm:$0xff]
  %v2470 = vld [vmem:[%s6 + $0x128] sm:$0xff]
  %v2471 = vld [vmem:[%s6 + $0x130] sm:$0xff]
  %v2472 = vld [vmem:[%s6 + $0x138] sm:$0xff]
  %v2473 = vld [vmem:[%s6 + $0x140] sm:$0xff]
  %v2474 = vld [vmem:[%s6 + $0x148] sm:$0xff]
  %v2475 = vld [vmem:[%s6 + $0x150] sm:$0xff]
  %v2476 = vld [vmem:[%s6 + $0x158] sm:$0xff]
  %v2477 = vld [vmem:[%s6 + $0x160] sm:$0xff]
  %v2478 = vld [vmem:[%s6 + $0x168] sm:$0xff]
  %v2479 = vld [vmem:[%s6 + $0x170] sm:$0xff]
  %v2480 = vld [vmem:[%s6 + $0x178] sm:$0xff]
  %v2481 = vld [vmem:[%s6 + $0x180] sm:$0xff]
  %v2482 = vld [vmem:[%s6 + $0x188] sm:$0xff]
  %v2483 = vld [vmem:[%s6 + $0x190] sm:$0xff]
  %v2484 = vld [vmem:[%s6 + $0x198] sm:$0xff]
  %v2485 = vld [vmem:[%s6 + $0x1a0] sm:$0xff]
  %v2486 = vld [vmem:[%s6 + $0x1a8] sm:$0xff]
  %v2487 = vld [vmem:[%s6 + $0x1b0] sm:$0xff]
  %v2488 = vld [vmem:[%s6 + $0x1b8] sm:$0xff]
  %v2489 = vld [vmem:[%s6 + $0x1c0] sm:$0xff]
  %v2490 = vld [vmem:[%s6 + $0x1c8] sm:$0xff]
  %v2491 = vld [vmem:[%s6 + $0x1d0] sm:$0xff]
  %v2492 = vld [vmem:[%s6 + $0x1d8] sm:$0xff]
  %v2493 = vld [vmem:[%s6 + $0x1e0] sm:$0xff]
  %v2494 = vld [vmem:[%s6 + $0x1e8] sm:$0xff]
  %v2495 = vld [vmem:[%s6 + $0x1f0] sm:$0xff]
  %v2496 = vld [vmem:[%s6 + $0x1f8] sm:$0xff]
  %v2497 = vld [vmem:[%s6 + $0x200] sm:$0xff]
  %v2498 = vld [vmem:[%s6 + $0x208] sm:$0xff]
  %v2499 = vld [vmem:[%s6 + $0x210] sm:$0xff]
  %v2500 = vld [vmem:[%s6 + $0x218] sm:$0xff]
  %v2501 = vld [vmem:[%s6 + $0x220] sm:$0xff]
  %v2502 = vld [vmem:[%s6 + $0x228] sm:$0x7]
  %vm2503 = vcmask 351232
  %v2505 = vsel %vm2503, %v2432, 0
  %vm2507 = vcmask 1042432
  %v2509 = vsel %vm2507, %v2502, 0
  %v2511 = vand.u32 %v2448, 4294901760
  %2512 = vmatpush.msra.mxu0 %v2511
  %v2513 = vand.u32 %v2447, 4294901760
  %2514 = vmatpush.msra.mxu0 %v2513
  %v2515 = vand.u32 %v2446, 4294901760
  %2516 = vmatpush.msra.mxu0 %v2515
  %v2517 = vand.u32 %v2445, 4294901760
  %2518 = vmatpush.msra.mxu0 %v2517
  %v2519 = vand.u32 %v2444, 4294901760
  %2520 = vmatpush.msra.mxu0 %v2519
  %v2521 = vand.u32 %v2443, 4294901760
  %2522 = vmatpush.msra.mxu0 %v2521
  %v2523 = vand.u32 %v2442, 4294901760
  %2524 = vmatpush.msra.mxu0 %v2523
  %v2525 = vand.u32 %v2441, 4294901760
  %2526 = vmatpush.msra.mxu0 %v2525
  %v2527 = vand.u32 %v2440, 4294901760
  %2528 = vmatpush.msra.mxu0 %v2527
  %v2529 = vand.u32 %v2439, 4294901760
  %2530 = vmatpush.msra.mxu0 %v2529
  %v2531 = vand.u32 %v2438, 4294901760
  %2532 = vmatpush.msra.mxu0 %v2531
  %v2533 = vand.u32 %v2437, 4294901760
  %2534 = vmatpush.msra.mxu0 %v2533
  %v2535 = vand.u32 %v2436, 4294901760
  %2536 = vmatpush.msra.mxu0 %v2535
  %v2537 = vand.u32 %v2435, 4294901760
  %2538 = vmatpush.msra.mxu0 %v2537
  %v2539 = vand.u32 %v2434, 4294901760
  %2540 = vmatpush.msra.mxu0 %v2539
  %v2541 = vand.u32 %v2433, 4294901760
  %2542 = vmatpush.msra.mxu0 %v2541
  %v2543 = vand.u32 %v2428, 4294901760
  %v2544 = vsub.f32 %v2428, %v2543
  %v2545 = vand.u32 %v2544, 4294901760
  %v2546 = vsub.f32 %v2544, %v2545
  %v2547 = vand.u32 %v2546, 4294901760
  %2548 = vmatmul.f32.gmra.mxu0 %v2547
  %v2549 = vpop.f32.mrf.mxu0
  %v2550 = vadd.f32 0.0, %v2549
  %2551 = vdwg.mxu0
  %v2552 = vand.u32 %v2448, 4294901760
  %v2553 = vsub.f32 %v2448, %v2552
  %v2554 = vand.u32 %v2553, 4294901760
  %v2555 = vsub.f32 %v2553, %v2554
  %v2556 = vand.u32 %v2555, 4294901760
  %2557 = vmatpush.msra.mxu0 %v2556
  %v2558 = vand.u32 %v2447, 4294901760
  %v2559 = vsub.f32 %v2447, %v2558
  %v2560 = vand.u32 %v2559, 4294901760
  %v2561 = vsub.f32 %v2559, %v2560
  %v2562 = vand.u32 %v2561, 4294901760
  %2563 = vmatpush.msra.mxu0 %v2562
  %v2564 = vand.u32 %v2446, 4294901760
  %v2565 = vsub.f32 %v2446, %v2564
  %v2566 = vand.u32 %v2565, 4294901760
  %v2567 = vsub.f32 %v2565, %v2566
  %v2568 = vand.u32 %v2567, 4294901760
  %2569 = vmatpush.msra.mxu0 %v2568
  %v2570 = vand.u32 %v2445, 4294901760
  %v2571 = vsub.f32 %v2445, %v2570
  %v2572 = vand.u32 %v2571, 4294901760
  %v2573 = vsub.f32 %v2571, %v2572
  %v2574 = vand.u32 %v2573, 4294901760
  %2575 = vmatpush.msra.mxu0 %v2574
  %v2576 = vand.u32 %v2444, 4294901760
  %v2577 = vsub.f32 %v2444, %v2576
  %v2578 = vand.u32 %v2577, 4294901760
  %v2579 = vsub.f32 %v2577, %v2578
  %v2580 = vand.u32 %v2579, 4294901760
  %2581 = vmatpush.msra.mxu0 %v2580
  %v2582 = vand.u32 %v2443, 4294901760
  %v2583 = vsub.f32 %v2443, %v2582
  %v2584 = vand.u32 %v2583, 4294901760
  %v2585 = vsub.f32 %v2583, %v2584
  %v2586 = vand.u32 %v2585, 4294901760
  %2587 = vmatpush.msra.mxu0 %v2586
  %v2588 = vand.u32 %v2442, 4294901760
  %v2589 = vsub.f32 %v2442, %v2588
  %v2590 = vand.u32 %v2589, 4294901760
  %v2591 = vsub.f32 %v2589, %v2590
  %v2592 = vand.u32 %v2591, 4294901760
  %2593 = vmatpush.msra.mxu0 %v2592
  %v2594 = vand.u32 %v2441, 4294901760
  %v2595 = vsub.f32 %v2441, %v2594
  %v2596 = vand.u32 %v2595, 4294901760
  %v2597 = vsub.f32 %v2595, %v2596
  %v2598 = vand.u32 %v2597, 4294901760
  %2599 = vmatpush.msra.mxu0 %v2598
  %v2600 = vand.u32 %v2440, 4294901760
  %v2601 = vsub.f32 %v2440, %v2600
  %v2602 = vand.u32 %v2601, 4294901760
  %v2603 = vsub.f32 %v2601, %v2602
  %v2604 = vand.u32 %v2603, 4294901760
  %2605 = vmatpush.msra.mxu0 %v2604
  %v2606 = vand.u32 %v2439, 4294901760
  %v2607 = vsub.f32 %v2439, %v2606
  %v2608 = vand.u32 %v2607, 4294901760
  %v2609 = vsub.f32 %v2607, %v2608
  %v2610 = vand.u32 %v2609, 4294901760
  %2611 = vmatpush.msra.mxu0 %v2610
  %v2612 = vand.u32 %v2438, 4294901760
  %v2613 = vsub.f32 %v2438, %v2612
  %v2614 = vand.u32 %v2613, 4294901760
  %v2615 = vsub.f32 %v2613, %v2614
  %v2616 = vand.u32 %v2615, 4294901760
  %2617 = vmatpush.msra.mxu0 %v2616
  %v2618 = vand.u32 %v2437, 4294901760
  %v2619 = vsub.f32 %v2437, %v2618
  %v2620 = vand.u32 %v2619, 4294901760
  %v2621 = vsub.f32 %v2619, %v2620
  %v2622 = vand.u32 %v2621, 4294901760
  %2623 = vmatpush.msra.mxu0 %v2622
  %v2624 = vand.u32 %v2436, 4294901760
  %v2625 = vsub.f32 %v2436, %v2624
  %v2626 = vand.u32 %v2625, 4294901760
  %v2627 = vsub.f32 %v2625, %v2626
  %v2628 = vand.u32 %v2627, 4294901760
  %2629 = vmatpush.msra.mxu0 %v2628
  %v2630 = vand.u32 %v2435, 4294901760
  %v2631 = vsub.f32 %v2435, %v2630
  %v2632 = vand.u32 %v2631, 4294901760
  %v2633 = vsub.f32 %v2631, %v2632
  %v2634 = vand.u32 %v2633, 4294901760
  %2635 = vmatpush.msra.mxu0 %v2634
  %v2636 = vand.u32 %v2434, 4294901760
  %v2637 = vsub.f32 %v2434, %v2636
  %v2638 = vand.u32 %v2637, 4294901760
  %v2639 = vsub.f32 %v2637, %v2638
  %v2640 = vand.u32 %v2639, 4294901760
  %2641 = vmatpush.msra.mxu0 %v2640
  %v2642 = vand.u32 %v2433, 4294901760
  %v2643 = vsub.f32 %v2433, %v2642
  %v2644 = vand.u32 %v2643, 4294901760
  %v2645 = vsub.f32 %v2643, %v2644
  %v2646 = vand.u32 %v2645, 4294901760
  %2647 = vmatpush.msra.mxu0 %v2646
  %v2648 = vand.u32 %v2428, 4294901760
  %2649 = vmatmul.f32.gmra.mxu0 %v2648
  %v2650 = vpop.f32.mrf.mxu0
  %v2651 = vadd.f32 %v2550, %v2650
  %2652 = vdwg.mxu0
  %v2653 = vand.u32 %v2448, 4294901760
  %v2654 = vsub.f32 %v2448, %v2653
  %2655 = vmatpush.msra.mxu0 %v2654
  %v2656 = vand.u32 %v2447, 4294901760
  %v2657 = vsub.f32 %v2447, %v2656
  %2658 = vmatpush.msra.mxu0 %v2657
  %v2659 = vand.u32 %v2446, 4294901760
  %v2660 = vsub.f32 %v2446, %v2659
  %2661 = vmatpush.msra.mxu0 %v2660
  %v2662 = vand.u32 %v2445, 4294901760
  %v2663 = vsub.f32 %v2445, %v2662
  %2664 = vmatpush.msra.mxu0 %v2663
  %v2665 = vand.u32 %v2444, 4294901760
  %v2666 = vsub.f32 %v2444, %v2665
  %2667 = vmatpush.msra.mxu0 %v2666
  %v2668 = vand.u32 %v2443, 4294901760
  %v2669 = vsub.f32 %v2443, %v2668
  %2670 = vmatpush.msra.mxu0 %v2669
  %v2671 = vand.u32 %v2442, 4294901760
  %v2672 = vsub.f32 %v2442, %v2671
  %2673 = vmatpush.msra.mxu0 %v2672
  %v2674 = vand.u32 %v2441, 4294901760
  %v2675 = vsub.f32 %v2441, %v2674
  %2676 = vmatpush.msra.mxu0 %v2675
  %v2677 = vand.u32 %v2440, 4294901760
  %v2678 = vsub.f32 %v2440, %v2677
  %2679 = vmatpush.msra.mxu0 %v2678
  %v2680 = vand.u32 %v2439, 4294901760
  %v2681 = vsub.f32 %v2439, %v2680
  %2682 = vmatpush.msra.mxu0 %v2681
  %v2683 = vand.u32 %v2438, 4294901760
  %v2684 = vsub.f32 %v2438, %v2683
  %2685 = vmatpush.msra.mxu0 %v2684
  %v2686 = vand.u32 %v2437, 4294901760
  %v2687 = vsub.f32 %v2437, %v2686
  %2688 = vmatpush.msra.mxu0 %v2687
  %v2689 = vand.u32 %v2436, 4294901760
  %v2690 = vsub.f32 %v2436, %v2689
  %2691 = vmatpush.msra.mxu0 %v2690
  %v2692 = vand.u32 %v2435, 4294901760
  %v2693 = vsub.f32 %v2435, %v2692
  %2694 = vmatpush.msra.mxu0 %v2693
  %v2695 = vand.u32 %v2434, 4294901760
  %v2696 = vsub.f32 %v2434, %v2695
  %2697 = vmatpush.msra.mxu0 %v2696
  %v2698 = vand.u32 %v2433, 4294901760
  %v2699 = vsub.f32 %v2433, %v2698
  %2700 = vmatpush.msra.mxu0 %v2699
  %v2701 = vand.u32 %v2428, 4294901760
  %v2702 = vsub.f32 %v2428, %v2701
  %2703 = vmatmul.f32.gmra.mxu0 %v2702
  %v2704 = vpop.f32.mrf.mxu0
  %v2705 = vadd.f32 %v2651, %v2704
  %2706 = vdwg.mxu0
  %v2707 = vand.u32 %v2448, 4294901760
  %2708 = vmatpush.msra.mxu0 %v2707
  %v2709 = vand.u32 %v2447, 4294901760
  %2710 = vmatpush.msra.mxu0 %v2709
  %v2711 = vand.u32 %v2446, 4294901760
  %2712 = vmatpush.msra.mxu0 %v2711
  %v2713 = vand.u32 %v2445, 4294901760
  %2714 = vmatpush.msra.mxu0 %v2713
  %v2715 = vand.u32 %v2444, 4294901760
  %2716 = vmatpush.msra.mxu0 %v2715
  %v2717 = vand.u32 %v2443, 4294901760
  %2718 = vmatpush.msra.mxu0 %v2717
  %v2719 = vand.u32 %v2442, 4294901760
  %2720 = vmatpush.msra.mxu0 %v2719
  %v2721 = vand.u32 %v2441, 4294901760
  %2722 = vmatpush.msra.mxu0 %v2721
  %v2723 = vand.u32 %v2440, 4294901760
  %2724 = vmatpush.msra.mxu0 %v2723
  %v2725 = vand.u32 %v2439, 4294901760
  %2726 = vmatpush.msra.mxu0 %v2725
  %v2727 = vand.u32 %v2438, 4294901760
  %2728 = vmatpush.msra.mxu0 %v2727
  %v2729 = vand.u32 %v2437, 4294901760
  %2730 = vmatpush.msra.mxu0 %v2729
  %v2731 = vand.u32 %v2436, 4294901760
  %2732 = vmatpush.msra.mxu0 %v2731
  %v2733 = vand.u32 %v2435, 4294901760
  %2734 = vmatpush.msra.mxu0 %v2733
  %v2735 = vand.u32 %v2434, 4294901760
  %2736 = vmatpush.msra.mxu0 %v2735
  %v2737 = vand.u32 %v2433, 4294901760
  %2738 = vmatpush.msra.mxu0 %v2737
  %v2739 = vand.u32 %v2428, 4294901760
  %v2740 = vsub.f32 %v2428, %v2739
  %v2741 = vand.u32 %v2740, 4294901760
  %2742 = vmatmul.f32.gmra.mxu0 %v2741
  %v2743 = vpop.f32.mrf.mxu0
  %v2744 = vadd.f32 %v2705, %v2743
  %2745 = vdwg.mxu0
  %v2746 = vand.u32 %v2448, 4294901760
  %v2747 = vsub.f32 %v2448, %v2746
  %v2748 = vand.u32 %v2747, 4294901760
  %2749 = vmatpush.msra.mxu0 %v2748
  %v2750 = vand.u32 %v2447, 4294901760
  %v2751 = vsub.f32 %v2447, %v2750
  %v2752 = vand.u32 %v2751, 4294901760
  %2753 = vmatpush.msra.mxu0 %v2752
  %v2754 = vand.u32 %v2446, 4294901760
  %v2755 = vsub.f32 %v2446, %v2754
  %v2756 = vand.u32 %v2755, 4294901760
  %2757 = vmatpush.msra.mxu0 %v2756
  %v2758 = vand.u32 %v2445, 4294901760
  %v2759 = vsub.f32 %v2445, %v2758
  %v2760 = vand.u32 %v2759, 4294901760
  %2761 = vmatpush.msra.mxu0 %v2760
  %v2762 = vand.u32 %v2444, 4294901760
  %v2763 = vsub.f32 %v2444, %v2762
  %v2764 = vand.u32 %v2763, 4294901760
  %2765 = vmatpush.msra.mxu0 %v2764
  %v2766 = vand.u32 %v2443, 4294901760
  %v2767 = vsub.f32 %v2443, %v2766
  %v2768 = vand.u32 %v2767, 4294901760
  %2769 = vmatpush.msra.mxu0 %v2768
  %v2770 = vand.u32 %v2442, 4294901760
  %v2771 = vsub.f32 %v2442, %v2770
  %v2772 = vand.u32 %v2771, 4294901760
  %2773 = vmatpush.msra.mxu0 %v2772
  %v2774 = vand.u32 %v2441, 4294901760
  %v2775 = vsub.f32 %v2441, %v2774
  %v2776 = vand.u32 %v2775, 4294901760
  %2777 = vmatpush.msra.mxu0 %v2776
  %v2778 = vand.u32 %v2440, 4294901760
  %v2779 = vsub.f32 %v2440, %v2778
  %v2780 = vand.u32 %v2779, 4294901760
  %2781 = vmatpush.msra.mxu0 %v2780
  %v2782 = vand.u32 %v2439, 4294901760
  %v2783 = vsub.f32 %v2439, %v2782
  %v2784 = vand.u32 %v2783, 4294901760
  %2785 = vmatpush.msra.mxu0 %v2784
  %v2786 = vand.u32 %v2438, 4294901760
  %v2787 = vsub.f32 %v2438, %v2786
  %v2788 = vand.u32 %v2787, 4294901760
  %2789 = vmatpush.msra.mxu0 %v2788
  %v2790 = vand.u32 %v2437, 4294901760
  %v2791 = vsub.f32 %v2437, %v2790
  %v2792 = vand.u32 %v2791, 4294901760
  %2793 = vmatpush.msra.mxu0 %v2792
  %v2794 = vand.u32 %v2436, 4294901760
  %v2795 = vsub.f32 %v2436, %v2794
  %v2796 = vand.u32 %v2795, 4294901760
  %2797 = vmatpush.msra.mxu0 %v2796
  %v2798 = vand.u32 %v2435, 4294901760
  %v2799 = vsub.f32 %v2435, %v2798
  %v2800 = vand.u32 %v2799, 4294901760
  %2801 = vmatpush.msra.mxu0 %v2800
  %v2802 = vand.u32 %v2434, 4294901760
  %v2803 = vsub.f32 %v2434, %v2802
  %v2804 = vand.u32 %v2803, 4294901760
  %2805 = vmatpush.msra.mxu0 %v2804
  %v2806 = vand.u32 %v2433, 4294901760
  %v2807 = vsub.f32 %v2433, %v2806
  %v2808 = vand.u32 %v2807, 4294901760
  %2809 = vmatpush.msra.mxu0 %v2808
  %v2810 = vand.u32 %v2428, 4294901760
  %2811 = vmatmul.f32.gmra.mxu0 %v2810
  %v2812 = vpop.f32.mrf.mxu0
  %v2813 = vadd.f32 %v2744, %v2812
  %2814 = vdwg.mxu0
  %v2815 = vand.u32 %v2448, 4294901760
  %2816 = vmatpush.msra.mxu0 %v2815
  %v2817 = vand.u32 %v2447, 4294901760
  %2818 = vmatpush.msra.mxu0 %v2817
  %v2819 = vand.u32 %v2446, 4294901760
  %2820 = vmatpush.msra.mxu0 %v2819
  %v2821 = vand.u32 %v2445, 4294901760
  %2822 = vmatpush.msra.mxu0 %v2821
  %v2823 = vand.u32 %v2444, 4294901760
  %2824 = vmatpush.msra.mxu0 %v2823
  %v2825 = vand.u32 %v2443, 4294901760
  %2826 = vmatpush.msra.mxu0 %v2825
  %v2827 = vand.u32 %v2442, 4294901760
  %2828 = vmatpush.msra.mxu0 %v2827
  %v2829 = vand.u32 %v2441, 4294901760
  %2830 = vmatpush.msra.mxu0 %v2829
  %v2831 = vand.u32 %v2440, 4294901760
  %2832 = vmatpush.msra.mxu0 %v2831
  %v2833 = vand.u32 %v2439, 4294901760
  %2834 = vmatpush.msra.mxu0 %v2833
  %v2835 = vand.u32 %v2438, 4294901760
  %2836 = vmatpush.msra.mxu0 %v2835
  %v2837 = vand.u32 %v2437, 4294901760
  %2838 = vmatpush.msra.mxu0 %v2837
  %v2839 = vand.u32 %v2436, 4294901760
  %2840 = vmatpush.msra.mxu0 %v2839
  %v2841 = vand.u32 %v2435, 4294901760
  %2842 = vmatpush.msra.mxu0 %v2841
  %v2843 = vand.u32 %v2434, 4294901760
  %2844 = vmatpush.msra.mxu0 %v2843
  %v2845 = vand.u32 %v2433, 4294901760
  %2846 = vmatpush.msra.mxu0 %v2845
  %v2847 = vand.u32 %v2428, 4294901760
  %2848 = vmatmul.f32.gmra.mxu0 %v2847
  %v2849 = vpop.f32.mrf.mxu0
  %v2850 = vadd.f32 %v2813, %v2849
  %2851 = vdwg.mxu0
  %v2852 = vand.u32 %v2464, 4294901760
  %2853 = vmatpush.msra.mxu0 %v2852
  %v2854 = vand.u32 %v2463, 4294901760
  %2855 = vmatpush.msra.mxu0 %v2854
  %v2856 = vand.u32 %v2462, 4294901760
  %2857 = vmatpush.msra.mxu0 %v2856
  %v2858 = vand.u32 %v2461, 4294901760
  %2859 = vmatpush.msra.mxu0 %v2858
  %v2860 = vand.u32 %v2460, 4294901760
  %2861 = vmatpush.msra.mxu0 %v2860
  %v2862 = vand.u32 %v2459, 4294901760
  %2863 = vmatpush.msra.mxu0 %v2862
  %v2864 = vand.u32 %v2458, 4294901760
  %2865 = vmatpush.msra.mxu0 %v2864
  %v2866 = vand.u32 %v2457, 4294901760
  %2867 = vmatpush.msra.mxu0 %v2866
  %v2868 = vand.u32 %v2456, 4294901760
  %2869 = vmatpush.msra.mxu0 %v2868
  %v2870 = vand.u32 %v2455, 4294901760
  %2871 = vmatpush.msra.mxu0 %v2870
  %v2872 = vand.u32 %v2454, 4294901760
  %2873 = vmatpush.msra.mxu0 %v2872
  %v2874 = vand.u32 %v2453, 4294901760
  %2875 = vmatpush.msra.mxu0 %v2874
  %v2876 = vand.u32 %v2452, 4294901760
  %2877 = vmatpush.msra.mxu0 %v2876
  %v2878 = vand.u32 %v2451, 4294901760
  %2879 = vmatpush.msra.mxu0 %v2878
  %v2880 = vand.u32 %v2450, 4294901760
  %2881 = vmatpush.msra.mxu0 %v2880
  %v2882 = vand.u32 %v2449, 4294901760
  %2883 = vmatpush.msra.mxu0 %v2882
  %v2884 = vand.u32 %v2429, 4294901760
  %v2885 = vsub.f32 %v2429, %v2884
  %v2886 = vand.u32 %v2885, 4294901760
  %v2887 = vsub.f32 %v2885, %v2886
  %v2888 = vand.u32 %v2887, 4294901760
  %2889 = vmatmul.f32.gmra.mxu0 %v2888
  %v2890 = vpop.f32.mrf.mxu0
  %v2891 = vadd.f32 %v2850, %v2890
  %2892 = vdwg.mxu0
  %v2893 = vand.u32 %v2464, 4294901760
  %v2894 = vsub.f32 %v2464, %v2893
  %v2895 = vand.u32 %v2894, 4294901760
  %v2896 = vsub.f32 %v2894, %v2895
  %v2897 = vand.u32 %v2896, 4294901760
  %2898 = vmatpush.msra.mxu0 %v2897
  %v2899 = vand.u32 %v2463, 4294901760
  %v2900 = vsub.f32 %v2463, %v2899
  %v2901 = vand.u32 %v2900, 4294901760
  %v2902 = vsub.f32 %v2900, %v2901
  %v2903 = vand.u32 %v2902, 4294901760
  %2904 = vmatpush.msra.mxu0 %v2903
  %v2905 = vand.u32 %v2462, 4294901760
  %v2906 = vsub.f32 %v2462, %v2905
  %v2907 = vand.u32 %v2906, 4294901760
  %v2908 = vsub.f32 %v2906, %v2907
  %v2909 = vand.u32 %v2908, 4294901760
  %2910 = vmatpush.msra.mxu0 %v2909
  %v2911 = vand.u32 %v2461, 4294901760
  %v2912 = vsub.f32 %v2461, %v2911
  %v2913 = vand.u32 %v2912, 4294901760
  %v2914 = vsub.f32 %v2912, %v2913
  %v2915 = vand.u32 %v2914, 4294901760
  %2916 = vmatpush.msra.mxu0 %v2915
  %v2917 = vand.u32 %v2460, 4294901760
  %v2918 = vsub.f32 %v2460, %v2917
  %v2919 = vand.u32 %v2918, 4294901760
  %v2920 = vsub.f32 %v2918, %v2919
  %v2921 = vand.u32 %v2920, 4294901760
  %2922 = vmatpush.msra.mxu0 %v2921
  %v2923 = vand.u32 %v2459, 4294901760
  %v2924 = vsub.f32 %v2459, %v2923
  %v2925 = vand.u32 %v2924, 4294901760
  %v2926 = vsub.f32 %v2924, %v2925
  %v2927 = vand.u32 %v2926, 4294901760
  %2928 = vmatpush.msra.mxu0 %v2927
  %v2929 = vand.u32 %v2458, 4294901760
  %v2930 = vsub.f32 %v2458, %v2929
  %v2931 = vand.u32 %v2930, 4294901760
  %v2932 = vsub.f32 %v2930, %v2931
  %v2933 = vand.u32 %v2932, 4294901760
  %2934 = vmatpush.msra.mxu0 %v2933
  %v2935 = vand.u32 %v2457, 4294901760
  %v2936 = vsub.f32 %v2457, %v2935
  %v2937 = vand.u32 %v2936, 4294901760
  %v2938 = vsub.f32 %v2936, %v2937
  %v2939 = vand.u32 %v2938, 4294901760
  %2940 = vmatpush.msra.mxu0 %v2939
  %v2941 = vand.u32 %v2456, 4294901760
  %v2942 = vsub.f32 %v2456, %v2941
  %v2943 = vand.u32 %v2942, 4294901760
  %v2944 = vsub.f32 %v2942, %v2943
  %v2945 = vand.u32 %v2944, 4294901760
  %2946 = vmatpush.msra.mxu0 %v2945
  %v2947 = vand.u32 %v2455, 4294901760
  %v2948 = vsub.f32 %v2455, %v2947
  %v2949 = vand.u32 %v2948, 4294901760
  %v2950 = vsub.f32 %v2948, %v2949
  %v2951 = vand.u32 %v2950, 4294901760
  %2952 = vmatpush.msra.mxu0 %v2951
  %v2953 = vand.u32 %v2454, 4294901760
  %v2954 = vsub.f32 %v2454, %v2953
  %v2955 = vand.u32 %v2954, 4294901760
  %v2956 = vsub.f32 %v2954, %v2955
  %v2957 = vand.u32 %v2956, 4294901760
  %2958 = vmatpush.msra.mxu0 %v2957
  %v2959 = vand.u32 %v2453, 4294901760
  %v2960 = vsub.f32 %v2453, %v2959
  %v2961 = vand.u32 %v2960, 4294901760
  %v2962 = vsub.f32 %v2960, %v2961
  %v2963 = vand.u32 %v2962, 4294901760
  %2964 = vmatpush.msra.mxu0 %v2963
  %v2965 = vand.u32 %v2452, 4294901760
  %v2966 = vsub.f32 %v2452, %v2965
  %v2967 = vand.u32 %v2966, 4294901760
  %v2968 = vsub.f32 %v2966, %v2967
  %v2969 = vand.u32 %v2968, 4294901760
  %2970 = vmatpush.msra.mxu0 %v2969
  %v2971 = vand.u32 %v2451, 4294901760
  %v2972 = vsub.f32 %v2451, %v2971
  %v2973 = vand.u32 %v2972, 4294901760
  %v2974 = vsub.f32 %v2972, %v2973
  %v2975 = vand.u32 %v2974, 4294901760
  %2976 = vmatpush.msra.mxu0 %v2975
  %v2977 = vand.u32 %v2450, 4294901760
  %v2978 = vsub.f32 %v2450, %v2977
  %v2979 = vand.u32 %v2978, 4294901760
  %v2980 = vsub.f32 %v2978, %v2979
  %v2981 = vand.u32 %v2980, 4294901760
  %2982 = vmatpush.msra.mxu0 %v2981
  %v2983 = vand.u32 %v2449, 4294901760
  %v2984 = vsub.f32 %v2449, %v2983
  %v2985 = vand.u32 %v2984, 4294901760
  %v2986 = vsub.f32 %v2984, %v2985
  %v2987 = vand.u32 %v2986, 4294901760
  %2988 = vmatpush.msra.mxu0 %v2987
  %v2989 = vand.u32 %v2429, 4294901760
  %2990 = vmatmul.f32.gmra.mxu0 %v2989
  %v2991 = vpop.f32.mrf.mxu0
  %v2992 = vadd.f32 %v2891, %v2991
  %2993 = vdwg.mxu0
  %v2994 = vand.u32 %v2464, 4294901760
  %v2995 = vsub.f32 %v2464, %v2994
  %2996 = vmatpush.msra.mxu0 %v2995
  %v2997 = vand.u32 %v2463, 4294901760
  %v2998 = vsub.f32 %v2463, %v2997
  %2999 = vmatpush.msra.mxu0 %v2998
  %v3000 = vand.u32 %v2462, 4294901760
  %v3001 = vsub.f32 %v2462, %v3000
  %3002 = vmatpush.msra.mxu0 %v3001
  %v3003 = vand.u32 %v2461, 4294901760
  %v3004 = vsub.f32 %v2461, %v3003
  %3005 = vmatpush.msra.mxu0 %v3004
  %v3006 = vand.u32 %v2460, 4294901760
  %v3007 = vsub.f32 %v2460, %v3006
  %3008 = vmatpush.msra.mxu0 %v3007
  %v3009 = vand.u32 %v2459, 4294901760
  %v3010 = vsub.f32 %v2459, %v3009
  %3011 = vmatpush.msra.mxu0 %v3010
  %v3012 = vand.u32 %v2458, 4294901760
  %v3013 = vsub.f32 %v2458, %v3012
  %3014 = vmatpush.msra.mxu0 %v3013
  %v3015 = vand.u32 %v2457, 4294901760
  %v3016 = vsub.f32 %v2457, %v3015
  %3017 = vmatpush.msra.mxu0 %v3016
  %v3018 = vand.u32 %v2456, 4294901760
  %v3019 = vsub.f32 %v2456, %v3018
  %3020 = vmatpush.msra.mxu0 %v3019
  %v3021 = vand.u32 %v2455, 4294901760
  %v3022 = vsub.f32 %v2455, %v3021
  %3023 = vmatpush.msra.mxu0 %v3022
  %v3024 = vand.u32 %v2454, 4294901760
  %v3025 = vsub.f32 %v2454, %v3024
  %3026 = vmatpush.msra.mxu0 %v3025
  %v3027 = vand.u32 %v2453, 4294901760
  %v3028 = vsub.f32 %v2453, %v3027
  %3029 = vmatpush.msra.mxu0 %v3028
  %v3030 = vand.u32 %v2452, 4294901760
  %v3031 = vsub.f32 %v2452, %v3030
  %3032 = vmatpush.msra.mxu0 %v3031
  %v3033 = vand.u32 %v2451, 4294901760
  %v3034 = vsub.f32 %v2451, %v3033
  %3035 = vmatpush.msra.mxu0 %v3034
  %v3036 = vand.u32 %v2450, 4294901760
  %v3037 = vsub.f32 %v2450, %v3036
  %3038 = vmatpush.msra.mxu0 %v3037
  %v3039 = vand.u32 %v2449, 4294901760
  %v3040 = vsub.f32 %v2449, %v3039
  %3041 = vmatpush.msra.mxu0 %v3040
  %v3042 = vand.u32 %v2429, 4294901760
  %v3043 = vsub.f32 %v2429, %v3042
  %3044 = vmatmul.f32.gmra.mxu0 %v3043
  %v3045 = vpop.f32.mrf.mxu0
  %v3046 = vadd.f32 %v2992, %v3045
  %3047 = vdwg.mxu0
  %v3048 = vand.u32 %v2464, 4294901760
  %3049 = vmatpush.msra.mxu0 %v3048
  %v3050 = vand.u32 %v2463, 4294901760
  %3051 = vmatpush.msra.mxu0 %v3050
  %v3052 = vand.u32 %v2462, 4294901760
  %3053 = vmatpush.msra.mxu0 %v3052
  %v3054 = vand.u32 %v2461, 4294901760
  %3055 = vmatpush.msra.mxu0 %v3054
  %v3056 = vand.u32 %v2460, 4294901760
  %3057 = vmatpush.msra.mxu0 %v3056
  %v3058 = vand.u32 %v2459, 4294901760
  %3059 = vmatpush.msra.mxu0 %v3058
  %v3060 = vand.u32 %v2458, 4294901760
  %3061 = vmatpush.msra.mxu0 %v3060
  %v3062 = vand.u32 %v2457, 4294901760
  %3063 = vmatpush.msra.mxu0 %v3062
  %v3064 = vand.u32 %v2456, 4294901760
  %3065 = vmatpush.msra.mxu0 %v3064
  %v3066 = vand.u32 %v2455, 4294901760
  %3067 = vmatpush.msra.mxu0 %v3066
  %v3068 = vand.u32 %v2454, 4294901760
  %3069 = vmatpush.msra.mxu0 %v3068
  %v3070 = vand.u32 %v2453, 4294901760
  %3071 = vmatpush.msra.mxu0 %v3070
  %v3072 = vand.u32 %v2452, 4294901760
  %3073 = vmatpush.msra.mxu0 %v3072
  %v3074 = vand.u32 %v2451, 4294901760
  %3075 = vmatpush.msra.mxu0 %v3074
  %v3076 = vand.u32 %v2450, 4294901760
  %3077 = vmatpush.msra.mxu0 %v3076
  %v3078 = vand.u32 %v2449, 4294901760
  %3079 = vmatpush.msra.mxu0 %v3078
  %v3080 = vand.u32 %v2429, 4294901760
  %v3081 = vsub.f32 %v2429, %v3080
  %v3082 = vand.u32 %v3081, 4294901760
  %3083 = vmatmul.f32.gmra.mxu0 %v3082
  %v3084 = vpop.f32.mrf.mxu0
  %v3085 = vadd.f32 %v3046, %v3084
  %3086 = vdwg.mxu0
  %v3087 = vand.u32 %v2464, 4294901760
  %v3088 = vsub.f32 %v2464, %v3087
  %v3089 = vand.u32 %v3088, 4294901760
  %3090 = vmatpush.msra.mxu0 %v3089
  %v3091 = vand.u32 %v2463, 4294901760
  %v3092 = vsub.f32 %v2463, %v3091
  %v3093 = vand.u32 %v3092, 4294901760
  %3094 = vmatpush.msra.mxu0 %v3093
  %v3095 = vand.u32 %v2462, 4294901760
  %v3096 = vsub.f32 %v2462, %v3095
  %v3097 = vand.u32 %v3096, 4294901760
  %3098 = vmatpush.msra.mxu0 %v3097
  %v3099 = vand.u32 %v2461, 4294901760
  %v3100 = vsub.f32 %v2461, %v3099
  %v3101 = vand.u32 %v3100, 4294901760
  %3102 = vmatpush.msra.mxu0 %v3101
  %v3103 = vand.u32 %v2460, 4294901760
  %v3104 = vsub.f32 %v2460, %v3103
  %v3105 = vand.u32 %v3104, 4294901760
  %3106 = vmatpush.msra.mxu0 %v3105
  %v3107 = vand.u32 %v2459, 4294901760
  %v3108 = vsub.f32 %v2459, %v3107
  %v3109 = vand.u32 %v3108, 4294901760
  %3110 = vmatpush.msra.mxu0 %v3109
  %v3111 = vand.u32 %v2458, 4294901760
  %v3112 = vsub.f32 %v2458, %v3111
  %v3113 = vand.u32 %v3112, 4294901760
  %3114 = vmatpush.msra.mxu0 %v3113
  %v3115 = vand.u32 %v2457, 4294901760
  %v3116 = vsub.f32 %v2457, %v3115
  %v3117 = vand.u32 %v3116, 4294901760
  %3118 = vmatpush.msra.mxu0 %v3117
  %v3119 = vand.u32 %v2456, 4294901760
  %v3120 = vsub.f32 %v2456, %v3119
  %v3121 = vand.u32 %v3120, 4294901760
  %3122 = vmatpush.msra.mxu0 %v3121
  %v3123 = vand.u32 %v2455, 4294901760
  %v3124 = vsub.f32 %v2455, %v3123
  %v3125 = vand.u32 %v3124, 4294901760
  %3126 = vmatpush.msra.mxu0 %v3125
  %v3127 = vand.u32 %v2454, 4294901760
  %v3128 = vsub.f32 %v2454, %v3127
  %v3129 = vand.u32 %v3128, 4294901760
  %3130 = vmatpush.msra.mxu0 %v3129
  %v3131 = vand.u32 %v2453, 4294901760
  %v3132 = vsub.f32 %v2453, %v3131
  %v3133 = vand.u32 %v3132, 4294901760
  %3134 = vmatpush.msra.mxu0 %v3133
  %v3135 = vand.u32 %v2452, 4294901760
  %v3136 = vsub.f32 %v2452, %v3135
  %v3137 = vand.u32 %v3136, 4294901760
  %3138 = vmatpush.msra.mxu0 %v3137
  %v3139 = vand.u32 %v2451, 4294901760
  %v3140 = vsub.f32 %v2451, %v3139
  %v3141 = vand.u32 %v3140, 4294901760
  %3142 = vmatpush.msra.mxu0 %v3141
  %v3143 = vand.u32 %v2450, 4294901760
  %v3144 = vsub.f32 %v2450, %v3143
  %v3145 = vand.u32 %v3144, 4294901760
  %3146 = vmatpush.msra.mxu0 %v3145
  %v3147 = vand.u32 %v2449, 4294901760
  %v3148 = vsub.f32 %v2449, %v3147
  %v3149 = vand.u32 %v3148, 4294901760
  %3150 = vmatpush.msra.mxu0 %v3149
  %v3151 = vand.u32 %v2429, 4294901760
  %3152 = vmatmul.f32.gmra.mxu0 %v3151
  %v3153 = vpop.f32.mrf.mxu0
  %v3154 = vadd.f32 %v3085, %v3153
  %3155 = vdwg.mxu0
  %v3156 = vand.u32 %v2464, 4294901760
  %3157 = vmatpush.msra.mxu0 %v3156
  %v3158 = vand.u32 %v2463, 4294901760
  %3159 = vmatpush.msra.mxu0 %v3158
  %v3160 = vand.u32 %v2462, 4294901760
  %3161 = vmatpush.msra.mxu0 %v3160
  %v3162 = vand.u32 %v2461, 4294901760
  %3163 = vmatpush.msra.mxu0 %v3162
  %v3164 = vand.u32 %v2460, 4294901760
  %3165 = vmatpush.msra.mxu0 %v3164
  %v3166 = vand.u32 %v2459, 4294901760
  %3167 = vmatpush.msra.mxu0 %v3166
  %v3168 = vand.u32 %v2458, 4294901760
  %3169 = vmatpush.msra.mxu0 %v3168
  %v3170 = vand.u32 %v2457, 4294901760
  %3171 = vmatpush.msra.mxu0 %v3170
  %v3172 = vand.u32 %v2456, 4294901760
  %3173 = vmatpush.msra.mxu0 %v3172
  %v3174 = vand.u32 %v2455, 4294901760
  %3175 = vmatpush.msra.mxu0 %v3174
  %v3176 = vand.u32 %v2454, 4294901760
  %3177 = vmatpush.msra.mxu0 %v3176
  %v3178 = vand.u32 %v2453, 4294901760
  %3179 = vmatpush.msra.mxu0 %v3178
  %v3180 = vand.u32 %v2452, 4294901760
  %3181 = vmatpush.msra.mxu0 %v3180
  %v3182 = vand.u32 %v2451, 4294901760
  %3183 = vmatpush.msra.mxu0 %v3182
  %v3184 = vand.u32 %v2450, 4294901760
  %3185 = vmatpush.msra.mxu0 %v3184
  %v3186 = vand.u32 %v2449, 4294901760
  %3187 = vmatpush.msra.mxu0 %v3186
  %v3188 = vand.u32 %v2429, 4294901760
  %3189 = vmatmul.f32.gmra.mxu0 %v3188
  %v3190 = vpop.f32.mrf.mxu0
  %v3191 = vadd.f32 %v3154, %v3190
  %3192 = vdwg.mxu0
  %v3193 = vand.u32 %v2480, 4294901760
  %3194 = vmatpush.msra.mxu0 %v3193
  %v3195 = vand.u32 %v2479, 4294901760
  %3196 = vmatpush.msra.mxu0 %v3195
  %v3197 = vand.u32 %v2478, 4294901760
  %3198 = vmatpush.msra.mxu0 %v3197
  %v3199 = vand.u32 %v2477, 4294901760
  %3200 = vmatpush.msra.mxu0 %v3199
  %v3201 = vand.u32 %v2476, 4294901760
  %3202 = vmatpush.msra.mxu0 %v3201
  %v3203 = vand.u32 %v2475, 4294901760
  %3204 = vmatpush.msra.mxu0 %v3203
  %v3205 = vand.u32 %v2474, 4294901760
  %3206 = vmatpush.msra.mxu0 %v3205
  %v3207 = vand.u32 %v2473, 4294901760
  %3208 = vmatpush.msra.mxu0 %v3207
  %v3209 = vand.u32 %v2472, 4294901760
  %3210 = vmatpush.msra.mxu0 %v3209
  %v3211 = vand.u32 %v2471, 4294901760
  %3212 = vmatpush.msra.mxu0 %v3211
  %v3213 = vand.u32 %v2470, 4294901760
  %3214 = vmatpush.msra.mxu0 %v3213
  %v3215 = vand.u32 %v2469, 4294901760
  %3216 = vmatpush.msra.mxu0 %v3215
  %v3217 = vand.u32 %v2468, 4294901760
  %3218 = vmatpush.msra.mxu0 %v3217
  %v3219 = vand.u32 %v2467, 4294901760
  %3220 = vmatpush.msra.mxu0 %v3219
  %v3221 = vand.u32 %v2466, 4294901760
  %3222 = vmatpush.msra.mxu0 %v3221
  %v3223 = vand.u32 %v2465, 4294901760
  %3224 = vmatpush.msra.mxu0 %v3223
  %v3225 = vand.u32 %v2430, 4294901760
  %v3226 = vsub.f32 %v2430, %v3225
  %v3227 = vand.u32 %v3226, 4294901760
  %v3228 = vsub.f32 %v3226, %v3227
  %v3229 = vand.u32 %v3228, 4294901760
  %3230 = vmatmul.f32.gmra.mxu0 %v3229
  %v3231 = vpop.f32.mrf.mxu0
  %v3232 = vadd.f32 %v3191, %v3231
  %3233 = vdwg.mxu0
  %v3234 = vand.u32 %v2480, 4294901760
  %v3235 = vsub.f32 %v2480, %v3234
  %v3236 = vand.u32 %v3235, 4294901760
  %v3237 = vsub.f32 %v3235, %v3236
  %v3238 = vand.u32 %v3237, 4294901760
  %3239 = vmatpush.msra.mxu0 %v3238
  %v3240 = vand.u32 %v2479, 4294901760
  %v3241 = vsub.f32 %v2479, %v3240
  %v3242 = vand.u32 %v3241, 4294901760
  %v3243 = vsub.f32 %v3241, %v3242
  %v3244 = vand.u32 %v3243, 4294901760
  %3245 = vmatpush.msra.mxu0 %v3244
  %v3246 = vand.u32 %v2478, 4294901760
  %v3247 = vsub.f32 %v2478, %v3246
  %v3248 = vand.u32 %v3247, 4294901760
  %v3249 = vsub.f32 %v3247, %v3248
  %v3250 = vand.u32 %v3249, 4294901760
  %3251 = vmatpush.msra.mxu0 %v3250
  %v3252 = vand.u32 %v2477, 4294901760
  %v3253 = vsub.f32 %v2477, %v3252
  %v3254 = vand.u32 %v3253, 4294901760
  %v3255 = vsub.f32 %v3253, %v3254
  %v3256 = vand.u32 %v3255, 4294901760
  %3257 = vmatpush.msra.mxu0 %v3256
  %v3258 = vand.u32 %v2476, 4294901760
  %v3259 = vsub.f32 %v2476, %v3258
  %v3260 = vand.u32 %v3259, 4294901760
  %v3261 = vsub.f32 %v3259, %v3260
  %v3262 = vand.u32 %v3261, 4294901760
  %3263 = vmatpush.msra.mxu0 %v3262
  %v3264 = vand.u32 %v2475, 4294901760
  %v3265 = vsub.f32 %v2475, %v3264
  %v3266 = vand.u32 %v3265, 4294901760
  %v3267 = vsub.f32 %v3265, %v3266
  %v3268 = vand.u32 %v3267, 4294901760
  %3269 = vmatpush.msra.mxu0 %v3268
  %v3270 = vand.u32 %v2474, 4294901760
  %v3271 = vsub.f32 %v2474, %v3270
  %v3272 = vand.u32 %v3271, 4294901760
  %v3273 = vsub.f32 %v3271, %v3272
  %v3274 = vand.u32 %v3273, 4294901760
  %3275 = vmatpush.msra.mxu0 %v3274
  %v3276 = vand.u32 %v2473, 4294901760
  %v3277 = vsub.f32 %v2473, %v3276
  %v3278 = vand.u32 %v3277, 4294901760
  %v3279 = vsub.f32 %v3277, %v3278
  %v3280 = vand.u32 %v3279, 4294901760
  %3281 = vmatpush.msra.mxu0 %v3280
  %v3282 = vand.u32 %v2472, 4294901760
  %v3283 = vsub.f32 %v2472, %v3282
  %v3284 = vand.u32 %v3283, 4294901760
  %v3285 = vsub.f32 %v3283, %v3284
  %v3286 = vand.u32 %v3285, 4294901760
  %3287 = vmatpush.msra.mxu0 %v3286
  %v3288 = vand.u32 %v2471, 4294901760
  %v3289 = vsub.f32 %v2471, %v3288
  %v3290 = vand.u32 %v3289, 4294901760
  %v3291 = vsub.f32 %v3289, %v3290
  %v3292 = vand.u32 %v3291, 4294901760
  %3293 = vmatpush.msra.mxu0 %v3292
  %v3294 = vand.u32 %v2470, 4294901760
  %v3295 = vsub.f32 %v2470, %v3294
  %v3296 = vand.u32 %v3295, 4294901760
  %v3297 = vsub.f32 %v3295, %v3296
  %v3298 = vand.u32 %v3297, 4294901760
  %3299 = vmatpush.msra.mxu0 %v3298
  %v3300 = vand.u32 %v2469, 4294901760
  %v3301 = vsub.f32 %v2469, %v3300
  %v3302 = vand.u32 %v3301, 4294901760
  %v3303 = vsub.f32 %v3301, %v3302
  %v3304 = vand.u32 %v3303, 4294901760
  %3305 = vmatpush.msra.mxu0 %v3304
  %v3306 = vand.u32 %v2468, 4294901760
  %v3307 = vsub.f32 %v2468, %v3306
  %v3308 = vand.u32 %v3307, 4294901760
  %v3309 = vsub.f32 %v3307, %v3308
  %v3310 = vand.u32 %v3309, 4294901760
  %3311 = vmatpush.msra.mxu0 %v3310
  %v3312 = vand.u32 %v2467, 4294901760
  %v3313 = vsub.f32 %v2467, %v3312
  %v3314 = vand.u32 %v3313, 4294901760
  %v3315 = vsub.f32 %v3313, %v3314
  %v3316 = vand.u32 %v3315, 4294901760
  %3317 = vmatpush.msra.mxu0 %v3316
  %v3318 = vand.u32 %v2466, 4294901760
  %v3319 = vsub.f32 %v2466, %v3318
  %v3320 = vand.u32 %v3319, 4294901760
  %v3321 = vsub.f32 %v3319, %v3320
  %v3322 = vand.u32 %v3321, 4294901760
  %3323 = vmatpush.msra.mxu0 %v3322
  %v3324 = vand.u32 %v2465, 4294901760
  %v3325 = vsub.f32 %v2465, %v3324
  %v3326 = vand.u32 %v3325, 4294901760
  %v3327 = vsub.f32 %v3325, %v3326
  %v3328 = vand.u32 %v3327, 4294901760
  %3329 = vmatpush.msra.mxu0 %v3328
  %v3330 = vand.u32 %v2430, 4294901760
  %3331 = vmatmul.f32.gmra.mxu0 %v3330
  %v3332 = vpop.f32.mrf.mxu0
  %v3333 = vadd.f32 %v3232, %v3332
  %3334 = vdwg.mxu0
  %v3335 = vand.u32 %v2480, 4294901760
  %v3336 = vsub.f32 %v2480, %v3335
  %3337 = vmatpush.msra.mxu0 %v3336
  %v3338 = vand.u32 %v2479, 4294901760
  %v3339 = vsub.f32 %v2479, %v3338
  %3340 = vmatpush.msra.mxu0 %v3339
  %v3341 = vand.u32 %v2478, 4294901760
  %v3342 = vsub.f32 %v2478, %v3341
  %3343 = vmatpush.msra.mxu0 %v3342
  %v3344 = vand.u32 %v2477, 4294901760
  %v3345 = vsub.f32 %v2477, %v3344
  %3346 = vmatpush.msra.mxu0 %v3345
  %v3347 = vand.u32 %v2476, 4294901760
  %v3348 = vsub.f32 %v2476, %v3347
  %3349 = vmatpush.msra.mxu0 %v3348
  %v3350 = vand.u32 %v2475, 4294901760
  %v3351 = vsub.f32 %v2475, %v3350
  %3352 = vmatpush.msra.mxu0 %v3351
  %v3353 = vand.u32 %v2474, 4294901760
  %v3354 = vsub.f32 %v2474, %v3353
  %3355 = vmatpush.msra.mxu0 %v3354
  %v3356 = vand.u32 %v2473, 4294901760
  %v3357 = vsub.f32 %v2473, %v3356
  %3358 = vmatpush.msra.mxu0 %v3357
  %v3359 = vand.u32 %v2472, 4294901760
  %v3360 = vsub.f32 %v2472, %v3359
  %3361 = vmatpush.msra.mxu0 %v3360
  %v3362 = vand.u32 %v2471, 4294901760
  %v3363 = vsub.f32 %v2471, %v3362
  %3364 = vmatpush.msra.mxu0 %v3363
  %v3365 = vand.u32 %v2470, 4294901760
  %v3366 = vsub.f32 %v2470, %v3365
  %3367 = vmatpush.msra.mxu0 %v3366
  %v3368 = vand.u32 %v2469, 4294901760
  %v3369 = vsub.f32 %v2469, %v3368
  %3370 = vmatpush.msra.mxu0 %v3369
  %v3371 = vand.u32 %v2468, 4294901760
  %v3372 = vsub.f32 %v2468, %v3371
  %3373 = vmatpush.msra.mxu0 %v3372
  %v3374 = vand.u32 %v2467, 4294901760
  %v3375 = vsub.f32 %v2467, %v3374
  %3376 = vmatpush.msra.mxu0 %v3375
  %v3377 = vand.u32 %v2466, 4294901760
  %v3378 = vsub.f32 %v2466, %v3377
  %3379 = vmatpush.msra.mxu0 %v3378
  %v3380 = vand.u32 %v2465, 4294901760
  %v3381 = vsub.f32 %v2465, %v3380
  %3382 = vmatpush.msra.mxu0 %v3381
  %v3383 = vand.u32 %v2430, 4294901760
  %v3384 = vsub.f32 %v2430, %v3383
  %3385 = vmatmul.f32.gmra.mxu0 %v3384
  %v3386 = vpop.f32.mrf.mxu0
  %v3387 = vadd.f32 %v3333, %v3386
  %3388 = vdwg.mxu0
  %v3389 = vand.u32 %v2480, 4294901760
  %3390 = vmatpush.msra.mxu0 %v3389
  %v3391 = vand.u32 %v2479, 4294901760
  %3392 = vmatpush.msra.mxu0 %v3391
  %v3393 = vand.u32 %v2478, 4294901760
  %3394 = vmatpush.msra.mxu0 %v3393
  %v3395 = vand.u32 %v2477, 4294901760
  %3396 = vmatpush.msra.mxu0 %v3395
  %v3397 = vand.u32 %v2476, 4294901760
  %3398 = vmatpush.msra.mxu0 %v3397
  %v3399 = vand.u32 %v2475, 4294901760
  %3400 = vmatpush.msra.mxu0 %v3399
  %v3401 = vand.u32 %v2474, 4294901760
  %3402 = vmatpush.msra.mxu0 %v3401
  %v3403 = vand.u32 %v2473, 4294901760
  %3404 = vmatpush.msra.mxu0 %v3403
  %v3405 = vand.u32 %v2472, 4294901760
  %3406 = vmatpush.msra.mxu0 %v3405
  %v3407 = vand.u32 %v2471, 4294901760
  %3408 = vmatpush.msra.mxu0 %v3407
  %v3409 = vand.u32 %v2470, 4294901760
  %3410 = vmatpush.msra.mxu0 %v3409
  %v3411 = vand.u32 %v2469, 4294901760
  %3412 = vmatpush.msra.mxu0 %v3411
  %v3413 = vand.u32 %v2468, 4294901760
  %3414 = vmatpush.msra.mxu0 %v3413
  %v3415 = vand.u32 %v2467, 4294901760
  %3416 = vmatpush.msra.mxu0 %v3415
  %v3417 = vand.u32 %v2466, 4294901760
  %3418 = vmatpush.msra.mxu0 %v3417
  %v3419 = vand.u32 %v2465, 4294901760
  %3420 = vmatpush.msra.mxu0 %v3419
  %v3421 = vand.u32 %v2430, 4294901760
  %v3422 = vsub.f32 %v2430, %v3421
  %v3423 = vand.u32 %v3422, 4294901760
  %3424 = vmatmul.f32.gmra.mxu0 %v3423
  %v3425 = vpop.f32.mrf.mxu0
  %v3426 = vadd.f32 %v3387, %v3425
  %3427 = vdwg.mxu0
  %v3428 = vand.u32 %v2480, 4294901760
  %v3429 = vsub.f32 %v2480, %v3428
  %v3430 = vand.u32 %v3429, 4294901760
  %3431 = vmatpush.msra.mxu0 %v3430
  %v3432 = vand.u32 %v2479, 4294901760
  %v3433 = vsub.f32 %v2479, %v3432
  %v3434 = vand.u32 %v3433, 4294901760
  %3435 = vmatpush.msra.mxu0 %v3434
  %v3436 = vand.u32 %v2478, 4294901760
  %v3437 = vsub.f32 %v2478, %v3436
  %v3438 = vand.u32 %v3437, 4294901760
  %3439 = vmatpush.msra.mxu0 %v3438
  %v3440 = vand.u32 %v2477, 4294901760
  %v3441 = vsub.f32 %v2477, %v3440
  %v3442 = vand.u32 %v3441, 4294901760
  %3443 = vmatpush.msra.mxu0 %v3442
  %v3444 = vand.u32 %v2476, 4294901760
  %v3445 = vsub.f32 %v2476, %v3444
  %v3446 = vand.u32 %v3445, 4294901760
  %3447 = vmatpush.msra.mxu0 %v3446
  %v3448 = vand.u32 %v2475, 4294901760
  %v3449 = vsub.f32 %v2475, %v3448
  %v3450 = vand.u32 %v3449, 4294901760
  %3451 = vmatpush.msra.mxu0 %v3450
  %v3452 = vand.u32 %v2474, 4294901760
  %v3453 = vsub.f32 %v2474, %v3452
  %v3454 = vand.u32 %v3453, 4294901760
  %3455 = vmatpush.msra.mxu0 %v3454
  %v3456 = vand.u32 %v2473, 4294901760
  %v3457 = vsub.f32 %v2473, %v3456
  %v3458 = vand.u32 %v3457, 4294901760
  %3459 = vmatpush.msra.mxu0 %v3458
  %v3460 = vand.u32 %v2472, 4294901760
  %v3461 = vsub.f32 %v2472, %v3460
  %v3462 = vand.u32 %v3461, 4294901760
  %3463 = vmatpush.msra.mxu0 %v3462
  %v3464 = vand.u32 %v2471, 4294901760
  %v3465 = vsub.f32 %v2471, %v3464
  %v3466 = vand.u32 %v3465, 4294901760
  %3467 = vmatpush.msra.mxu0 %v3466
  %v3468 = vand.u32 %v2470, 4294901760
  %v3469 = vsub.f32 %v2470, %v3468
  %v3470 = vand.u32 %v3469, 4294901760
  %3471 = vmatpush.msra.mxu0 %v3470
  %v3472 = vand.u32 %v2469, 4294901760
  %v3473 = vsub.f32 %v2469, %v3472
  %v3474 = vand.u32 %v3473, 4294901760
  %3475 = vmatpush.msra.mxu0 %v3474
  %v3476 = vand.u32 %v2468, 4294901760
  %v3477 = vsub.f32 %v2468, %v3476
  %v3478 = vand.u32 %v3477, 4294901760
  %3479 = vmatpush.msra.mxu0 %v3478
  %v3480 = vand.u32 %v2467, 4294901760
  %v3481 = vsub.f32 %v2467, %v3480
  %v3482 = vand.u32 %v3481, 4294901760
  %3483 = vmatpush.msra.mxu0 %v3482
  %v3484 = vand.u32 %v2466, 4294901760
  %v3485 = vsub.f32 %v2466, %v3484
  %v3486 = vand.u32 %v3485, 4294901760
  %3487 = vmatpush.msra.mxu0 %v3486
  %v3488 = vand.u32 %v2465, 4294901760
  %v3489 = vsub.f32 %v2465, %v3488
  %v3490 = vand.u32 %v3489, 4294901760
  %3491 = vmatpush.msra.mxu0 %v3490
  %v3492 = vand.u32 %v2430, 4294901760
  %3493 = vmatmul.f32.gmra.mxu0 %v3492
  %v3494 = vpop.f32.mrf.mxu0
  %v3495 = vadd.f32 %v3426, %v3494
  %3496 = vdwg.mxu0
  %v3497 = vand.u32 %v2480, 4294901760
  %3498 = vmatpush.msra.mxu0 %v3497
  %v3499 = vand.u32 %v2479, 4294901760
  %3500 = vmatpush.msra.mxu0 %v3499
  %v3501 = vand.u32 %v2478, 4294901760
  %3502 = vmatpush.msra.mxu0 %v3501
  %v3503 = vand.u32 %v2477, 4294901760
  %3504 = vmatpush.msra.mxu0 %v3503
  %v3505 = vand.u32 %v2476, 4294901760
  %3506 = vmatpush.msra.mxu0 %v3505
  %v3507 = vand.u32 %v2475, 4294901760
  %3508 = vmatpush.msra.mxu0 %v3507
  %v3509 = vand.u32 %v2474, 4294901760
  %3510 = vmatpush.msra.mxu0 %v3509
  %v3511 = vand.u32 %v2473, 4294901760
  %3512 = vmatpush.msra.mxu0 %v3511
  %v3513 = vand.u32 %v2472, 4294901760
  %3514 = vmatpush.msra.mxu0 %v3513
  %v3515 = vand.u32 %v2471, 4294901760
  %3516 = vmatpush.msra.mxu0 %v3515
  %v3517 = vand.u32 %v2470, 4294901760
  %3518 = vmatpush.msra.mxu0 %v3517
  %v3519 = vand.u32 %v2469, 4294901760
  %3520 = vmatpush.msra.mxu0 %v3519
  %v3521 = vand.u32 %v2468, 4294901760
  %3522 = vmatpush.msra.mxu0 %v3521
  %v3523 = vand.u32 %v2467, 4294901760
  %3524 = vmatpush.msra.mxu0 %v3523
  %v3525 = vand.u32 %v2466, 4294901760
  %3526 = vmatpush.msra.mxu0 %v3525
  %v3527 = vand.u32 %v2465, 4294901760
  %3528 = vmatpush.msra.mxu0 %v3527
  %v3529 = vand.u32 %v2430, 4294901760
  %3530 = vmatmul.f32.gmra.mxu0 %v3529
  %v3531 = vpop.f32.mrf.mxu0
  %v3532 = vadd.f32 %v3495, %v3531
  %3533 = vdwg.mxu0
  %v3534 = vand.u32 %v2496, 4294901760
  %3535 = vmatpush.msra.mxu0 %v3534
  %v3536 = vand.u32 %v2495, 4294901760
  %3537 = vmatpush.msra.mxu0 %v3536
  %v3538 = vand.u32 %v2494, 4294901760
  %3539 = vmatpush.msra.mxu0 %v3538
  %v3540 = vand.u32 %v2493, 4294901760
  %3541 = vmatpush.msra.mxu0 %v3540
  %v3542 = vand.u32 %v2492, 4294901760
  %3543 = vmatpush.msra.mxu0 %v3542
  %v3544 = vand.u32 %v2491, 4294901760
  %3545 = vmatpush.msra.mxu0 %v3544
  %v3546 = vand.u32 %v2490, 4294901760
  %3547 = vmatpush.msra.mxu0 %v3546
  %v3548 = vand.u32 %v2489, 4294901760
  %3549 = vmatpush.msra.mxu0 %v3548
  %v3550 = vand.u32 %v2488, 4294901760
  %3551 = vmatpush.msra.mxu0 %v3550
  %v3552 = vand.u32 %v2487, 4294901760
  %3553 = vmatpush.msra.mxu0 %v3552
  %v3554 = vand.u32 %v2486, 4294901760
  %3555 = vmatpush.msra.mxu0 %v3554
  %v3556 = vand.u32 %v2485, 4294901760
  %3557 = vmatpush.msra.mxu0 %v3556
  %v3558 = vand.u32 %v2484, 4294901760
  %3559 = vmatpush.msra.mxu0 %v3558
  %v3560 = vand.u32 %v2483, 4294901760
  %3561 = vmatpush.msra.mxu0 %v3560
  %v3562 = vand.u32 %v2482, 4294901760
  %3563 = vmatpush.msra.mxu0 %v3562
  %v3564 = vand.u32 %v2481, 4294901760
  %3565 = vmatpush.msra.mxu0 %v3564
  %v3566 = vand.u32 %v2431, 4294901760
  %v3567 = vsub.f32 %v2431, %v3566
  %v3568 = vand.u32 %v3567, 4294901760
  %v3569 = vsub.f32 %v3567, %v3568
  %v3570 = vand.u32 %v3569, 4294901760
  %3571 = vmatmul.f32.gmra.mxu0 %v3570
  %v3572 = vpop.f32.mrf.mxu0
  %v3573 = vadd.f32 %v3532, %v3572
  %3574 = vdwg.mxu0
  %v3575 = vand.u32 %v2496, 4294901760
  %v3576 = vsub.f32 %v2496, %v3575
  %v3577 = vand.u32 %v3576, 4294901760
  %v3578 = vsub.f32 %v3576, %v3577
  %v3579 = vand.u32 %v3578, 4294901760
  %3580 = vmatpush.msra.mxu0 %v3579
  %v3581 = vand.u32 %v2495, 4294901760
  %v3582 = vsub.f32 %v2495, %v3581
  %v3583 = vand.u32 %v3582, 4294901760
  %v3584 = vsub.f32 %v3582, %v3583
  %v3585 = vand.u32 %v3584, 4294901760
  %3586 = vmatpush.msra.mxu0 %v3585
  %v3587 = vand.u32 %v2494, 4294901760
  %v3588 = vsub.f32 %v2494, %v3587
  %v3589 = vand.u32 %v3588, 4294901760
  %v3590 = vsub.f32 %v3588, %v3589
  %v3591 = vand.u32 %v3590, 4294901760
  %3592 = vmatpush.msra.mxu0 %v3591
  %v3593 = vand.u32 %v2493, 4294901760
  %v3594 = vsub.f32 %v2493, %v3593
  %v3595 = vand.u32 %v3594, 4294901760
  %v3596 = vsub.f32 %v3594, %v3595
  %v3597 = vand.u32 %v3596, 4294901760
  %3598 = vmatpush.msra.mxu0 %v3597
  %v3599 = vand.u32 %v2492, 4294901760
  %v3600 = vsub.f32 %v2492, %v3599
  %v3601 = vand.u32 %v3600, 4294901760
  %v3602 = vsub.f32 %v3600, %v3601
  %v3603 = vand.u32 %v3602, 4294901760
  %3604 = vmatpush.msra.mxu0 %v3603
  %v3605 = vand.u32 %v2491, 4294901760
  %v3606 = vsub.f32 %v2491, %v3605
  %v3607 = vand.u32 %v3606, 4294901760
  %v3608 = vsub.f32 %v3606, %v3607
  %v3609 = vand.u32 %v3608, 4294901760
  %3610 = vmatpush.msra.mxu0 %v3609
  %v3611 = vand.u32 %v2490, 4294901760
  %v3612 = vsub.f32 %v2490, %v3611
  %v3613 = vand.u32 %v3612, 4294901760
  %v3614 = vsub.f32 %v3612, %v3613
  %v3615 = vand.u32 %v3614, 4294901760
  %3616 = vmatpush.msra.mxu0 %v3615
  %v3617 = vand.u32 %v2489, 4294901760
  %v3618 = vsub.f32 %v2489, %v3617
  %v3619 = vand.u32 %v3618, 4294901760
  %v3620 = vsub.f32 %v3618, %v3619
  %v3621 = vand.u32 %v3620, 4294901760
  %3622 = vmatpush.msra.mxu0 %v3621
  %v3623 = vand.u32 %v2488, 4294901760
  %v3624 = vsub.f32 %v2488, %v3623
  %v3625 = vand.u32 %v3624, 4294901760
  %v3626 = vsub.f32 %v3624, %v3625
  %v3627 = vand.u32 %v3626, 4294901760
  %3628 = vmatpush.msra.mxu0 %v3627
  %v3629 = vand.u32 %v2487, 4294901760
  %v3630 = vsub.f32 %v2487, %v3629
  %v3631 = vand.u32 %v3630, 4294901760
  %v3632 = vsub.f32 %v3630, %v3631
  %v3633 = vand.u32 %v3632, 4294901760
  %3634 = vmatpush.msra.mxu0 %v3633
  %v3635 = vand.u32 %v2486, 4294901760
  %v3636 = vsub.f32 %v2486, %v3635
  %v3637 = vand.u32 %v3636, 4294901760
  %v3638 = vsub.f32 %v3636, %v3637
  %v3639 = vand.u32 %v3638, 4294901760
  %3640 = vmatpush.msra.mxu0 %v3639
  %v3641 = vand.u32 %v2485, 4294901760
  %v3642 = vsub.f32 %v2485, %v3641
  %v3643 = vand.u32 %v3642, 4294901760
  %v3644 = vsub.f32 %v3642, %v3643
  %v3645 = vand.u32 %v3644, 4294901760
  %3646 = vmatpush.msra.mxu0 %v3645
  %v3647 = vand.u32 %v2484, 4294901760
  %v3648 = vsub.f32 %v2484, %v3647
  %v3649 = vand.u32 %v3648, 4294901760
  %v3650 = vsub.f32 %v3648, %v3649
  %v3651 = vand.u32 %v3650, 4294901760
  %3652 = vmatpush.msra.mxu0 %v3651
  %v3653 = vand.u32 %v2483, 4294901760
  %v3654 = vsub.f32 %v2483, %v3653
  %v3655 = vand.u32 %v3654, 4294901760
  %v3656 = vsub.f32 %v3654, %v3655
  %v3657 = vand.u32 %v3656, 4294901760
  %3658 = vmatpush.msra.mxu0 %v3657
  %v3659 = vand.u32 %v2482, 4294901760
  %v3660 = vsub.f32 %v2482, %v3659
  %v3661 = vand.u32 %v3660, 4294901760
  %v3662 = vsub.f32 %v3660, %v3661
  %v3663 = vand.u32 %v3662, 4294901760
  %3664 = vmatpush.msra.mxu0 %v3663
  %v3665 = vand.u32 %v2481, 4294901760
  %v3666 = vsub.f32 %v2481, %v3665
  %v3667 = vand.u32 %v3666, 4294901760
  %v3668 = vsub.f32 %v3666, %v3667
  %v3669 = vand.u32 %v3668, 4294901760
  %3670 = vmatpush.msra.mxu0 %v3669
  %v3671 = vand.u32 %v2431, 4294901760
  %3672 = vmatmul.f32.gmra.mxu0 %v3671
  %v3673 = vpop.f32.mrf.mxu0
  %v3674 = vadd.f32 %v3573, %v3673
  %3675 = vdwg.mxu0
  %v3676 = vand.u32 %v2496, 4294901760
  %v3677 = vsub.f32 %v2496, %v3676
  %3678 = vmatpush.msra.mxu0 %v3677
  %v3679 = vand.u32 %v2495, 4294901760
  %v3680 = vsub.f32 %v2495, %v3679
  %3681 = vmatpush.msra.mxu0 %v3680
  %v3682 = vand.u32 %v2494, 4294901760
  %v3683 = vsub.f32 %v2494, %v3682
  %3684 = vmatpush.msra.mxu0 %v3683
  %v3685 = vand.u32 %v2493, 4294901760
  %v3686 = vsub.f32 %v2493, %v3685
  %3687 = vmatpush.msra.mxu0 %v3686
  %v3688 = vand.u32 %v2492, 4294901760
  %v3689 = vsub.f32 %v2492, %v3688
  %3690 = vmatpush.msra.mxu0 %v3689
  %v3691 = vand.u32 %v2491, 4294901760
  %v3692 = vsub.f32 %v2491, %v3691
  %3693 = vmatpush.msra.mxu0 %v3692
  %v3694 = vand.u32 %v2490, 4294901760
  %v3695 = vsub.f32 %v2490, %v3694
  %3696 = vmatpush.msra.mxu0 %v3695
  %v3697 = vand.u32 %v2489, 4294901760
  %v3698 = vsub.f32 %v2489, %v3697
  %3699 = vmatpush.msra.mxu0 %v3698
  %v3700 = vand.u32 %v2488, 4294901760
  %v3701 = vsub.f32 %v2488, %v3700
  %3702 = vmatpush.msra.mxu0 %v3701
  %v3703 = vand.u32 %v2487, 4294901760
  %v3704 = vsub.f32 %v2487, %v3703
  %3705 = vmatpush.msra.mxu0 %v3704
  %v3706 = vand.u32 %v2486, 4294901760
  %v3707 = vsub.f32 %v2486, %v3706
  %3708 = vmatpush.msra.mxu0 %v3707
  %v3709 = vand.u32 %v2485, 4294901760
  %v3710 = vsub.f32 %v2485, %v3709
  %3711 = vmatpush.msra.mxu0 %v3710
  %v3712 = vand.u32 %v2484, 4294901760
  %v3713 = vsub.f32 %v2484, %v3712
  %3714 = vmatpush.msra.mxu0 %v3713
  %v3715 = vand.u32 %v2483, 4294901760
  %v3716 = vsub.f32 %v2483, %v3715
  %3717 = vmatpush.msra.mxu0 %v3716
  %v3718 = vand.u32 %v2482, 4294901760
  %v3719 = vsub.f32 %v2482, %v3718
  %3720 = vmatpush.msra.mxu0 %v3719
  %v3721 = vand.u32 %v2481, 4294901760
  %v3722 = vsub.f32 %v2481, %v3721
  %3723 = vmatpush.msra.mxu0 %v3722
  %v3724 = vand.u32 %v2431, 4294901760
  %v3725 = vsub.f32 %v2431, %v3724
  %3726 = vmatmul.f32.gmra.mxu0 %v3725
  %v3727 = vpop.f32.mrf.mxu0
  %v3728 = vadd.f32 %v3674, %v3727
  %3729 = vdwg.mxu0
  %v3730 = vand.u32 %v2496, 4294901760
  %3731 = vmatpush.msra.mxu0 %v3730
  %v3732 = vand.u32 %v2495, 4294901760
  %3733 = vmatpush.msra.mxu0 %v3732
  %v3734 = vand.u32 %v2494, 4294901760
  %3735 = vmatpush.msra.mxu0 %v3734
  %v3736 = vand.u32 %v2493, 4294901760
  %3737 = vmatpush.msra.mxu0 %v3736
  %v3738 = vand.u32 %v2492, 4294901760
  %3739 = vmatpush.msra.mxu0 %v3738
  %v3740 = vand.u32 %v2491, 4294901760
  %3741 = vmatpush.msra.mxu0 %v3740
  %v3742 = vand.u32 %v2490, 4294901760
  %3743 = vmatpush.msra.mxu0 %v3742
  %v3744 = vand.u32 %v2489, 4294901760
  %3745 = vmatpush.msra.mxu0 %v3744
  %v3746 = vand.u32 %v2488, 4294901760
  %3747 = vmatpush.msra.mxu0 %v3746
  %v3748 = vand.u32 %v2487, 4294901760
  %3749 = vmatpush.msra.mxu0 %v3748
  %v3750 = vand.u32 %v2486, 4294901760
  %3751 = vmatpush.msra.mxu0 %v3750
  %v3752 = vand.u32 %v2485, 4294901760
  %3753 = vmatpush.msra.mxu0 %v3752
  %v3754 = vand.u32 %v2484, 4294901760
  %3755 = vmatpush.msra.mxu0 %v3754
  %v3756 = vand.u32 %v2483, 4294901760
  %3757 = vmatpush.msra.mxu0 %v3756
  %v3758 = vand.u32 %v2482, 4294901760
  %3759 = vmatpush.msra.mxu0 %v3758
  %v3760 = vand.u32 %v2481, 4294901760
  %3761 = vmatpush.msra.mxu0 %v3760
  %v3762 = vand.u32 %v2431, 4294901760
  %v3763 = vsub.f32 %v2431, %v3762
  %v3764 = vand.u32 %v3763, 4294901760
  %3765 = vmatmul.f32.gmra.mxu0 %v3764
  %v3766 = vpop.f32.mrf.mxu0
  %v3767 = vadd.f32 %v3728, %v3766
  %3768 = vdwg.mxu0
  %v3769 = vand.u32 %v2496, 4294901760
  %v3770 = vsub.f32 %v2496, %v3769
  %v3771 = vand.u32 %v3770, 4294901760
  %3772 = vmatpush.msra.mxu0 %v3771
  %v3773 = vand.u32 %v2495, 4294901760
  %v3774 = vsub.f32 %v2495, %v3773
  %v3775 = vand.u32 %v3774, 4294901760
  %3776 = vmatpush.msra.mxu0 %v3775
  %v3777 = vand.u32 %v2494, 4294901760
  %v3778 = vsub.f32 %v2494, %v3777
  %v3779 = vand.u32 %v3778, 4294901760
  %3780 = vmatpush.msra.mxu0 %v3779
  %v3781 = vand.u32 %v2493, 4294901760
  %v3782 = vsub.f32 %v2493, %v3781
  %v3783 = vand.u32 %v3782, 4294901760
  %3784 = vmatpush.msra.mxu0 %v3783
  %v3785 = vand.u32 %v2492, 4294901760
  %v3786 = vsub.f32 %v2492, %v3785
  %v3787 = vand.u32 %v3786, 4294901760
  %3788 = vmatpush.msra.mxu0 %v3787
  %v3789 = vand.u32 %v2491, 4294901760
  %v3790 = vsub.f32 %v2491, %v3789
  %v3791 = vand.u32 %v3790, 4294901760
  %3792 = vmatpush.msra.mxu0 %v3791
  %v3793 = vand.u32 %v2490, 4294901760
  %v3794 = vsub.f32 %v2490, %v3793
  %v3795 = vand.u32 %v3794, 4294901760
  %3796 = vmatpush.msra.mxu0 %v3795
  %v3797 = vand.u32 %v2489, 4294901760
  %v3798 = vsub.f32 %v2489, %v3797
  %v3799 = vand.u32 %v3798, 4294901760
  %3800 = vmatpush.msra.mxu0 %v3799
  %v3801 = vand.u32 %v2488, 4294901760
  %v3802 = vsub.f32 %v2488, %v3801
  %v3803 = vand.u32 %v3802, 4294901760
  %3804 = vmatpush.msra.mxu0 %v3803
  %v3805 = vand.u32 %v2487, 4294901760
  %v3806 = vsub.f32 %v2487, %v3805
  %v3807 = vand.u32 %v3806, 4294901760
  %3808 = vmatpush.msra.mxu0 %v3807
  %v3809 = vand.u32 %v2486, 4294901760
  %v3810 = vsub.f32 %v2486, %v3809
  %v3811 = vand.u32 %v3810, 4294901760
  %3812 = vmatpush.msra.mxu0 %v3811
  %v3813 = vand.u32 %v2485, 4294901760
  %v3814 = vsub.f32 %v2485, %v3813
  %v3815 = vand.u32 %v3814, 4294901760
  %3816 = vmatpush.msra.mxu0 %v3815
  %v3817 = vand.u32 %v2484, 4294901760
  %v3818 = vsub.f32 %v2484, %v3817
  %v3819 = vand.u32 %v3818, 4294901760
  %3820 = vmatpush.msra.mxu0 %v3819
  %v3821 = vand.u32 %v2483, 4294901760
  %v3822 = vsub.f32 %v2483, %v3821
  %v3823 = vand.u32 %v3822, 4294901760
  %3824 = vmatpush.msra.mxu0 %v3823
  %v3825 = vand.u32 %v2482, 4294901760
  %v3826 = vsub.f32 %v2482, %v3825
  %v3827 = vand.u32 %v3826, 4294901760
  %3828 = vmatpush.msra.mxu0 %v3827
  %v3829 = vand.u32 %v2481, 4294901760
  %v3830 = vsub.f32 %v2481, %v3829
  %v3831 = vand.u32 %v3830, 4294901760
  %3832 = vmatpush.msra.mxu0 %v3831
  %v3833 = vand.u32 %v2431, 4294901760
  %3834 = vmatmul.f32.gmra.mxu0 %v3833
  %v3835 = vpop.f32.mrf.mxu0
  %v3836 = vadd.f32 %v3767, %v3835
  %3837 = vdwg.mxu0
  %v3838 = vand.u32 %v2496, 4294901760
  %3839 = vmatpush.msra.mxu0 %v3838
  %v3840 = vand.u32 %v2495, 4294901760
  %3841 = vmatpush.msra.mxu0 %v3840
  %v3842 = vand.u32 %v2494, 4294901760
  %3843 = vmatpush.msra.mxu0 %v3842
  %v3844 = vand.u32 %v2493, 4294901760
  %3845 = vmatpush.msra.mxu0 %v3844
  %v3846 = vand.u32 %v2492, 4294901760
  %3847 = vmatpush.msra.mxu0 %v3846
  %v3848 = vand.u32 %v2491, 4294901760
  %3849 = vmatpush.msra.mxu0 %v3848
  %v3850 = vand.u32 %v2490, 4294901760
  %3851 = vmatpush.msra.mxu0 %v3850
  %v3852 = vand.u32 %v2489, 4294901760
  %3853 = vmatpush.msra.mxu0 %v3852
  %v3854 = vand.u32 %v2488, 4294901760
  %3855 = vmatpush.msra.mxu0 %v3854
  %v3856 = vand.u32 %v2487, 4294901760
  %3857 = vmatpush.msra.mxu0 %v3856
  %v3858 = vand.u32 %v2486, 4294901760
  %3859 = vmatpush.msra.mxu0 %v3858
  %v3860 = vand.u32 %v2485, 4294901760
  %3861 = vmatpush.msra.mxu0 %v3860
  %v3862 = vand.u32 %v2484, 4294901760
  %3863 = vmatpush.msra.mxu0 %v3862
  %v3864 = vand.u32 %v2483, 4294901760
  %3865 = vmatpush.msra.mxu0 %v3864
  %v3866 = vand.u32 %v2482, 4294901760
  %3867 = vmatpush.msra.mxu0 %v3866
  %v3868 = vand.u32 %v2481, 4294901760
  %3869 = vmatpush.msra.mxu0 %v3868
  %v3870 = vand.u32 %v2431, 4294901760
  %3871 = vmatmul.f32.gmra.mxu0 %v3870
  %v3872 = vpop.f32.mrf.mxu0
  %v3873 = vadd.f32 %v3836, %v3872
  %3874 = vdwg.mxu0
  %3875 = vmatpush.msra.mxu0 0.0
  %3876 = vmatpush.msra.mxu0 0.0
  %3877 = vmatpush.msra.mxu0 0.0
  %3878 = vmatpush.msra.mxu0 0.0
  %3879 = vmatpush.msra.mxu0 0.0
  %3880 = vmatpush.msra.mxu0 0.0
  %3881 = vmatpush.msra.mxu0 0.0
  %3882 = vmatpush.msra.mxu0 0.0
  %3883 = vmatpush.msra.mxu0 0.0
  %3884 = vmatpush.msra.mxu0 0.0
  %v3885 = vand.u32 %v2509, 4294901760
  %3886 = vmatpush.msra.mxu0 %v3885
  %v3887 = vand.u32 %v2501, 4294901760
  %3888 = vmatpush.msra.mxu0 %v3887
  %v3889 = vand.u32 %v2500, 4294901760
  %3890 = vmatpush.msra.mxu0 %v3889
  %v3891 = vand.u32 %v2499, 4294901760
  %3892 = vmatpush.msra.mxu0 %v3891
  %v3893 = vand.u32 %v2498, 4294901760
  %3894 = vmatpush.msra.mxu0 %v3893
  %v3895 = vand.u32 %v2497, 4294901760
  %3896 = vmatpush.msra.mxu0 %v3895
  %v3897 = vand.u32 %v2505, 4294901760
  %v3898 = vsub.f32 %v2505, %v3897
  %v3899 = vand.u32 %v3898, 4294901760
  %v3900 = vsub.f32 %v3898, %v3899
  %v3901 = vand.u32 %v3900, 4294901760
  %3902 = vmatmul.f32.gmra.mxu0 %v3901
  %v3903 = vpop.f32.mrf.mxu0
  %v3904 = vadd.f32 %v3873, %v3903
  %3905 = vdwg.mxu0
  %3906 = vmatpush.msra.mxu0 0.0
  %3907 = vmatpush.msra.mxu0 0.0
  %3908 = vmatpush.msra.mxu0 0.0
  %3909 = vmatpush.msra.mxu0 0.0
  %3910 = vmatpush.msra.mxu0 0.0
  %3911 = vmatpush.msra.mxu0 0.0
  %3912 = vmatpush.msra.mxu0 0.0
  %3913 = vmatpush.msra.mxu0 0.0
  %3914 = vmatpush.msra.mxu0 0.0
  %3915 = vmatpush.msra.mxu0 0.0
  %v3916 = vand.u32 %v2509, 4294901760
  %v3917 = vsub.f32 %v2509, %v3916
  %v3918 = vand.u32 %v3917, 4294901760
  %v3919 = vsub.f32 %v3917, %v3918
  %v3920 = vand.u32 %v3919, 4294901760
  %3921 = vmatpush.msra.mxu0 %v3920
  %v3922 = vand.u32 %v2501, 4294901760
  %v3923 = vsub.f32 %v2501, %v3922
  %v3924 = vand.u32 %v3923, 4294901760
  %v3925 = vsub.f32 %v3923, %v3924
  %v3926 = vand.u32 %v3925, 4294901760
  %3927 = vmatpush.msra.mxu0 %v3926
  %v3928 = vand.u32 %v2500, 4294901760
  %v3929 = vsub.f32 %v2500, %v3928
  %v3930 = vand.u32 %v3929, 4294901760
  %v3931 = vsub.f32 %v3929, %v3930
  %v3932 = vand.u32 %v3931, 4294901760
  %3933 = vmatpush.msra.mxu0 %v3932
  %v3934 = vand.u32 %v2499, 4294901760
  %v3935 = vsub.f32 %v2499, %v3934
  %v3936 = vand.u32 %v3935, 4294901760
  %v3937 = vsub.f32 %v3935, %v3936
  %v3938 = vand.u32 %v3937, 4294901760
  %3939 = vmatpush.msra.mxu0 %v3938
  %v3940 = vand.u32 %v2498, 4294901760
  %v3941 = vsub.f32 %v2498, %v3940
  %v3942 = vand.u32 %v3941, 4294901760
  %v3943 = vsub.f32 %v3941, %v3942
  %v3944 = vand.u32 %v3943, 4294901760
  %3945 = vmatpush.msra.mxu0 %v3944
  %v3946 = vand.u32 %v2497, 4294901760
  %v3947 = vsub.f32 %v2497, %v3946
  %v3948 = vand.u32 %v3947, 4294901760
  %v3949 = vsub.f32 %v3947, %v3948
  %v3950 = vand.u32 %v3949, 4294901760
  %3951 = vmatpush.msra.mxu0 %v3950
  %v3952 = vand.u32 %v2505, 4294901760
  %3953 = vmatmul.f32.gmra.mxu0 %v3952
  %v3954 = vpop.f32.mrf.mxu0
  %v3955 = vadd.f32 %v3904, %v3954
  %3956 = vdwg.mxu0
  %3957 = vmatpush.msra.mxu0 0.0
  %3958 = vmatpush.msra.mxu0 0.0
  %3959 = vmatpush.msra.mxu0 0.0
  %3960 = vmatpush.msra.mxu0 0.0
  %3961 = vmatpush.msra.mxu0 0.0
  %3962 = vmatpush.msra.mxu0 0.0
  %3963 = vmatpush.msra.mxu0 0.0
  %3964 = vmatpush.msra.mxu0 0.0
  %3965 = vmatpush.msra.mxu0 0.0
  %3966 = vmatpush.msra.mxu0 0.0
  %v3967 = vand.u32 %v2509, 4294901760
  %v3968 = vsub.f32 %v2509, %v3967
  %3969 = vmatpush.msra.mxu0 %v3968
  %v3970 = vand.u32 %v2501, 4294901760
  %v3971 = vsub.f32 %v2501, %v3970
  %3972 = vmatpush.msra.mxu0 %v3971
  %v3973 = vand.u32 %v2500, 4294901760
  %v3974 = vsub.f32 %v2500, %v3973
  %3975 = vmatpush.msra.mxu0 %v3974
  %v3976 = vand.u32 %v2499, 4294901760
  %v3977 = vsub.f32 %v2499, %v3976
  %3978 = vmatpush.msra.mxu0 %v3977
  %v3979 = vand.u32 %v2498, 4294901760
  %v3980 = vsub.f32 %v2498, %v3979
  %3981 = vmatpush.msra.mxu0 %v3980
  %v3982 = vand.u32 %v2497, 4294901760
  %v3983 = vsub.f32 %v2497, %v3982
  %3984 = vmatpush.msra.mxu0 %v3983
  %v3985 = vand.u32 %v2505, 4294901760
  %v3986 = vsub.f32 %v2505, %v3985
  %3987 = vmatmul.f32.gmra.mxu0 %v3986
  %v3988 = vpop.f32.mrf.mxu0
  %v3989 = vadd.f32 %v3955, %v3988
  %3990 = vdwg.mxu0
  %3991 = vmatpush.msra.mxu0 0.0
  %3992 = vmatpush.msra.mxu0 0.0
  %3993 = vmatpush.msra.mxu0 0.0
  %3994 = vmatpush.msra.mxu0 0.0
  %3995 = vmatpush.msra.mxu0 0.0
  %3996 = vmatpush.msra.mxu0 0.0
  %3997 = vmatpush.msra.mxu0 0.0
  %3998 = vmatpush.msra.mxu0 0.0
  %3999 = vmatpush.msra.mxu0 0.0
  %4000 = vmatpush.msra.mxu0 0.0
  %v4001 = vand.u32 %v2509, 4294901760
  %4002 = vmatpush.msra.mxu0 %v4001
  %v4003 = vand.u32 %v2501, 4294901760
  %4004 = vmatpush.msra.mxu0 %v4003
  %v4005 = vand.u32 %v2500, 4294901760
  %4006 = vmatpush.msra.mxu0 %v4005
  %v4007 = vand.u32 %v2499, 4294901760
  %4008 = vmatpush.msra.mxu0 %v4007
  %v4009 = vand.u32 %v2498, 4294901760
  %4010 = vmatpush.msra.mxu0 %v4009
  %v4011 = vand.u32 %v2497, 4294901760
  %4012 = vmatpush.msra.mxu0 %v4011
  %v4013 = vand.u32 %v2505, 4294901760
  %v4014 = vsub.f32 %v2505, %v4013
  %v4015 = vand.u32 %v4014, 4294901760
  %4016 = vmatmul.f32.gmra.mxu0 %v4015
  %v4017 = vpop.f32.mrf.mxu0
  %v4018 = vadd.f32 %v3989, %v4017
  %4019 = vdwg.mxu0
  %4020 = vmatpush.msra.mxu0 0.0
  %4021 = vmatpush.msra.mxu0 0.0
  %4022 = vmatpush.msra.mxu0 0.0
  %4023 = vmatpush.msra.mxu0 0.0
  %4024 = vmatpush.msra.mxu0 0.0
  %4025 = vmatpush.msra.mxu0 0.0
  %4026 = vmatpush.msra.mxu0 0.0
  %4027 = vmatpush.msra.mxu0 0.0
  %4028 = vmatpush.msra.mxu0 0.0
  %4029 = vmatpush.msra.mxu0 0.0
  %v4030 = vand.u32 %v2509, 4294901760
  %v4031 = vsub.f32 %v2509, %v4030
  %v4032 = vand.u32 %v4031, 4294901760
  %4033 = vmatpush.msra.mxu0 %v4032
  %v4034 = vand.u32 %v2501, 4294901760
  %v4035 = vsub.f32 %v2501, %v4034
  %v4036 = vand.u32 %v4035, 4294901760
  %4037 = vmatpush.msra.mxu0 %v4036
  %v4038 = vand.u32 %v2500, 4294901760
  %v4039 = vsub.f32 %v2500, %v4038
  %v4040 = vand.u32 %v4039, 4294901760
  %4041 = vmatpush.msra.mxu0 %v4040
  %v4042 = vand.u32 %v2499, 4294901760
  %v4043 = vsub.f32 %v2499, %v4042
  %v4044 = vand.u32 %v4043, 4294901760
  %4045 = vmatpush.msra.mxu0 %v4044
  %v4046 = vand.u32 %v2498, 4294901760
  %v4047 = vsub.f32 %v2498, %v4046
  %v4048 = vand.u32 %v4047, 4294901760
  %4049 = vmatpush.msra.mxu0 %v4048
  %v4050 = vand.u32 %v2497, 4294901760
  %v4051 = vsub.f32 %v2497, %v4050
  %v4052 = vand.u32 %v4051, 4294901760
  %4053 = vmatpush.msra.mxu0 %v4052
  %v4054 = vand.u32 %v2505, 4294901760
  %4055 = vmatmul.f32.gmra.mxu0 %v4054
  %v4056 = vpop.f32.mrf.mxu0
  %v4057 = vadd.f32 %v4018, %v4056
  %4058 = vdwg.mxu0
  %4059 = vmatpush.msra.mxu0 0.0
  %4060 = vmatpush.msra.mxu0 0.0
  %4061 = vmatpush.msra.mxu0 0.0
  %4062 = vmatpush.msra.mxu0 0.0
  %4063 = vmatpush.msra.mxu0 0.0
  %4064 = vmatpush.msra.mxu0 0.0
  %4065 = vmatpush.msra.mxu0 0.0
  %4066 = vmatpush.msra.mxu0 0.0
  %4067 = vmatpush.msra.mxu0 0.0
  %4068 = vmatpush.msra.mxu0 0.0
  %v4069 = vand.u32 %v2509, 4294901760
  %4070 = vmatpush.msra.mxu0 %v4069
  %v4071 = vand.u32 %v2501, 4294901760
  %4072 = vmatpush.msra.mxu0 %v4071
  %v4073 = vand.u32 %v2500, 4294901760
  %4074 = vmatpush.msra.mxu0 %v4073
  %v4075 = vand.u32 %v2499, 4294901760
  %4076 = vmatpush.msra.mxu0 %v4075
  %v4077 = vand.u32 %v2498, 4294901760
  %4078 = vmatpush.msra.mxu0 %v4077
  %v4079 = vand.u32 %v2497, 4294901760
  %4080 = vmatpush.msra.mxu0 %v4079
  %v4081 = vand.u32 %v2505, 4294901760
  %4082 = vmatmul.f32.gmra.mxu0 %v4081
  %v4083 = vpop.f32.mrf.mxu0
  %v4084 = vadd.f32 %v4057, %v4083
  %4085 = vdwg.mxu0
  %v4086 = vld [vmem:[%s7] sm:$0xff]
  %v4087 = vld [vmem:[%s7 + $0x8] sm:$0xff]
  %v4088 = vld [vmem:[%s7 + $0x10] sm:$0xff]
  %v4089 = vld [vmem:[%s7 + $0x18] sm:$0xff]
  %v4090 = vld [vmem:[%s7 + $0x20] sm:$0xff]
  %v4091 = vld [vmem:[%s7 + $0x28] sm:$0xff]
  %v4092 = vld [vmem:[%s8] sm:$0x1]
  %vm4093 = vcmask 130048
  %v4095 = vsel %vm4093, %v4084, 0
  %4097 = vmatpush.msra.mxu0 0.0
  %4098 = vmatpush.msra.mxu0 0.0
  %4099 = vmatpush.msra.mxu0 0.0
  %4100 = vmatpush.msra.mxu0 0.0
  %4101 = vmatpush.msra.mxu0 0.0
  %4102 = vmatpush.msra.mxu0 0.0
  %4103 = vmatpush.msra.mxu0 0.0
  %4104 = vmatpush.msra.mxu0 0.0
  %4105 = vmatpush.msra.mxu0 0.0
  %4106 = vmatpush.msra.mxu0 0.0
  %4107 = vmatpush.msra.mxu0 0.0
  %4108 = vmatpush.msra.mxu0 0.0
  %4109 = vmatpush.msra.mxu0 0.0
  %4110 = vmatpush.msra.mxu0 0.0
  %4111 = vmatpush.msra.mxu0 %v4087
  %4112 = vmatpush.msra.mxu0 %v4086
  %4113 = vmatmul.f32.gmra.mxu0 %v4095
  %v4114 = vpop.f32.mrf.mxu0
  %v4115 = vadd.f32 0.0, %v4114
  %4116 = vdwg.mxu0
  %v4117 = vadd.f32 %v4092, %v4115
  %v4118 = vrot.slane %v4084, 1
  %v4119 = vsel %vm4093, %v4118, 0
  %4121 = vmatpush.msra.mxu0 0.0
  %4122 = vmatpush.msra.mxu0 0.0
  %4123 = vmatpush.msra.mxu0 0.0
  %4124 = vmatpush.msra.mxu0 0.0
  %4125 = vmatpush.msra.mxu0 0.0
  %4126 = vmatpush.msra.mxu0 0.0
  %4127 = vmatpush.msra.mxu0 0.0
  %4128 = vmatpush.msra.mxu0 0.0
  %4129 = vmatpush.msra.mxu0 0.0
  %4130 = vmatpush.msra.mxu0 0.0
  %4131 = vmatpush.msra.mxu0 0.0
  %4132 = vmatpush.msra.mxu0 0.0
  %4133 = vmatpush.msra.mxu0 0.0
  %4134 = vmatpush.msra.mxu0 0.0
  %4135 = vmatpush.msra.mxu0 %v4089
  %4136 = vmatpush.msra.mxu0 %v4088
  %4137 = vmatmul.f32.gmra.mxu0 %v4119
  %v4138 = vpop.f32.mrf.mxu0
  %v4139 = vadd.f32 0.0, %v4138
  %4140 = vdwg.mxu0
  %v4141 = vadd.f32 %v4117, %v4139
  %v4142 = vrot.slane %v4084, 2
  %v4143 = vsel %vm4093, %v4142, 0
  %4145 = vmatpush.msra.mxu0 0.0
  %4146 = vmatpush.msra.mxu0 0.0
  %4147 = vmatpush.msra.mxu0 0.0
  %4148 = vmatpush.msra.mxu0 0.0
  %4149 = vmatpush.msra.mxu0 0.0
  %4150 = vmatpush.msra.mxu0 0.0
  %4151 = vmatpush.msra.mxu0 0.0
  %4152 = vmatpush.msra.mxu0 0.0
  %4153 = vmatpush.msra.mxu0 0.0
  %4154 = vmatpush.msra.mxu0 0.0
  %4155 = vmatpush.msra.mxu0 0.0
  %4156 = vmatpush.msra.mxu0 0.0
  %4157 = vmatpush.msra.mxu0 0.0
  %4158 = vmatpush.msra.mxu0 0.0
  %4159 = vmatpush.msra.mxu0 %v4091
  %4160 = vmatpush.msra.mxu0 %v4090
  %4161 = vmatmul.f32.gmra.mxu0 %v4143
  %v4162 = vpop.f32.mrf.mxu0
  %v4163 = vadd.f32 0.0, %v4162
  %4164 = vdwg.mxu0
  %v4165 = vadd.f32 %v4141, %v4163
  %v4166 = vmax.f32 %v4165, 0.0
  %4167 = vrot.lane.b32.xlu0 %v4084, 112
  %v4168 = vpop.permute.xlu0 %4167
  %v4169 = vsel %vm4093, %v4168, 0
  %4171 = vmatpush.msra.mxu0 0.0
  %4172 = vmatpush.msra.mxu0 0.0
  %4173 = vmatpush.msra.mxu0 0.0
  %4174 = vmatpush.msra.mxu0 0.0
  %4175 = vmatpush.msra.mxu0 0.0
  %4176 = vmatpush.msra.mxu0 0.0
  %4177 = vmatpush.msra.mxu0 0.0
  %4178 = vmatpush.msra.mxu0 0.0
  %4179 = vmatpush.msra.mxu0 0.0
  %4180 = vmatpush.msra.mxu0 0.0
  %4181 = vmatpush.msra.mxu0 0.0
  %4182 = vmatpush.msra.mxu0 0.0
  %4183 = vmatpush.msra.mxu0 0.0
  %4184 = vmatpush.msra.mxu0 0.0
  %4185 = vmatpush.msra.mxu0 %v4087
  %4186 = vmatpush.msra.mxu0 %v4086
  %4187 = vmatmul.f32.gmra.mxu0 %v4169
  %v4188 = vpop.f32.mrf.mxu0
  %v4189 = vadd.f32 0.0, %v4188
  %4190 = vdwg.mxu0
  %v4191 = vadd.f32 %v4092, %v4189
  %4192 = vrot.lane.b32.xlu0 %v4118, 112
  %v4193 = vpop.permute.xlu0 %4192
  %v4194 = vsel %vm4093, %v4193, 0
  %4196 = vmatpush.msra.mxu0 0.0
  %4197 = vmatpush.msra.mxu0 0.0
  %4198 = vmatpush.msra.mxu0 0.0
  %4199 = vmatpush.msra.mxu0 0.0
  %4200 = vmatpush.msra.mxu0 0.0
  %4201 = vmatpush.msra.mxu0 0.0
  %4202 = vmatpush.msra.mxu0 0.0
  %4203 = vmatpush.msra.mxu0 0.0
  %4204 = vmatpush.msra.mxu0 0.0
  %4205 = vmatpush.msra.mxu0 0.0
  %4206 = vmatpush.msra.mxu0 0.0
  %4207 = vmatpush.msra.mxu0 0.0
  %4208 = vmatpush.msra.mxu0 0.0
  %4209 = vmatpush.msra.mxu0 0.0
  %4210 = vmatpush.msra.mxu0 %v4089
  %4211 = vmatpush.msra.mxu0 %v4088
  %4212 = vmatmul.f32.gmra.mxu0 %v4194
  %v4213 = vpop.f32.mrf.mxu0
  %v4214 = vadd.f32 0.0, %v4213
  %4215 = vdwg.mxu0
  %v4216 = vadd.f32 %v4191, %v4214
  %4217 = vrot.lane.b32.xlu0 %v4142, 112
  %v4218 = vpop.permute.xlu0 %4217
  %v4219 = vsel %vm4093, %v4218, 0
  %4221 = vmatpush.msra.mxu0 0.0
  %4222 = vmatpush.msra.mxu0 0.0
  %4223 = vmatpush.msra.mxu0 0.0
  %4224 = vmatpush.msra.mxu0 0.0
  %4225 = vmatpush.msra.mxu0 0.0
  %4226 = vmatpush.msra.mxu0 0.0
  %4227 = vmatpush.msra.mxu0 0.0
  %4228 = vmatpush.msra.mxu0 0.0
  %4229 = vmatpush.msra.mxu0 0.0
  %4230 = vmatpush.msra.mxu0 0.0
  %4231 = vmatpush.msra.mxu0 0.0
  %4232 = vmatpush.msra.mxu0 0.0
  %4233 = vmatpush.msra.mxu0 0.0
  %4234 = vmatpush.msra.mxu0 0.0
  %4235 = vmatpush.msra.mxu0 %v4091
  %4236 = vmatpush.msra.mxu0 %v4090
  %4237 = vmatmul.f32.gmra.mxu0 %v4219
  %v4238 = vpop.f32.mrf.mxu0
  %v4239 = vadd.f32 0.0, %v4238
  %4240 = vdwg.mxu0
  %v4241 = vadd.f32 %v4216, %v4239
  %v4242 = vmax.f32 %v4241, 0.0
  %v4244 = vperm.slane %v4242, 0
  %vm4246 = vcmask 1040384
  %v4247 = vsel %vm4246, %v4166, %v4244
  %v4248 = vld [vmem:[%s9] sm:$0xff]
  %v4249 = vld [vmem:[%s9 + $0x8] sm:$0xff]
  %v4250 = vld [vmem:[%s9 + $0x10] sm:$0xff]
  %v4251 = vld [vmem:[%s9 + $0x18] sm:$0xff]
  %v4252 = vld [vmem:[%s9 + $0x20] sm:$0xff]
  %v4253 = vld [vmem:[%s9 + $0x28] sm:$0xff]
  %v4254 = vld [vmem:[%s9 + $0x30] sm:$0xff]
  %v4255 = vld [vmem:[%s9 + $0x38] sm:$0xff]
  %v4256 = vld [vmem:[%s9 + $0x40] sm:$0xff]
  %v4257 = vld [vmem:[%s9 + $0x48] sm:$0xff]
  %v4258 = vld [vmem:[%s9 + $0x50] sm:$0xff]
  %v4259 = vld [vmem:[%s9 + $0x58] sm:$0xff]
  %v4260 = vld [vmem:[%s9 + $0x60] sm:$0xff]
  %v4261 = vld [vmem:[%s9 + $0x68] sm:$0xff]
  %v4262 = vld [vmem:[%s9 + $0x70] sm:$0xff]
  %v4263 = vld [vmem:[%s9 + $0x78] sm:$0xff]
  %v4264 = vld [vmem:[#allocation2] sm:$0x1]
  %v4266 = vperm.slane %v4264, 0
  %4268 = vmatpush.msra.mxu0 %v4263
  %4269 = vmatpush.msra.mxu0 %v4262
  %4270 = vmatpush.msra.mxu0 %v4261
  %4271 = vmatpush.msra.mxu0 %v4260
  %4272 = vmatpush.msra.mxu0 %v4259
  %4273 = vmatpush.msra.mxu0 %v4258
  %4274 = vmatpush.msra.mxu0 %v4257
  %4275 = vmatpush.msra.mxu0 %v4256
  %4276 = vmatpush.msra.mxu0 %v4255
  %4277 = vmatpush.msra.mxu0 %v4254
  %4278 = vmatpush.msra.mxu0 %v4253
  %4279 = vmatpush.msra.mxu0 %v4252
  %4280 = vmatpush.msra.mxu0 %v4251
  %4281 = vmatpush.msra.mxu0 %v4250
  %4282 = vmatpush.msra.mxu0 %v4249
  %4283 = vmatpush.msra.mxu0 %v4248
  %4284 = vmatmul.f32.gmra.mxu0 %v4247
  %v4285 = vpop.f32.mrf.mxu0
  %v4286 = vadd.f32 %v4266, %v4285
  %4287 = vdwg.mxu0
  %v4288 = vmax.f32 %v4286, 0.0
  %v4289 = vsub.f32 0.0, %v4288
  %v4290 = vmul.f32 %v4289, 1.442695
  %v4291 = vpow.pop %v4290
  %v4292 = vadd.f32 %v4291, 1.0
  %v4293 = vrcp.pop %v4292
  %v4294 = vmul.f32 %v4292, %v4293
  %v4295 = vsub.f32 1.0, %v4294
  %v4296 = vmul.f32 %v4293, %v4295
  %v4297 = vadd.f32 %v4293, %v4296
  %vm4298 = vweird.f32 %v4292
  %vm4299 = vweird.f32 %v4293
  %vm4300 = vmor %vm4298, %vm4299
  %v4301 = vsel %vm4300, %v4293, %v4297
  %v4302 = vand.u32 2147483647, %v4292
  %vm4303 = vcmp.eq.f32.partialorder %v4302, 8.507059e+37
  %v4304 = vand.u32 %v4292, 2147483648
  %v4305 = vor.u32 1.1754944e-38, %v4304
  %v4306 = vsel %vm4303, %v4305, %v4301
  %v4307 = vmul.f32 1.0, %v4306
  %vm4308 = vcmask 1024
  %4309 = vst.msk [vmem:[%s11] sm:$0x3] %vm4308, %v4307
  // Predicated region
  $region46: #{cnn_forward.1} parent=0 // pred_check
    _
  $region47: #{cnn_forward.1} parent=0 // pred_check_branch
    %4311 = sbr.rel (0) target = $region49
  $region48: #{cnn_forward.1} parent=0 // pred_region
    _
  $region49: #{cnn_forward.1} parent=0 // pred_fallthru
    _
  // Predicated region
  $region50: #{cnn_forward.1} parent=0 // pred_check
    _
  $region51: #{cnn_forward.1} parent=0 // pred_check_branch
    %4313 = sbr.rel (0) target = $region53
  $region52: #{cnn_forward.1} parent=0 // pred_region
    _
  $region53: #{cnn_forward.1} parent=0 // pred_fallthru
    _

</llo_original>
